<compile_context>
chip_gen: v7x
topology: tpu7x:2x2x1
jax: 0.10.0
libtpu: 0.0.40
codegen_flags: <defaults>
</compile_context>

<pallas_src>
import functools
import math

import jax
import jax.numpy as jnp
from jax import lax
from jax.experimental import pallas as pl
from jax.experimental.pallas import tpu as pltpu

NEG_INF = -1e30  # large finite negative (avoids exp(-inf - -inf) NaNs on masked rows)


# ----------------------------- small helpers ---------------------------------

def _layernorm(x, gamma, beta, eps=1e-5):
    x = x.astype(jnp.float32)
    mu = jnp.mean(x, axis=-1, keepdims=True)
    var = jnp.mean((x - mu) ** 2, axis=-1, keepdims=True)
    return (x - mu) * lax.rsqrt(var + eps) * gamma + beta


def _gelu_exact(x):
    # PyTorch nn.GELU() default (erf-based, exact).
    return 0.5 * x * (1.0 + lax.erf(x * (1.0 / math.sqrt(2.0))))


def _spec(shape, index_map, buffers=None):
    """BlockSpec, optionally with an explicit pipeline buffer depth:
    buffers=1 for grid-invariant weights (halves their VMEM footprint),
    buffers=3 for the kv streams (covers the long diagonal/epilogue step)."""
    if buffers is not None:
        return pl.BlockSpec(shape, index_map, pipeline_mode=pl.Buffered(buffers))
    return pl.BlockSpec(shape, index_map)


def _default_vmem_limit():
    """~75% of physical VMEM, capped at 96 MiB:
    -> ~96 MiB on v5e/v6e (128 MiB VMEM), ~48 MiB on v7x (64 MiB VMEM)."""
    try:
        cap = pltpu.get_tpu_info().vmem_capacity_bytes
    except Exception:
        cap = 64 * 1024 * 1024
    return int(min(max(cap - cap // 4, 32 * 1024 * 1024), 96 * 1024 * 1024))


# ----------------------------- kernel 1: LN1 + QKV projection ----------------

def qkv_kernel(x_ref, g_ref, b_ref, w_ref, q_ref, k_ref, v_ref, *, scale):
    C = q_ref.shape[-1]
    h = _layernorm(x_ref[0], g_ref[0], b_ref[0])                    # (TT, C) fp32
    qkv = jnp.dot(h.astype(jnp.bfloat16), w_ref[...],               # bf16 x bf16
                  preferred_element_type=jnp.float32)               # (TT, 3C) fp32
    # Fold 1/sqrt(head_dim) into Q (cheaper than scaling the (T, T) score tensor).
    q_ref[0] = (qkv[:, 0 * C:1 * C] * scale).astype(q_ref.dtype)
    k_ref[0] = qkv[:, 1 * C:2 * C].astype(k_ref.dtype)
    v_ref[0] = qkv[:, 2 * C:3 * C].astype(v_ref.dtype)


def qkv_forward(x, p, n_head, *, t_tile, use_buffered, vmem_limit):
    B, T, C = x.shape
    hd = C // n_head
    nt = T // t_tile
    wbuf = 1 if use_buffered else None

    act_spec = pl.BlockSpec((1, t_tile, C), lambda b, t: (b, t, 0))
    out_sds = jax.ShapeDtypeStruct((B, T, C), jnp.bfloat16)
    cost = pl.CostEstimate(
        flops=2 * B * T * C * 3 * C, transcendentals=0,
        bytes_accessed=B * T * C * 4 + 3 * C * C * 2 + 3 * B * T * C * 2)

    return pl.pallas_call(
        functools.partial(qkv_kernel, scale=1.0 / math.sqrt(hd)),
        grid=(B, nt),
        in_specs=[
            act_spec,                                               # x (fp32 residual)
            _spec((1, C), lambda b, t: (0, 0)),                     # ln1 gamma
            _spec((1, C), lambda b, t: (0, 0)),                     # ln1 beta
            _spec((C, 3 * C), lambda b, t: (0, 0), buffers=wbuf),   # W_attn (bf16)
        ],
        out_specs=[act_spec, act_spec, act_spec],
        out_shape=[out_sds, out_sds, out_sds],
        compiler_params=pltpu.CompilerParams(
            dimension_semantics=("parallel", "parallel"),
            vmem_limit_bytes=vmem_limit),
        cost_estimate=cost,
    )(x, p["ln1_g"], p["ln1_b"], p["w_attn"])


# ------------- kernel 2: flash attention + c_proj + residual + MLP (+ ln_f) --

def attn_mlp_kernel(x_ref, q_ref, k_ref, v_ref, wproj_ref, g2_ref, b2_ref,
                    wfc_ref, wfp_ref, gf_ref, bf_ref, o_ref,
                    m_ref, l_ref, acc_ref, *, n_head, apply_lnf):
    TQ, C = acc_ref.shape
    TK = k_ref.shape[1]
    hd = C // n_head
    HTK = n_head * TK
    qi = pl.program_id(1)
    ki = pl.program_id(2)

    @pl.when(ki == 0)
    def _init():
        m_ref[...] = jnp.full_like(m_ref, NEG_INF)
        l_ref[...] = jnp.zeros_like(l_ref)
        acc_ref[...] = jnp.zeros_like(acc_ref)

    def rep_heads(cols, width):
        # n_head x (TQ, 1) columns -> (TQ, n_head*width), each replicated `width` lanes
        # so downstream scratch loads/stores stay full-width and unmasked.
        return jnp.concatenate(
            [jnp.broadcast_to(c, (TQ, width)) for c in cols], axis=-1)

    def flash_step(masked):
        q = q_ref[0]            # (TQ, C)  bf16, pre-scaled by 1/sqrt(hd)
        k = k_ref[0]            # (TK, C)  bf16
        v = v_ref[0]            # (TK, C)  bf16

        # Head-packed matmuls: stack heads of K / V block-diagonally along the kv axis so
        # one MXU pass contracts over full C (scores) / n_head*TK (PV) instead of n_head
        # matmuls with contraction = head_dim.
        rows_h = lax.broadcasted_iota(jnp.int32, (HTK, C), 0) // TK
        cols_h = lax.broadcasted_iota(jnp.int32, (HTK, C), 1) // hd
        blk = rows_h == cols_h
        zero = jnp.zeros((), k.dtype)
        k_blk = jnp.where(blk, jnp.concatenate([k] * n_head, axis=0), zero)  # (HTK, C)
        v_blk = jnp.where(blk, jnp.concatenate([v] * n_head, axis=0), zero)  # (HTK, C)

        # s[:, h*TK + t] = <q_h, k_h[t]>   -- (TQ, HTK) fp32, contraction = C.
        s = lax.dot_general(q, k_blk, (((1,), (1,)), ((), ())),
                            preferred_element_type=jnp.float32)
        if masked:
            # Diagonal tile (qi == ki, TQ == TK): local indices are enough.
            row = lax.broadcasted_iota(jnp.int32, (TQ, HTK), 0)
            col = lax.broadcasted_iota(jnp.int32, (TQ, HTK), 1) % TK
            s = jnp.where(col <= row, s, NEG_INF)

        # Per-head online softmax.  m / l are stored replicated across each head's hd
        # lanes ((TQ, C) fp32), so the scratch updates below are single full-width stores.
        m_prev = m_ref[...]                                         # (TQ, C)
        m_new, alpha, l_cur = [], [], []
        for h in range(n_head):
            mp = m_prev[:, h * hd:h * hd + 1]                       # (TQ, 1)
            mc = jnp.max(s[:, h * TK:(h + 1) * TK], axis=-1, keepdims=True)
            mn = jnp.maximum(mp, mc)
            m_new.append(mn)
            alpha.append(jnp.exp(mp - mn))
        p = jnp.exp(s - rep_heads(m_new, TK))                       # (TQ, HTK)
        for h in range(n_head):
            l_cur.append(jnp.sum(p[:, h * TK:(h + 1) * TK], axis=-1, keepdims=True))

        pv = jnp.dot(p.astype(v.dtype), v_blk,                      # (TQ, C), K = HTK
                     preferred_element_type=jnp.float32)
        alpha_c = rep_heads(alpha, hd)                              # (TQ, C)
        m_ref[...] = rep_heads(m_new, hd)
        l_ref[...] = alpha_c * l_ref[...] + rep_heads(l_cur, hd)
        acc_ref[...] = alpha_c * acc_ref[...] + pv

    @pl.when(ki < qi)
    def _inner_tile():          # fully-unmasked kv tile: no mask work at all
        flash_step(masked=False)

    @pl.when(ki == qi)
    def _diag_and_epilogue():   # diagonal tile + fused epilogue (ki > qi steps skipped)
        flash_step(masked=True)

        # Normalize (EUP approx reciprocal; l is per-head, replicated across hd lanes).
        y = acc_ref[...] * pl.reciprocal(l_ref[...], approx=True)   # (TQ, C) fp32

        # Attention output projection + residual (fp32 residual stream).
        attn = jnp.dot(y.astype(jnp.bfloat16), wproj_ref[...],
                       preferred_element_type=jnp.float32)
        x1 = x_ref[0] + attn

        # LN2 + exact GELU MLP + residual.
        h2 = _layernorm(x1, g2_ref[0], b2_ref[0])
        h2 = jnp.dot(h2.astype(jnp.bfloat16), wfc_ref[...],
                     preferred_element_type=jnp.float32)
        h2 = _gelu_exact(h2)
        out = x1 + jnp.dot(h2.astype(jnp.bfloat16), wfp_ref[...],
                           preferred_element_type=jnp.float32)

        if apply_lnf:  # fuse the final LayerNorm into the last block (saves an HBM pass)
            out = _layernorm(out, gf_ref[0], bf_ref[0])
        o_ref[0] = out.astype(o_ref.dtype)


def attn_mlp_forward(x, q, k, v, p, lnf_g, lnf_b, n_head, *,
                     q_tile, apply_lnf, use_buffered, vmem_limit):
    B, T, C = x.shape
    nq = T // q_tile
    wbuf = 1 if use_buffered else None
    kvbuf = 3 if use_buffered else None

    x_spec = pl.BlockSpec((1, q_tile, C), lambda b, i, j: (b, i, 0))
    # Clamp the kv block index so skipped (future, ki > qi) tiles re-use the previous
    # block -> Pallas elides their DMA (~2x less K/V HBM traffic).
    kv_spec = _spec((1, q_tile, C), lambda b, i, j: (b, jnp.minimum(j, i), 0),
                    buffers=kvbuf)
    cost = pl.CostEstimate(
        flops=4 * B * T * T * C + 2 * B * T * C * C + 16 * B * T * C * C,
        transcendentals=B * n_head * T * T + 4 * B * T * C,
        bytes_accessed=2 * B * T * C * 4 + 3 * B * T * C * 2 + 9 * C * C * 2)

    return pl.pallas_call(
        functools.partial(attn_mlp_kernel, n_head=n_head, apply_lnf=apply_lnf),
        grid=(B, nq, nq),                                # kv reduction axis innermost
        in_specs=[
            x_spec,                                      # residual x (fp32)
            x_spec,                                      # q (bf16, pre-scaled)
            kv_spec,                                     # k (bf16)
            kv_spec,                                     # v (bf16)
            _spec((C, C), lambda b, i, j: (0, 0), buffers=wbuf),       # W_proj
            _spec((1, C), lambda b, i, j: (0, 0)),                     # ln2 gamma
            _spec((1, C), lambda b, i, j: (0, 0)),                     # ln2 beta
            _spec((C, 4 * C), lambda b, i, j: (0, 0), buffers=wbuf),   # W_fc
            _spec((4 * C, C), lambda b, i, j: (0, 0), buffers=wbuf),   # W_fcproj
            _spec((1, C), lambda b, i, j: (0, 0)),                     # ln_f gamma
            _spec((1, C), lambda b, i, j: (0, 0)),                     # ln_f beta
        ],
        out_specs=pl.BlockSpec((1, q_tile, C), lambda b, i, j: (b, i, 0)),
        out_shape=jax.ShapeDtypeStruct((B, T, C), x.dtype),
        scratch_shapes=[
            pltpu.VMEM((q_tile, C), jnp.float32),   # running max   (replicated per head)
            pltpu.VMEM((q_tile, C), jnp.float32),   # running denom (replicated per head)
            pltpu.VMEM((q_tile, C), jnp.float32),   # fp32 output accumulator
        ],
        compiler_params=pltpu.CompilerParams(
            dimension_semantics=("parallel", "parallel", "arbitrary"),
            vmem_limit_bytes=vmem_limit),
        cost_estimate=cost,
    )(x, q, k, v, p["w_proj"], p["ln2_g"], p["ln2_b"],
      p["w_fc"], p["w_fcproj"], lnf_g, lnf_b)


# ----------------------------- full forward ----------------------------------

def causal_decoder_forward(x, params, n_head, *, attn_tile=128, qkv_tile=256,
                           use_buffered=True, vmem_limit_bytes=None):
    B, T, C = x.shape
    assert C % n_head == 0
    assert C % 128 == 0, "embedding dim must be lane-dense (multiple of 128)"
    tq = min(attn_tile, T)
    tt = min(qkv_tile, T)
    assert T % tq == 0 and (tq == T or tq % 8 == 0)
    assert T % tt == 0 and (tt == T or tt % 8 == 0)
    if vmem_limit_bytes is None:
        vmem_limit_bytes = _default_vmem_limit()

    n_layer = len(params["blocks"])
    for li, p in enumerate(params["blocks"]):
        q, k, v = qkv_forward(x, p, n_head, t_tile=tt,
                              use_buffered=use_buffered, vmem_limit=vmem_limit_bytes)
        x = attn_mlp_forward(x, q, k, v, p, params["lnf_g"], params["lnf_b"],
                             n_head, q_tile=tq, apply_lnf=(li == n_layer - 1),
                             use_buffered=use_buffered, vmem_limit=vmem_limit_bytes)
    return x


# ----------------------------- param init ------------------------------------

def init_params(key, n_layer, n_embed):
    """Matches the PyTorch init: linears ~ N(0, 0.02), c_proj ~ N(0, 0.02/sqrt(2L)),
    LayerNorm gamma=1, beta=0.  Linear weights stored pre-transposed (in, out) and in
    bf16 (MXU inputs); LayerNorm params stay fp32."""
    C = n_embed
    std = 0.02
    proj_std = 0.02 / math.sqrt(2 * n_layer)
    blocks = []
    for _ in range(n_layer):
        key, k1, k2, k3, k4 = jax.random.split(key, 5)
        blocks.append(dict(
            ln1_g=jnp.ones((1, C), jnp.float32),
            ln1_b=jnp.zeros((1, C), jnp.float32),
            w_attn=(std * jax.random.normal(k1, (C, 3 * C), jnp.float32)).astype(jnp.bfloat16),
            w_proj=(proj_std * jax.random.normal(k2, (C, C), jnp.float32)).astype(jnp.bfloat16),
            ln2_g=jnp.ones((1, C), jnp.float32),
            ln2_b=jnp.zeros((1, C), jnp.float32),
            w_fc=(std * jax.random.normal(k3, (C, 4 * C), jnp.float32)).astype(jnp.bfloat16),
            w_fcproj=(proj_std * jax.random.normal(k4, (4 * C, C), jnp.float32)).astype(jnp.bfloat16),
        ))
    return dict(blocks=blocks,
                lnf_g=jnp.ones((1, C), jnp.float32),
                lnf_b=jnp.zeros((1, C), jnp.float32))


# ----------------------------- pure-JAX reference ----------------------------

def _ref_block(x, p, n_head):
    B, T, C = x.shape
    hd = C // n_head

    def ln(v, g, b):
        mu = jnp.mean(v, -1, keepdims=True)
        var = jnp.mean((v - mu) ** 2, -1, keepdims=True)
        return (v - mu) / jnp.sqrt(var + 1e-5) * g + b

    h = ln(x, p["ln1_g"][0], p["ln1_b"][0])
    qkv = h @ p["w_attn"].astype(jnp.float32)
    q, k, v = jnp.split(qkv, 3, axis=-1)
    q = q.reshape(B, T, n_head, hd).transpose(0, 2, 1, 3)
    k = k.reshape(B, T, n_head, hd).transpose(0, 2, 1, 3)
    v = v.reshape(B, T, n_head, hd).transpose(0, 2, 1, 3)
    att = jnp.einsum('bhtd,bhsd->bhts', q, k) / math.sqrt(hd)
    mask = jnp.tril(jnp.ones((T, T), bool))
    att = jnp.where(mask[None, None], att, -jnp.inf)
    att = jax.nn.softmax(att, axis=-1)
    y = jnp.einsum('bhts,bhsd->bhtd', att, v).transpose(0, 2, 1, 3).reshape(B, T, C)
    x = x + y @ p["w_proj"].astype(jnp.float32)
    h2 = ln(x, p["ln2_g"][0], p["ln2_b"][0])
    h2 = jax.nn.gelu(h2 @ p["w_fc"].astype(jnp.float32),
                     approximate=False) @ p["w_fcproj"].astype(jnp.float32)
    return x + h2


def ref_forward(x, params, n_head):
    for p in params["blocks"]:
        x = _ref_block(x, p, n_head)
    mu = jnp.mean(x, -1, keepdims=True)
    var = jnp.mean((x - mu) ** 2, -1, keepdims=True)
    return (x - mu) / jnp.sqrt(var + 1e-5) * params["lnf_g"][0] + params["lnf_b"][0]


# ----------------------------- main ------------------------------------------

if __name__ == "__main__":
    n_layer, n_head = 2, 4
    n_embed = 128                    # lane-dense embedding (multiple of 128)
    B, T = 2, 256                    # block_size == T for the causal mask

    key = jax.random.PRNGKey(0)
    kx, kp = jax.random.split(key)
    x = jax.random.normal(kx, (B, T, n_embed), jnp.float32)
    params = init_params(kp, n_layer, n_embed)

    # T=256 with 128-row attention tiles exercises every flash path: init, unmasked
    # inner tile, masked diagonal tile + fused epilogue, and skipped (future) tiles.
    fwd = functools.partial(causal_decoder_forward, n_head=n_head,
                            attn_tile=128, qkv_tile=256)
    try:
        out = jax.block_until_ready(fwd(x, params))
    except Exception:
        # Fallback for jax/Mosaic versions that reject pipeline_mode / Buffered specs.
        out = jax.block_until_ready(fwd(x, params, use_buffered=False))

    ref = ref_forward(x, params, n_head)
    assert out.shape == (B, T, n_embed)
    max_err = jnp.max(jnp.abs(out - ref))
    # bf16 matmul inputs + approx reciprocal vs. fp32 reference -> relaxed tolerance.
    assert jnp.allclose(out, ref, atol=2e-2, rtol=2e-2), f"mismatch: max|diff|={max_err}"

    print("KERNEL_OK")
</pallas_src>

<mosaic_0001>
module attributes {stable_mosaic.version = 11 : i64} {
  func.func @qkv_kernel(%arg0: i32, %arg1: i32, %arg2: memref<1x256x128xf32, #tpu.memory_space<vmem>>, %arg3: memref<1x128xf32, #tpu.memory_space<vmem>>, %arg4: memref<1x128xf32, #tpu.memory_space<vmem>>, %arg5: memref<128x384xbf16, #tpu.memory_space<vmem>>, %arg6: memref<1x256x128xbf16, #tpu.memory_space<vmem>>, %arg7: memref<1x256x128xbf16, #tpu.memory_space<vmem>>, %arg8: memref<1x256x128xbf16, #tpu.memory_space<vmem>>) attributes {dimension_semantics = [#tpu.dimension_semantics<parallel>, #tpu.dimension_semantics<parallel>], iteration_bounds = array<i64: 2, 1>, scalar_prefetch = 0 : i64, scratch_operands = 0 : i64, tpu.core_type = #tpu.core_type<tc>, window_params = [{transform_indices = @transform_0, window_bounds = array<i64: 1, 256, 128>}, {pipeline_mode = #tpu.pipeline_mode<synchronous>, transform_indices = @transform_1, window_bounds = array<i64: 1, 128>}, {pipeline_mode = #tpu.pipeline_mode<synchronous>, transform_indices = @transform_2, window_bounds = array<i64: 1, 128>}, {pipeline_mode = #tpu.pipeline_mode<synchronous>, transform_indices = @transform_3, window_bounds = array<i64: 128, 384>}, {transform_indices = @transform_4, window_bounds = array<i64: 1, 256, 128>}, {transform_indices = @transform_5, window_bounds = array<i64: 1, 256, 128>}, {transform_indices = @transform_6, window_bounds = array<i64: 1, 256, 128>}]} {
    %c0 = arith.constant 0 : index
    %c0_0 = arith.constant 0 : index
    %c0_1 = arith.constant 0 : index
    %0 = vector.load %arg2[%c0, %c0_0, %c0_1] : memref<1x256x128xf32, #tpu.memory_space<vmem>>, vector<1x256x128xf32>
    %1 = vector.shape_cast %0 : vector<1x256x128xf32> to vector<256x128xf32>
    %c0_2 = arith.constant 0 : index
    %c0_3 = arith.constant 0 : index
    %2 = vector.load %arg3[%c0_2, %c0_3] : memref<1x128xf32, #tpu.memory_space<vmem>>, vector<1x128xf32>
    %3 = vector.shape_cast %2 : vector<1x128xf32> to vector<128xf32>
    %c0_4 = arith.constant 0 : index
    %c0_5 = arith.constant 0 : index
    %4 = vector.load %arg4[%c0_4, %c0_5] : memref<1x128xf32, #tpu.memory_space<vmem>>, vector<1x128xf32>
    %5 = vector.shape_cast %4 : vector<1x128xf32> to vector<128xf32>
    %cst = arith.constant dense<0.000000e+00> : vector<256xf32>
    %6 = vector.multi_reduction <add>, %1, %cst [1] : vector<256x128xf32> to vector<256xf32>
    %7 = vector.shape_cast %6 : vector<256xf32> to vector<256x1xf32>
    %cst_6 = arith.constant 1.280000e+02 : f32
    %8 = vector.broadcast %cst_6 : f32 to vector<256x1xf32>
    %9 = arith.divf %7, %8 : vector<256x1xf32>
    %10 = vector.broadcast %9 : vector<256x1xf32> to vector<256x128xf32>
    %11 = arith.subf %1, %10 : vector<256x128xf32>
    %12 = arith.mulf %11, %11 : vector<256x128xf32>
    %cst_7 = arith.constant dense<0.000000e+00> : vector<256xf32>
    %13 = vector.multi_reduction <add>, %12, %cst_7 [1] : vector<256x128xf32> to vector<256xf32>
    %14 = vector.shape_cast %13 : vector<256xf32> to vector<256x1xf32>
    %cst_8 = arith.constant 1.280000e+02 : f32
    %15 = vector.broadcast %cst_8 : f32 to vector<256x1xf32>
    %16 = arith.divf %14, %15 : vector<256x1xf32>
    %17 = vector.broadcast %9 : vector<256x1xf32> to vector<256x128xf32>
    %18 = arith.subf %1, %17 : vector<256x128xf32>
    %cst_9 = arith.constant 9.99999974E-6 : f32
    %19 = vector.broadcast %cst_9 : f32 to vector<256x1xf32>
    %20 = arith.addf %16, %19 : vector<256x1xf32>
    %21 = math.rsqrt %20 : vector<256x1xf32>
    %22 = vector.broadcast %21 : vector<256x1xf32> to vector<256x128xf32>
    %23 = arith.mulf %18, %22 : vector<256x128xf32>
    %24 = vector.shape_cast %3 : vector<128xf32> to vector<1x128xf32>
    %25 = vector.broadcast %24 : vector<1x128xf32> to vector<256x128xf32>
    %26 = arith.mulf %23, %25 : vector<256x128xf32>
    %27 = vector.shape_cast %5 : vector<128xf32> to vector<1x128xf32>
    %28 = vector.broadcast %27 : vector<1x128xf32> to vector<256x128xf32>
    %29 = arith.addf %26, %28 : vector<256x128xf32>
    %30 = arith.truncf %29 : vector<256x128xf32> to vector<256x128xbf16>
    %c0_10 = arith.constant 0 : index
    %c0_11 = arith.constant 0 : index
    %31 = vector.load %arg5[%c0_10, %c0_11] : memref<128x384xbf16, #tpu.memory_space<vmem>>, vector<128x384xbf16>
    %cst_12 = arith.constant dense<0.000000e+00> : vector<256x384xf32>
    %32 = tpu.matmul %30, %31, %cst_12 {dimension_numbers = #tpu.dot_dimension_numbers<[1], [0], [0], [1], [0, 0, 1, 1], [], []>} : vector<256x128xbf16>, vector<128x384xbf16>, vector<256x384xf32> -> vector<256x384xf32>
    %33 = vector.extract_strided_slice %32 {offsets = [0, 0], sizes = [256, 128], strides = [1, 1]} : vector<256x384xf32> to vector<256x128xf32>
    %cst_13 = arith.constant 0.176776692 : f32
    %34 = vector.broadcast %cst_13 : f32 to vector<256x128xf32>
    %35 = arith.mulf %33, %34 : vector<256x128xf32>
    %36 = arith.truncf %35 : vector<256x128xf32> to vector<256x128xbf16>
    %c0_14 = arith.constant 0 : index
    %c0_15 = arith.constant 0 : index
    %c0_16 = arith.constant 0 : index
    %37 = vector.load %arg6[%c0_14, %c0_15, %c0_16] : memref<1x256x128xbf16, #tpu.memory_space<vmem>>, vector<1x256x128xbf16>
    %38 = vector.shape_cast %37 : vector<1x256x128xbf16> to vector<256x128xbf16>
    %39 = vector.shape_cast %36 : vector<256x128xbf16> to vector<1x256x128xbf16>
    tpu.vector_store %arg6[%c0_14, %c0_15, %c0_16], %39 {strides = array<i32>} : memref<1x256x128xbf16, #tpu.memory_space<vmem>>, vector<1x256x128xbf16>,
    %40 = vector.extract_strided_slice %32 {offsets = [0, 128], sizes = [256, 128], strides = [1, 1]} : vector<256x384xf32> to vector<256x128xf32>
    %41 = arith.truncf %40 : vector<256x128xf32> to vector<256x128xbf16>
    %c0_17 = arith.constant 0 : index
    %c0_18 = arith.constant 0 : index
    %c0_19 = arith.constant 0 : index
    %42 = vector.load %arg7[%c0_17, %c0_18, %c0_19] : memref<1x256x128xbf16, #tpu.memory_space<vmem>>, vector<1x256x128xbf16>
    %43 = vector.shape_cast %42 : vector<1x256x128xbf16> to vector<256x128xbf16>
    %44 = vector.shape_cast %41 : vector<256x128xbf16> to vector<1x256x128xbf16>
    tpu.vector_store %arg7[%c0_17, %c0_18, %c0_19], %44 {strides = array<i32>} : memref<1x256x128xbf16, #tpu.memory_space<vmem>>, vector<1x256x128xbf16>,
    %45 = vector.extract_strided_slice %32 {offsets = [0, 256], sizes = [256, 128], strides = [1, 1]} : vector<256x384xf32> to vector<256x128xf32>
    %46 = arith.truncf %45 : vector<256x128xf32> to vector<256x128xbf16>
    %c0_20 = arith.constant 0 : index
    %c0_21 = arith.constant 0 : index
    %c0_22 = arith.constant 0 : index
    %47 = vector.load %arg8[%c0_20, %c0_21, %c0_22] : memref<1x256x128xbf16, #tpu.memory_space<vmem>>, vector<1x256x128xbf16>
    %48 = vector.shape_cast %47 : vector<1x256x128xbf16> to vector<256x128xbf16>
    %49 = vector.shape_cast %46 : vector<256x128xbf16> to vector<1x256x128xbf16>
    tpu.vector_store %arg8[%c0_20, %c0_21, %c0_22], %49 {strides = array<i32>} : memref<1x256x128xbf16, #tpu.memory_space<vmem>>, vector<1x256x128xbf16>,
    return
  }
  func.func @transform_0(%arg0: i32, %arg1: i32) -> (i32, i32, i32) {
    %c0_i32 = arith.constant 0 : i32
    %c0_i32_0 = arith.constant 0 : i32
    return %arg0, %arg1, %c0_i32 : i32, i32, i32
  }
  func.func @transform_1(%arg0: i32, %arg1: i32) -> (i32, i32) {
    %c0_i32 = arith.constant 0 : i32
    %c0_i32_0 = arith.constant 0 : i32
    %c0_i32_1 = arith.constant 0 : i32
    return %c0_i32, %c0_i32_0 : i32, i32
  }
  func.func @transform_2(%arg0: i32, %arg1: i32) -> (i32, i32) {
    %c0_i32 = arith.constant 0 : i32
    %c0_i32_0 = arith.constant 0 : i32
    %c0_i32_1 = arith.constant 0 : i32
    return %c0_i32, %c0_i32_0 : i32, i32
  }
  func.func @transform_3(%arg0: i32, %arg1: i32) -> (i32, i32) {
    %c0_i32 = arith.constant 0 : i32
    %c0_i32_0 = arith.constant 0 : i32
    %c0_i32_1 = arith.constant 0 : i32
    return %c0_i32, %c0_i32_0 : i32, i32
  }
  func.func @transform_4(%arg0: i32, %arg1: i32) -> (i32, i32, i32) {
    %c0_i32 = arith.constant 0 : i32
    %c0_i32_0 = arith.constant 0 : i32
    return %arg0, %arg1, %c0_i32 : i32, i32, i32
  }
  func.func @transform_5(%arg0: i32, %arg1: i32) -> (i32, i32, i32) {
    %c0_i32 = arith.constant 0 : i32
    %c0_i32_0 = arith.constant 0 : i32
    return %arg0, %arg1, %c0_i32 : i32, i32, i32
  }
  func.func @transform_6(%arg0: i32, %arg1: i32) -> (i32, i32, i32) {
    %c0_i32 = arith.constant 0 : i32
    %c0_i32_0 = arith.constant 0 : i32
    return %arg0, %arg1, %c0_i32 : i32, i32, i32
  }
}

module attributes {stable_mosaic.version = 11 : i64} {
  func.func @qkv_kernel(%arg0: i32, %arg1: i32, %arg2: memref<1x256x128xf32, #tpu.memory_space<vmem>>, %arg3: memref<1x128xf32, #tpu.memory_space<vmem>>, %arg4: memref<1x128xf32, #tpu.memory_space<vmem>>, %arg5: memref<128x384xbf16, #tpu.memory_space<vmem>>, %arg6: memref<1x256x128xbf16, #tpu.memory_space<vmem>>, %arg7: memref<1x256x128xbf16, #tpu.memory_space<vmem>>, %arg8: memref<1x256x128xbf16, #tpu.memory_space<vmem>>) attributes {dimension_semantics = [#tpu.dimension_semantics<parallel>, #tpu.dimension_semantics<parallel>], iteration_bounds = array<i64: 2, 1>, scalar_prefetch = 0 : i64, scratch_operands = 0 : i64, tpu.core_type = #tpu.core_type<tc>, window_params = [{transform_indices = @transform_0, window_bounds = array<i64: 1, 256, 128>}, {pipeline_mode = #tpu.pipeline_mode<synchronous>, transform_indices = @transform_1, window_bounds = array<i64: 1, 128>}, {pipeline_mode = #tpu.pipeline_mode<synchronous>, transform_indices = @transform_2, window_bounds = array<i64: 1, 128>}, {pipeline_mode = #tpu.pipeline_mode<synchronous>, transform_indices = @transform_3, window_bounds = array<i64: 128, 384>}, {transform_indices = @transform_4, window_bounds = array<i64: 1, 256, 128>}, {transform_indices = @transform_5, window_bounds = array<i64: 1, 256, 128>}, {transform_indices = @transform_6, window_bounds = array<i64: 1, 256, 128>}]} {
    %c0 = arith.constant 0 : index
    %c0_0 = arith.constant 0 : index
    %c0_1 = arith.constant 0 : index
    %0 = vector.load %arg2[%c0, %c0_0, %c0_1] : memref<1x256x128xf32, #tpu.memory_space<vmem>>, vector<1x256x128xf32>
    %1 = vector.shape_cast %0 : vector<1x256x128xf32> to vector<256x128xf32>
    %c0_2 = arith.constant 0 : index
    %c0_3 = arith.constant 0 : index
    %2 = vector.load %arg3[%c0_2, %c0_3] : memref<1x128xf32, #tpu.memory_space<vmem>>, vector<1x128xf32>
    %3 = vector.shape_cast %2 : vector<1x128xf32> to vector<128xf32>
    %c0_4 = arith.constant 0 : index
    %c0_5 = arith.constant 0 : index
    %4 = vector.load %arg4[%c0_4, %c0_5] : memref<1x128xf32, #tpu.memory_space<vmem>>, vector<1x128xf32>
    %5 = vector.shape_cast %4 : vector<1x128xf32> to vector<128xf32>
    %cst = arith.constant dense<0.000000e+00> : vector<256xf32>
    %6 = vector.multi_reduction <add>, %1, %cst [1] : vector<256x128xf32> to vector<256xf32>
    %7 = vector.shape_cast %6 : vector<256xf32> to vector<256x1xf32>
    %cst_6 = arith.constant 1.280000e+02 : f32
    %8 = vector.broadcast %cst_6 : f32 to vector<256x1xf32>
    %9 = arith.divf %7, %8 : vector<256x1xf32>
    %10 = vector.broadcast %9 : vector<256x1xf32> to vector<256x128xf32>
    %11 = arith.subf %1, %10 : vector<256x128xf32>
    %12 = arith.mulf %11, %11 : vector<256x128xf32>
    %cst_7 = arith.constant dense<0.000000e+00> : vector<256xf32>
    %13 = vector.multi_reduction <add>, %12, %cst_7 [1] : vector<256x128xf32> to vector<256xf32>
    %14 = vector.shape_cast %13 : vector<256xf32> to vector<256x1xf32>
    %cst_8 = arith.constant 1.280000e+02 : f32
    %15 = vector.broadcast %cst_8 : f32 to vector<256x1xf32>
    %16 = arith.divf %14, %15 : vector<256x1xf32>
    %17 = vector.broadcast %9 : vector<256x1xf32> to vector<256x128xf32>
    %18 = arith.subf %1, %17 : vector<256x128xf32>
    %cst_9 = arith.constant 9.99999974E-6 : f32
    %19 = vector.broadcast %cst_9 : f32 to vector<256x1xf32>
    %20 = arith.addf %16, %19 : vector<256x1xf32>
    %21 = math.rsqrt %20 : vector<256x1xf32>
    %22 = vector.broadcast %21 : vector<256x1xf32> to vector<256x128xf32>
    %23 = arith.mulf %18, %22 : vector<256x128xf32>
    %24 = vector.shape_cast %3 : vector<128xf32> to vector<1x128xf32>
    %25 = vector.broadcast %24 : vector<1x128xf32> to vector<256x128xf32>
    %26 = arith.mulf %23, %25 : vector<256x128xf32>
    %27 = vector.shape_cast %5 : vector<128xf32> to vector<1x128xf32>
    %28 = vector.broadcast %27 : vector<1x128xf32> to vector<256x128xf32>
    %29 = arith.addf %26, %28 : vector<256x128xf32>
    %30 = arith.truncf %29 : vector<256x128xf32> to vector<256x128xbf16>
    %c0_10 = arith.constant 0 : index
    %c0_11 = arith.constant 0 : index
    %31 = vector.load %arg5[%c0_10, %c0_11] : memref<128x384xbf16, #tpu.memory_space<vmem>>, vector<128x384xbf16>
    %cst_12 = arith.constant dense<0.000000e+00> : vector<256x384xf32>
    %32 = tpu.matmul %30, %31, %cst_12 {dimension_numbers = #tpu.dot_dimension_numbers<[1], [0], [0], [1], [0, 0, 1, 1], [], []>} : vector<256x128xbf16>, vector<128x384xbf16>, vector<256x384xf32> -> vector<256x384xf32>
    %33 = vector.extract_strided_slice %32 {offsets = [0, 0], sizes = [256, 128], strides = [1, 1]} : vector<256x384xf32> to vector<256x128xf32>
    %cst_13 = arith.constant 0.176776692 : f32
    %34 = vector.broadcast %cst_13 : f32 to vector<256x128xf32>
    %35 = arith.mulf %33, %34 : vector<256x128xf32>
    %36 = arith.truncf %35 : vector<256x128xf32> to vector<256x128xbf16>
    %c0_14 = arith.constant 0 : index
    %c0_15 = arith.constant 0 : index
    %c0_16 = arith.constant 0 : index
    %37 = vector.load %arg6[%c0_14, %c0_15, %c0_16] : memref<1x256x128xbf16, #tpu.memory_space<vmem>>, vector<1x256x128xbf16>
    %38 = vector.shape_cast %37 : vector<1x256x128xbf16> to vector<256x128xbf16>
    %39 = vector.shape_cast %36 : vector<256x128xbf16> to vector<1x256x128xbf16>
    tpu.vector_store %arg6[%c0_14, %c0_15, %c0_16], %39 {strides = array<i32>} : memref<1x256x128xbf16, #tpu.memory_space<vmem>>, vector<1x256x128xbf16>,
    %40 = vector.extract_strided_slice %32 {offsets = [0, 128], sizes = [256, 128], strides = [1, 1]} : vector<256x384xf32> to vector<256x128xf32>
    %41 = arith.truncf %40 : vector<256x128xf32> to vector<256x128xbf16>
    %c0_17 = arith.constant 0 : index
    %c0_18 = arith.constant 0 : index
    %c0_19 = arith.constant 0 : index
    %42 = vector.load %arg7[%c0_17, %c0_18, %c0_19] : memref<1x256x128xbf16, #tpu.memory_space<vmem>>, vector<1x256x128xbf16>
    %43 = vector.shape_cast %42 : vector<1x256x128xbf16> to vector<256x128xbf16>
    %44 = vector.shape_cast %41 : vector<256x128xbf16> to vector<1x256x128xbf16>
    tpu.vector_store %arg7[%c0_17, %c0_18, %c0_19], %44 {strides = array<i32>} : memref<1x256x128xbf16, #tpu.memory_space<vmem>>, vector<1x256x128xbf16>,
    %45 = vector.extract_strided_slice %32 {offsets = [0, 256], sizes = [256, 128], strides = [1, 1]} : vector<256x384xf32> to vector<256x128xf32>
    %46 = arith.truncf %45 : vector<256x128xf32> to vector<256x128xbf16>
    %c0_20 = arith.constant 0 : index
    %c0_21 = arith.constant 0 : index
    %c0_22 = arith.constant 0 : index
    %47 = vector.load %arg8[%c0_20, %c0_21, %c0_22] : memref<1x256x128xbf16, #tpu.memory_space<vmem>>, vector<1x256x128xbf16>
    %48 = vector.shape_cast %47 : vector<1x256x128xbf16> to vector<256x128xbf16>
    %49 = vector.shape_cast %46 : vector<256x128xbf16> to vector<1x256x128xbf16>
    tpu.vector_store %arg8[%c0_20, %c0_21, %c0_22], %49 {strides = array<i32>} : memref<1x256x128xbf16, #tpu.memory_space<vmem>>, vector<1x256x128xbf16>,
    return
  }
  func.func @transform_0(%arg0: i32, %arg1: i32) -> (i32, i32, i32) {
    %c0_i32 = arith.constant 0 : i32
    %c0_i32_0 = arith.constant 0 : i32
    return %arg0, %arg1, %c0_i32 : i32, i32, i32
  }
  func.func @transform_1(%arg0: i32, %arg1: i32) -> (i32, i32) {
    %c0_i32 = arith.constant 0 : i32
    %c0_i32_0 = arith.constant 0 : i32
    %c0_i32_1 = arith.constant 0 : i32
    return %c0_i32, %c0_i32_0 : i32, i32
  }
  func.func @transform_2(%arg0: i32, %arg1: i32) -> (i32, i32) {
    %c0_i32 = arith.constant 0 : i32
    %c0_i32_0 = arith.constant 0 : i32
    %c0_i32_1 = arith.constant 0 : i32
    return %c0_i32, %c0_i32_0 : i32, i32
  }
  func.func @transform_3(%arg0: i32, %arg1: i32) -> (i32, i32) {
    %c0_i32 = arith.constant 0 : i32
    %c0_i32_0 = arith.constant 0 : i32
    %c0_i32_1 = arith.constant 0 : i32
    return %c0_i32, %c0_i32_0 : i32, i32
  }
  func.func @transform_4(%arg0: i32, %arg1: i32) -> (i32, i32, i32) {
    %c0_i32 = arith.constant 0 : i32
    %c0_i32_0 = arith.constant 0 : i32
    return %arg0, %arg1, %c0_i32 : i32, i32, i32
  }
  func.func @transform_5(%arg0: i32, %arg1: i32) -> (i32, i32, i32) {
    %c0_i32 = arith.constant 0 : i32
    %c0_i32_0 = arith.constant 0 : i32
    return %arg0, %arg1, %c0_i32 : i32, i32, i32
  }
  func.func @transform_6(%arg0: i32, %arg1: i32) -> (i32, i32, i32) {
    %c0_i32 = arith.constant 0 : i32
    %c0_i32_0 = arith.constant 0 : i32
    return %arg0, %arg1, %c0_i32 : i32, i32, i32
  }
}

</mosaic_0001>

<llo_original>
// kernel: tpu_custom_call.1
$region0: #{tpu_custom_call.1}
  #allocation0 [shape = 'u32[]', space=smem, size = 0x4, offset = 0x4, fixed_abs, tag = 'smem constant byte address 0x4 - core index']
  #allocation1 [shape = 'u32[144,128]{1,0:T(1,128)}', space=vmem, size = 0x12000, scoped, tag = 'internal scratch']
  %s0 = inlined_call_operand.hbm [shape: f32[2,256,128], index: 0, kind: input, shape index: {}]
  %s1 = inlined_call_operand.vmem [shape: f32[1,128], index: 1, kind: input, shape index: {}]
  %s2 = inlined_call_operand.vmem [shape: f32[1,128], index: 2, kind: input, shape index: {}]
  %s3 = inlined_call_operand.hbm [shape: bf16[128,384], index: 3, kind: input, shape index: {}]
  %s4 = inlined_call_operand.hbm [shape: bf16[2,256,128], index: 4, kind: output, shape index: {0}]
  %s5 = inlined_call_operand.hbm [shape: bf16[2,256,128], index: 5, kind: output, shape index: {1}]
  %s6 = inlined_call_operand.hbm [shape: bf16[2,256,128], index: 6, kind: output, shape index: {2}]
  %7 = xla_tuple %s4, %s5, %s6
  %s8 = sld [smem:[#allocation0]]
  $region73: #{tpu_custom_call.1} parent=0
    _
  %s10 = ssub.s32 1, %s8
  %s11 = scalar_select 0, %s10, %s8
  $region1: #{tpu_custom_call.1} parent=0
    #allocation2 [shape = 'u8[262144]{0}', space=vmem, size = 0x40000, scoped, tag = 'input window, operand 0']
    #allocation3 [shape = 's32[2]{0}', space=sflag, size = 0x8, scoped, tag = 'scoped memory for tpu_custom_call.1']
    #allocation4 [shape = 's32[2]{0}', space=sflag, size = 0x8, scoped, tag = 'scoped memory for tpu_custom_call.1']
    #allocation5 [shape = 'u8[98304]{0}', space=vmem, size = 0x18000, scoped, tag = 'input window, operand 3, single buffered']
    #allocation6 [shape = 's32[1]{0}', space=sflag, size = 0x4, scoped, tag = 'scoped memory for tpu_custom_call.1']
    #allocation7 [shape = 'u8[131072]{0}', space=vmem, size = 0x20000, scoped, tag = 'output window, operand 0']
    #allocation8 [shape = 'u8[131072]{0}', space=vmem, size = 0x20000, scoped, tag = 'output window, operand 1']
    #allocation9 [shape = 's32[2]{0}', space=sflag, size = 0x8, scoped, tag = 'scoped memory for tpu_custom_call.1']
    #allocation10 [shape = 'u8[131072]{0}', space=vmem, size = 0x20000, scoped, tag = 'output window, operand 2']
    %12 = vsyncpa [#allocation3], 0
    %s13 = scalar_lea.sflag [#allocation3], 1
    %14 = vsyncpa %s13, 0
    %15 = vsyncpa [#allocation6], 0
    %16 = vsyncpa [#allocation4], 0
    %s17 = scalar_lea.sflag [#allocation4], 1
    %18 = vsyncpa %s17, 0
    %19 = vsyncpa [#allocation9], 0
    %s20 = scalar_lea.sflag [#allocation9], 1
    %21 = vsyncpa %s20, 0
    loop: start=0, step=1, limit=4
    $region2: #{tpu_custom_call.1} parent=1 // loop_pre_header
      _
    $region3: #{tpu_custom_call.1} parent=1 // loop_header
      %s23 = sphi 0, %s27
      %p24 = scmp.ge.s32.totalorder %s23, 4
      %s30 = sphi 0, %s42
      %s31 = sphi 0, %s38
      %s32 = sphi 0, %s30
      %s33 = sphi 0, %s31
      %s34 = sphi 0, %s32
      %s35 = sphi 0, %s33
      %s47 = sphi 0, %s49
      %s50 = sphi 0, %s47
      %s51 = sphi 0, %s50
      %s67 = sphi 0, %s51
      %s71 = sphi 0, %s71
      %s73 = sphi 0, %s71
      %s74 = sphi 0, %s73
      %s88 = sphi 0, %s74
      %s92 = sphi 0, %s92
      %s94 = sphi 0, %s92
      %s95 = sphi 0, %s94
      %s109 = sphi 0, %s95
      %s113 = sphi 0, %s113
      %s115 = sphi 0, %s113
      %s116 = sphi 0, %s115
      %s130 = sphi 0, %s116
      %s138 = sphi 0, %s140
      %s141 = sphi 0, %s138
      %s142 = sphi 0, %s141
      %s158 = sphi 0, %s142
      %s166 = sphi 0, %s168
      %s169 = sphi 0, %s166
      %s170 = sphi 0, %s169
      %s186 = sphi 0, %s170
      %s194 = sphi 0, %s196
      %s197 = sphi 0, %s194
      %s198 = sphi 0, %s197
      %s214 = sphi 0, %s198
    $region4: #{tpu_custom_call.1} parent=1 // loop_header_branch
      %26 = sbr.rel (%p24) target = $region8
    $region5: #{tpu_custom_call.1} parent=1 // loop_body
      %s28 = ssub.s32 %s23, 1
      %s29 = ssub.s32 %s23, 2
      %s36 = sadd.s32 1, %s31
      %p37 = scmp.ge.s32.totalorder %s36, 1
      %s38 = scalar_select %p37, 0, %s36
      %s39 = sadd.s32 1, %s30
      %s40 = scalar_select %p37, %s39, %s30
      %p41 = scmp.ge.s32.totalorder %s40, 2
      %s42 = scalar_select %p41, 0, %s40
      %s43 = ssub.s32 %s30, %s42
      %s44 = ssub.s32 %s31, %s38
      %s45 = sor.u32 %s43, %s44
      %p46 = scmp.eq.s32.totalorder %s45, 0
      %s48 = sadd.s32 %s47, 1
      %s49 = scalar_select %p46, %s47, %s48
      %p52 = pneg %p46
      %p53 = scmp.eq.s32.totalorder %s23, 1
      %p54 = por %p52, %p53
      %p55 = scmp.ne.s32.totalorder %s47, %s50
      %p56 = scmp.eq.s32.totalorder %s23, 0
      %p57 = por %p55, %p56
      %p58 = scmp.ne.s32.totalorder %s47, %s50
      %p59 = scmp.eq.s32.totalorder %s28, 1
      %p60 = por %p58, %p59
      %p61 = scmp.ne.s32.totalorder %s50, %s51
      %p62 = scmp.eq.s32.totalorder %s28, 0
      %p63 = por %p61, %p62
      %p64 = scmp.ne.s32.totalorder %s50, %s51
      %p65 = scmp.eq.s32.totalorder %s29, 1
      %p66 = por %p64, %p65
      %p68 = scmp.ne.s32.totalorder %s51, %s67
      %p69 = scmp.eq.s32.totalorder %s29, 0
      %p70 = por %p68, %p69
      %s72 = sadd.s32 %s71, 1
      %p75 = scmp.eq.s32.totalorder %s23, 1
      %p76 = scmp.ne.s32.totalorder %s71, %s73
      %p77 = scmp.eq.s32.totalorder %s23, 0
      %p78 = por %p76, %p77
      %p79 = scmp.ne.s32.totalorder %s71, %s73
      %p80 = scmp.eq.s32.totalorder %s28, 1
      %p81 = por %p79, %p80
      %p82 = scmp.ne.s32.totalorder %s73, %s74
      %p83 = scmp.eq.s32.totalorder %s28, 0
      %p84 = por %p82, %p83
      %p85 = scmp.ne.s32.totalorder %s73, %s74
      %p86 = scmp.eq.s32.totalorder %s29, 1
      %p87 = por %p85, %p86
      %p89 = scmp.ne.s32.totalorder %s74, %s88
      %p90 = scmp.eq.s32.totalorder %s29, 0
      %p91 = por %p89, %p90
      %s93 = sadd.s32 %s92, 1
      %p96 = scmp.eq.s32.totalorder %s23, 1
      %p97 = scmp.ne.s32.totalorder %s92, %s94
      %p98 = scmp.eq.s32.totalorder %s23, 0
      %p99 = por %p97, %p98
      %p100 = scmp.ne.s32.totalorder %s92, %s94
      %p101 = scmp.eq.s32.totalorder %s28, 1
      %p102 = por %p100, %p101
      %p103 = scmp.ne.s32.totalorder %s94, %s95
      %p104 = scmp.eq.s32.totalorder %s28, 0
      %p105 = por %p103, %p104
      %p106 = scmp.ne.s32.totalorder %s94, %s95
      %p107 = scmp.eq.s32.totalorder %s29, 1
      %p108 = por %p106, %p107
      %p110 = scmp.ne.s32.totalorder %s95, %s109
      %p111 = scmp.eq.s32.totalorder %s29, 0
      %p112 = por %p110, %p111
      %s114 = sadd.s32 %s113, 1
      %p117 = scmp.eq.s32.totalorder %s23, 1
      %p118 = scmp.ne.s32.totalorder %s113, %s115
      %p119 = scmp.eq.s32.totalorder %s23, 0
      %p120 = por %p118, %p119
      %p121 = scmp.ne.s32.totalorder %s113, %s115
      %p122 = scmp.eq.s32.totalorder %s28, 1
      %p123 = por %p121, %p122
      %p124 = scmp.ne.s32.totalorder %s115, %s116
      %p125 = scmp.eq.s32.totalorder %s28, 0
      %p126 = por %p124, %p125
      %p127 = scmp.ne.s32.totalorder %s115, %s116
      %p128 = scmp.eq.s32.totalorder %s29, 1
      %p129 = por %p127, %p128
      %p131 = scmp.ne.s32.totalorder %s116, %s130
      %p132 = scmp.eq.s32.totalorder %s29, 0
      %p133 = por %p131, %p132
      %s134 = ssub.s32 %s30, %s42
      %s135 = ssub.s32 %s31, %s38
      %s136 = sor.u32 %s134, %s135
      %p137 = scmp.eq.s32.totalorder %s136, 0
      %s139 = sadd.s32 %s138, 1
      %s140 = scalar_select %p137, %s138, %s139
      %p143 = pneg %p137
      %p144 = scmp.eq.s32.totalorder %s23, 1
      %p145 = por %p143, %p144
      %p146 = scmp.ne.s32.totalorder %s138, %s141
      %p147 = scmp.eq.s32.totalorder %s23, 0
      %p148 = por %p146, %p147
      %p149 = scmp.ne.s32.totalorder %s138, %s141
      %p150 = scmp.eq.s32.totalorder %s28, 1
      %p151 = por %p149, %p150
      %p152 = scmp.ne.s32.totalorder %s141, %s142
      %p153 = scmp.eq.s32.totalorder %s28, 0
      %p154 = por %p152, %p153
      %p155 = scmp.ne.s32.totalorder %s141, %s142
      %p156 = scmp.eq.s32.totalorder %s29, 1
      %p157 = por %p155, %p156
      %p159 = scmp.ne.s32.totalorder %s142, %s158
      %p160 = scmp.eq.s32.totalorder %s29, 0
      %p161 = por %p159, %p160
      %s162 = ssub.s32 %s30, %s42
      %s163 = ssub.s32 %s31, %s38
      %s164 = sor.u32 %s162, %s163
      %p165 = scmp.eq.s32.totalorder %s164, 0
      %s167 = sadd.s32 %s166, 1
      %s168 = scalar_select %p165, %s166, %s167
      %p171 = pneg %p165
      %p172 = scmp.eq.s32.totalorder %s23, 1
      %p173 = por %p171, %p172
      %p174 = scmp.ne.s32.totalorder %s166, %s169
      %p175 = scmp.eq.s32.totalorder %s23, 0
      %p176 = por %p174, %p175
      %p177 = scmp.ne.s32.totalorder %s166, %s169
      %p178 = scmp.eq.s32.totalorder %s28, 1
      %p179 = por %p177, %p178
      %p180 = scmp.ne.s32.totalorder %s169, %s170
      %p181 = scmp.eq.s32.totalorder %s28, 0
      %p182 = por %p180, %p181
      %p183 = scmp.ne.s32.totalorder %s169, %s170
      %p184 = scmp.eq.s32.totalorder %s29, 1
      %p185 = por %p183, %p184
      %p187 = scmp.ne.s32.totalorder %s170, %s186
      %p188 = scmp.eq.s32.totalorder %s29, 0
      %p189 = por %p187, %p188
      %s190 = ssub.s32 %s30, %s42
      %s191 = ssub.s32 %s31, %s38
      %s192 = sor.u32 %s190, %s191
      %p193 = scmp.eq.s32.totalorder %s192, 0
      %s195 = sadd.s32 %s194, 1
      %s196 = scalar_select %p193, %s194, %s195
      %p199 = pneg %p193
      %p200 = scmp.eq.s32.totalorder %s23, 1
      %p201 = por %p199, %p200
      %p202 = scmp.ne.s32.totalorder %s194, %s197
      %p203 = scmp.eq.s32.totalorder %s23, 0
      %p204 = por %p202, %p203
      %p205 = scmp.ne.s32.totalorder %s194, %s197
      %p206 = scmp.eq.s32.totalorder %s28, 1
      %p207 = por %p205, %p206
      %p208 = scmp.ne.s32.totalorder %s197, %s198
      %p209 = scmp.eq.s32.totalorder %s28, 0
      %p210 = por %p208, %p209
      %p211 = scmp.ne.s32.totalorder %s197, %s198
      %p212 = scmp.eq.s32.totalorder %s29, 1
      %p213 = por %p211, %p212
      %p215 = scmp.ne.s32.totalorder %s198, %s214
      %p216 = scmp.eq.s32.totalorder %s29, 0
      %p217 = por %p215, %p216
      %p218 = scmp.le.s32.totalorder 1, %s23
      %p219 = scmp.lt.s32.totalorder %s23, 3
      %p220 = pnand %p218, %p219
      %p221 = pneg %p220
      // Predicated region
      $region9: #{tpu_custom_call.1} parent=5 // pred_check
        _
      $region10: #{tpu_custom_call.1} parent=5 // pred_check_branch
        %223 = sbr.rel (%p220) target = $region12
      $region11: #{tpu_custom_call.1} parent=5 // pred_region
        %s224 = ssub.s32 %s23, 1
        // Predicated region
        $region13: #{tpu_custom_call.1} parent=11 // pred_check
          %p225 = pneg %p84
        $region14: #{tpu_custom_call.1} parent=11 // pred_check_branch
          %227 = sbr.rel (%p225) target = $region16
        $region15: #{tpu_custom_call.1} parent=11 // pred_region
          _
        $region16: #{tpu_custom_call.1} parent=11 // pred_fallthru
          _
        // Predicated region
        $region17: #{tpu_custom_call.1} parent=11 // pred_check
          %p228 = pneg %p105
        $region18: #{tpu_custom_call.1} parent=11 // pred_check_branch
          %230 = sbr.rel (%p228) target = $region20
        $region19: #{tpu_custom_call.1} parent=11 // pred_region
          _
        $region20: #{tpu_custom_call.1} parent=11 // pred_fallthru
          _
        // Predicated region
        $region21: #{tpu_custom_call.1} parent=11 // pred_check
          %p231 = pneg %p126
        $region22: #{tpu_custom_call.1} parent=11 // pred_check_branch
          %233 = sbr.rel (%p231) target = $region24
        $region23: #{tpu_custom_call.1} parent=11 // pred_region
          %s235 = ssub.s32 3072, 3072
          %236 = vsyncadd [#allocation6], %s235
          %s237 = sshll.u32 [#allocation5], 4
          %s238 = int_to_ptr.vmem [resolvable:$true] %s237
          %243 = dma.hbm_to_vmem [thread:$0]  %s3, 3072, %s238, [#allocation6], 192, 192, 12
        $region24: #{tpu_custom_call.1} parent=11 // pred_fallthru
          _
      $region12: #{tpu_custom_call.1} parent=5 // pred_fallthru
        _
      %p244 = scmp.lt.s32.totalorder %s23, 2
      // Predicated region
      $region25: #{tpu_custom_call.1} parent=5 // pred_check
        %p245 = pneg %p244
      $region26: #{tpu_custom_call.1} parent=5 // pred_check_branch
        %247 = sbr.rel (%p245) target = $region28
      $region27: #{tpu_custom_call.1} parent=5 // pred_region
        // Predicated region
        $region29: #{tpu_custom_call.1} parent=27 // pred_check
          %p248 = pneg %p57
        $region30: #{tpu_custom_call.1} parent=27 // pred_check_branch
          %250 = sbr.rel (%p248) target = $region32
        $region31: #{tpu_custom_call.1} parent=27 // pred_region
          %s251 = sand.u32 %s47, 1
          %s252 = scalar_lea.sflag [#allocation3], %s251
          %s253 = sand.u32 %s47, 1
          %s254 = smul.addr %s253, 256
          %s255 = scalar_lea.vmem [#allocation2], %s254
          %s256 = smul.u32 32, %s31
          %s258 = ssub.s32 4096, 4096
          %259 = vsyncadd %s252, %s258
          %s260 = smul.addr %s30, 32
          %s261 = sadd.s32 %s256, %s260
          %s262 = smul.addr %s261, 128
          %s263 = scalar_lea.hbm %s0, %s262
          %s264 = sshll.u32 %s255, 4
          %s265 = int_to_ptr.vmem [resolvable:$true] %s264
          %270 = dma.hbm_to_vmem [thread:$0]  %s263, 4096, %s265, %s252, 128, 128, 8
        $region32: #{tpu_custom_call.1} parent=27 // pred_fallthru
          _
      $region28: #{tpu_custom_call.1} parent=5 // pred_fallthru
        _
      %p271 = scmp.le.s32.totalorder 1, %s23
      %p272 = scmp.lt.s32.totalorder %s23, 3
      %p273 = pnand %p271, %p272
      %p274 = pneg %p273
      // Predicated region
      $region33: #{tpu_custom_call.1} parent=5 // pred_check
        _
      $region34: #{tpu_custom_call.1} parent=5 // pred_check_branch
        %276 = sbr.rel (%p273) target = $region36
      $region35: #{tpu_custom_call.1} parent=5 // pred_region
        %s277 = ssub.s32 %s23, 1
        %s278 = sand.u32 %s50, 1
        %s279 = scalar_lea.sflag [#allocation3], %s278
        %s280 = sand.u32 %s50, 1
        %s281 = smul.addr %s280, 256
        %s282 = scalar_lea.vmem [#allocation2], %s281
        // Predicated region
        $region37: #{tpu_custom_call.1} parent=35 // pred_check
          %p283 = pneg %p63
        $region38: #{tpu_custom_call.1} parent=35 // pred_check_branch
          %285 = sbr.rel (%p283) target = $region40
        $region39: #{tpu_custom_call.1} parent=35 // pred_region
          %286 = dma.done %s279, 4096
        $region40: #{tpu_custom_call.1} parent=35 // pred_fallthru
          _
        // Predicated region
        $region41: #{tpu_custom_call.1} parent=35 // pred_check
          %p287 = pneg %p126
        $region42: #{tpu_custom_call.1} parent=35 // pred_check_branch
          %289 = sbr.rel (%p287) target = $region44
        $region43: #{tpu_custom_call.1} parent=35 // pred_region
          %290 = dma.done [#allocation6], 3072
        $region44: #{tpu_custom_call.1} parent=35 // pred_fallthru
          _
        %s291 = sand.u32 %s50, 1
        %s292 = scalar_lea.sflag [#allocation3], %s291
        %s293 = sand.u32 %s50, 1
        %s294 = smul.addr %s293, 256
        %s295 = scalar_lea.vmem [#allocation2], %s294
        %p296 = pneg %p63
        %p297 = pneg %p60
        %p298 = pneg %p84
        %p299 = pneg %p81
        %p300 = pneg %p105
        %p301 = pneg %p102
        %p302 = pneg %p126
        %p303 = pneg %p123
        %p304 = pneg %p154
        %p305 = pneg %p151
        %s306 = sand.u32 %s141, 1
        %s307 = scalar_lea.sflag [#allocation4], %s306
        %s308 = sand.u32 %s141, 1
        %s309 = smul.addr %s308, 128
        %s310 = scalar_lea.vmem [#allocation7], %s309
        %p311 = pneg %p182
        %p312 = pneg %p179
        %s313 = sand.u32 %s28, 1
        %s314 = scalar_lea.sflag [#allocation9], %s313
        %s315 = sand.u32 %s169, 1
        %s316 = smul.addr %s315, 128
        %s317 = scalar_lea.vmem [#allocation8], %s316
        %p318 = pneg %p210
        %p319 = pneg %p207
        %s320 = sand.u32 %s28, 1
        %s321 = scalar_lea.sflag [#allocation9], %s320
        %s322 = sand.u32 %s197, 1
        %s323 = smul.addr %s322, 128
        %s324 = scalar_lea.vmem [#allocation10], %s323
        %s325 = smul.u32 32, %s33
        %s326 = smul.u32 32, %s33
        %s327 = smul.u32 32, %s33
        %s328 = smul.u32 32, %s33
        %v330 = vld [vmem:[%s282] sm:$0xff]
        %v331 = vld [vmem:[%s282 + $0x8] sm:$0xff]
        %v332 = vld [vmem:[%s282 + $0x10] sm:$0xff]
        %v333 = vld [vmem:[%s282 + $0x18] sm:$0xff]
        %v334 = vld [vmem:[%s282 + $0x20] sm:$0xff]
        %v335 = vld [vmem:[%s282 + $0x28] sm:$0xff]
        %v336 = vld [vmem:[%s282 + $0x30] sm:$0xff]
        %v337 = vld [vmem:[%s282 + $0x38] sm:$0xff]
        %v338 = vld [vmem:[%s282 + $0x40] sm:$0xff]
        %v339 = vld [vmem:[%s282 + $0x48] sm:$0xff]
        %v340 = vld [vmem:[%s282 + $0x50] sm:$0xff]
        %v341 = vld [vmem:[%s282 + $0x58] sm:$0xff]
        %v342 = vld [vmem:[%s282 + $0x60] sm:$0xff]
        %v343 = vld [vmem:[%s282 + $0x68] sm:$0xff]
        %v344 = vld [vmem:[%s282 + $0x70] sm:$0xff]
        %v345 = vld [vmem:[%s282 + $0x78] sm:$0xff]
        %v346 = vld [vmem:[%s282 + $0x80] sm:$0xff]
        %v347 = vld [vmem:[%s282 + $0x88] sm:$0xff]
        %v348 = vld [vmem:[%s282 + $0x90] sm:$0xff]
        %v349 = vld [vmem:[%s282 + $0x98] sm:$0xff]
        %v350 = vld [vmem:[%s282 + $0xa0] sm:$0xff]
        %v351 = vld [vmem:[%s282 + $0xa8] sm:$0xff]
        %v352 = vld [vmem:[%s282 + $0xb0] sm:$0xff]
        %v353 = vld [vmem:[%s282 + $0xb8] sm:$0xff]
        %v354 = vld [vmem:[%s282 + $0xc0] sm:$0xff]
        %v355 = vld [vmem:[%s282 + $0xc8] sm:$0xff]
        %v356 = vld [vmem:[%s282 + $0xd0] sm:$0xff]
        %v357 = vld [vmem:[%s282 + $0xd8] sm:$0xff]
        %v358 = vld [vmem:[%s282 + $0xe0] sm:$0xff]
        %v359 = vld [vmem:[%s282 + $0xe8] sm:$0xff]
        %v360 = vld [vmem:[%s282 + $0xf0] sm:$0xff]
        %v361 = vld [vmem:[%s282 + $0xf8] sm:$0xff]
        %v362 = vld [vmem:[%s1] sm:$0x1]
        %v363 = vld [vmem:[%s2] sm:$0x1]
        %364 = vadd.xlane.f32.xlu0 %v330
        %v365 = vpop.xlane.xlu0 %364
        %366 = vadd.xlane.f32.xlu0 %v331
        %v367 = vpop.xlane.xlu0 %366
        %368 = vadd.xlane.f32.xlu0 %v332
        %v369 = vpop.xlane.xlu0 %368
        %370 = vadd.xlane.f32.xlu0 %v333
        %v371 = vpop.xlane.xlu0 %370
        %372 = vadd.xlane.f32.xlu0 %v334
        %v373 = vpop.xlane.xlu0 %372
        %374 = vadd.xlane.f32.xlu0 %v335
        %v375 = vpop.xlane.xlu0 %374
        %376 = vadd.xlane.f32.xlu0 %v336
        %v377 = vpop.xlane.xlu0 %376
        %378 = vadd.xlane.f32.xlu0 %v337
        %v379 = vpop.xlane.xlu0 %378
        %380 = vadd.xlane.f32.xlu0 %v338
        %v381 = vpop.xlane.xlu0 %380
        %382 = vadd.xlane.f32.xlu0 %v339
        %v383 = vpop.xlane.xlu0 %382
        %384 = vadd.xlane.f32.xlu0 %v340
        %v385 = vpop.xlane.xlu0 %384
        %386 = vadd.xlane.f32.xlu0 %v341
        %v387 = vpop.xlane.xlu0 %386
        %388 = vadd.xlane.f32.xlu0 %v342
        %v389 = vpop.xlane.xlu0 %388
        %390 = vadd.xlane.f32.xlu0 %v343
        %v391 = vpop.xlane.xlu0 %390
        %392 = vadd.xlane.f32.xlu0 %v344
        %v393 = vpop.xlane.xlu0 %392
        %394 = vadd.xlane.f32.xlu0 %v345
        %v395 = vpop.xlane.xlu0 %394
        %396 = vadd.xlane.f32.xlu0 %v346
        %v397 = vpop.xlane.xlu0 %396
        %398 = vadd.xlane.f32.xlu0 %v347
        %v399 = vpop.xlane.xlu0 %398
        %400 = vadd.xlane.f32.xlu0 %v348
        %v401 = vpop.xlane.xlu0 %400
        %402 = vadd.xlane.f32.xlu0 %v349
        %v403 = vpop.xlane.xlu0 %402
        %404 = vadd.xlane.f32.xlu0 %v350
        %v405 = vpop.xlane.xlu0 %404
        %406 = vadd.xlane.f32.xlu0 %v351
        %v407 = vpop.xlane.xlu0 %406
        %408 = vadd.xlane.f32.xlu0 %v352
        %v409 = vpop.xlane.xlu0 %408
        %410 = vadd.xlane.f32.xlu0 %v353
        %v411 = vpop.xlane.xlu0 %410
        %412 = vadd.xlane.f32.xlu0 %v354
        %v413 = vpop.xlane.xlu0 %412
        %414 = vadd.xlane.f32.xlu0 %v355
        %v415 = vpop.xlane.xlu0 %414
        %416 = vadd.xlane.f32.xlu0 %v356
        %v417 = vpop.xlane.xlu0 %416
        %418 = vadd.xlane.f32.xlu0 %v357
        %v419 = vpop.xlane.xlu0 %418
        %420 = vadd.xlane.f32.xlu0 %v358
        %v421 = vpop.xlane.xlu0 %420
        %422 = vadd.xlane.f32.xlu0 %v359
        %v423 = vpop.xlane.xlu0 %422
        %424 = vadd.xlane.f32.xlu0 %v360
        %v425 = vpop.xlane.xlu0 %424
        %426 = vadd.xlane.f32.xlu0 %v361
        %v427 = vpop.xlane.xlu0 %426
        %v428 = vrcp.pop 128.0
        %v429 = vmul.f32 %v365, %v428
        %v430 = vmul.f32 %v367, %v428
        %v431 = vmul.f32 %v369, %v428
        %v432 = vmul.f32 %v371, %v428
        %v433 = vmul.f32 %v373, %v428
        %v434 = vmul.f32 %v375, %v428
        %v435 = vmul.f32 %v377, %v428
        %v436 = vmul.f32 %v379, %v428
        %v437 = vmul.f32 %v381, %v428
        %v438 = vmul.f32 %v383, %v428
        %v439 = vmul.f32 %v385, %v428
        %v440 = vmul.f32 %v387, %v428
        %v441 = vmul.f32 %v389, %v428
        %v442 = vmul.f32 %v391, %v428
        %v443 = vmul.f32 %v393, %v428
        %v444 = vmul.f32 %v395, %v428
        %v445 = vmul.f32 %v397, %v428
        %v446 = vmul.f32 %v399, %v428
        %v447 = vmul.f32 %v401, %v428
        %v448 = vmul.f32 %v403, %v428
        %v449 = vmul.f32 %v405, %v428
        %v450 = vmul.f32 %v407, %v428
        %v451 = vmul.f32 %v409, %v428
        %v452 = vmul.f32 %v411, %v428
        %v453 = vmul.f32 %v413, %v428
        %v454 = vmul.f32 %v415, %v428
        %v455 = vmul.f32 %v417, %v428
        %v456 = vmul.f32 %v419, %v428
        %v457 = vmul.f32 %v421, %v428
        %v458 = vmul.f32 %v423, %v428
        %v459 = vmul.f32 %v425, %v428
        %v460 = vmul.f32 %v427, %v428
        %v461 = vsub.f32 %v330, %v429
        %v462 = vsub.f32 %v331, %v430
        %v463 = vsub.f32 %v332, %v431
        %v464 = vsub.f32 %v333, %v432
        %v465 = vsub.f32 %v334, %v433
        %v466 = vsub.f32 %v335, %v434
        %v467 = vsub.f32 %v336, %v435
        %v468 = vsub.f32 %v337, %v436
        %v469 = vsub.f32 %v338, %v437
        %v470 = vsub.f32 %v339, %v438
        %v471 = vsub.f32 %v340, %v439
        %v472 = vsub.f32 %v341, %v440
        %v473 = vsub.f32 %v342, %v441
        %v474 = vsub.f32 %v343, %v442
        %v475 = vsub.f32 %v344, %v443
        %v476 = vsub.f32 %v345, %v444
        %v477 = vsub.f32 %v346, %v445
        %v478 = vsub.f32 %v347, %v446
        %v479 = vsub.f32 %v348, %v447
        %v480 = vsub.f32 %v349, %v448
        %v481 = vsub.f32 %v350, %v449
        %v482 = vsub.f32 %v351, %v450
        %v483 = vsub.f32 %v352, %v451
        %v484 = vsub.f32 %v353, %v452
        %v485 = vsub.f32 %v354, %v453
        %v486 = vsub.f32 %v355, %v454
        %v487 = vsub.f32 %v356, %v455
        %v488 = vsub.f32 %v357, %v456
        %v489 = vsub.f32 %v358, %v457
        %v490 = vsub.f32 %v359, %v458
        %v491 = vsub.f32 %v360, %v459
        %v492 = vsub.f32 %v361, %v460
        %v493 = vmul.f32 %v461, %v461
        %v494 = vmul.f32 %v462, %v462
        %v495 = vmul.f32 %v463, %v463
        %v496 = vmul.f32 %v464, %v464
        %v497 = vmul.f32 %v465, %v465
        %v498 = vmul.f32 %v466, %v466
        %v499 = vmul.f32 %v467, %v467
        %v500 = vmul.f32 %v468, %v468
        %v501 = vmul.f32 %v469, %v469
        %v502 = vmul.f32 %v470, %v470
        %v503 = vmul.f32 %v471, %v471
        %v504 = vmul.f32 %v472, %v472
        %v505 = vmul.f32 %v473, %v473
        %v506 = vmul.f32 %v474, %v474
        %v507 = vmul.f32 %v475, %v475
        %v508 = vmul.f32 %v476, %v476
        %v509 = vmul.f32 %v477, %v477
        %v510 = vmul.f32 %v478, %v478
        %v511 = vmul.f32 %v479, %v479
        %v512 = vmul.f32 %v480, %v480
        %v513 = vmul.f32 %v481, %v481
        %v514 = vmul.f32 %v482, %v482
        %v515 = vmul.f32 %v483, %v483
        %v516 = vmul.f32 %v484, %v484
        %v517 = vmul.f32 %v485, %v485
        %v518 = vmul.f32 %v486, %v486
        %v519 = vmul.f32 %v487, %v487
        %v520 = vmul.f32 %v488, %v488
        %v521 = vmul.f32 %v489, %v489
        %v522 = vmul.f32 %v490, %v490
        %v523 = vmul.f32 %v491, %v491
        %v524 = vmul.f32 %v492, %v492
        %525 = vadd.xlane.f32.xlu0 %v493
        %v526 = vpop.xlane.xlu0 %525
        %527 = vadd.xlane.f32.xlu0 %v494
        %v528 = vpop.xlane.xlu0 %527
        %529 = vadd.xlane.f32.xlu0 %v495
        %v530 = vpop.xlane.xlu0 %529
        %531 = vadd.xlane.f32.xlu0 %v496
        %v532 = vpop.xlane.xlu0 %531
        %533 = vadd.xlane.f32.xlu0 %v497
        %v534 = vpop.xlane.xlu0 %533
        %535 = vadd.xlane.f32.xlu0 %v498
        %v536 = vpop.xlane.xlu0 %535
        %537 = vadd.xlane.f32.xlu0 %v499
        %v538 = vpop.xlane.xlu0 %537
        %539 = vadd.xlane.f32.xlu0 %v500
        %v540 = vpop.xlane.xlu0 %539
        %541 = vadd.xlane.f32.xlu0 %v501
        %v542 = vpop.xlane.xlu0 %541
        %543 = vadd.xlane.f32.xlu0 %v502
        %v544 = vpop.xlane.xlu0 %543
        %545 = vadd.xlane.f32.xlu0 %v503
        %v546 = vpop.xlane.xlu0 %545
        %547 = vadd.xlane.f32.xlu0 %v504
        %v548 = vpop.xlane.xlu0 %547
        %549 = vadd.xlane.f32.xlu0 %v505
        %v550 = vpop.xlane.xlu0 %549
        %551 = vadd.xlane.f32.xlu0 %v506
        %v552 = vpop.xlane.xlu0 %551
        %553 = vadd.xlane.f32.xlu0 %v507
        %v554 = vpop.xlane.xlu0 %553
        %555 = vadd.xlane.f32.xlu0 %v508
        %v556 = vpop.xlane.xlu0 %555
        %557 = vadd.xlane.f32.xlu0 %v509
        %v558 = vpop.xlane.xlu0 %557
        %559 = vadd.xlane.f32.xlu0 %v510
        %v560 = vpop.xlane.xlu0 %559
        %561 = vadd.xlane.f32.xlu0 %v511
        %v562 = vpop.xlane.xlu0 %561
        %563 = vadd.xlane.f32.xlu0 %v512
        %v564 = vpop.xlane.xlu0 %563
        %565 = vadd.xlane.f32.xlu0 %v513
        %v566 = vpop.xlane.xlu0 %565
        %567 = vadd.xlane.f32.xlu0 %v514
        %v568 = vpop.xlane.xlu0 %567
        %569 = vadd.xlane.f32.xlu0 %v515
        %v570 = vpop.xlane.xlu0 %569
        %571 = vadd.xlane.f32.xlu0 %v516
        %v572 = vpop.xlane.xlu0 %571
        %573 = vadd.xlane.f32.xlu0 %v517
        %v574 = vpop.xlane.xlu0 %573
        %575 = vadd.xlane.f32.xlu0 %v518
        %v576 = vpop.xlane.xlu0 %575
        %577 = vadd.xlane.f32.xlu0 %v519
        %v578 = vpop.xlane.xlu0 %577
        %579 = vadd.xlane.f32.xlu0 %v520
        %v580 = vpop.xlane.xlu0 %579
        %581 = vadd.xlane.f32.xlu0 %v521
        %v582 = vpop.xlane.xlu0 %581
        %583 = vadd.xlane.f32.xlu0 %v522
        %v584 = vpop.xlane.xlu0 %583
        %585 = vadd.xlane.f32.xlu0 %v523
        %v586 = vpop.xlane.xlu0 %585
        %587 = vadd.xlane.f32.xlu0 %v524
        %v588 = vpop.xlane.xlu0 %587
        %v589 = vmul.f32 %v526, %v428
        %v590 = vmul.f32 %v528, %v428
        %v591 = vmul.f32 %v530, %v428
        %v592 = vmul.f32 %v532, %v428
        %v593 = vmul.f32 %v534, %v428
        %v594 = vmul.f32 %v536, %v428
        %v595 = vmul.f32 %v538, %v428
        %v596 = vmul.f32 %v540, %v428
        %v597 = vmul.f32 %v542, %v428
        %v598 = vmul.f32 %v544, %v428
        %v599 = vmul.f32 %v546, %v428
        %v600 = vmul.f32 %v548, %v428
        %v601 = vmul.f32 %v550, %v428
        %v602 = vmul.f32 %v552, %v428
        %v603 = vmul.f32 %v554, %v428
        %v604 = vmul.f32 %v556, %v428
        %v605 = vmul.f32 %v558, %v428
        %v606 = vmul.f32 %v560, %v428
        %v607 = vmul.f32 %v562, %v428
        %v608 = vmul.f32 %v564, %v428
        %v609 = vmul.f32 %v566, %v428
        %v610 = vmul.f32 %v568, %v428
        %v611 = vmul.f32 %v570, %v428
        %v612 = vmul.f32 %v572, %v428
        %v613 = vmul.f32 %v574, %v428
        %v614 = vmul.f32 %v576, %v428
        %v615 = vmul.f32 %v578, %v428
        %v616 = vmul.f32 %v580, %v428
        %v617 = vmul.f32 %v582, %v428
        %v618 = vmul.f32 %v584, %v428
        %v619 = vmul.f32 %v586, %v428
        %v620 = vmul.f32 %v588, %v428
        %v621 = vadd.f32 %v589, 1e-05
        %v622 = vadd.f32 %v590, 1e-05
        %v623 = vadd.f32 %v591, 1e-05
        %v624 = vadd.f32 %v592, 1e-05
        %v625 = vadd.f32 %v593, 1e-05
        %v626 = vadd.f32 %v594, 1e-05
        %v627 = vadd.f32 %v595, 1e-05
        %v628 = vadd.f32 %v596, 1e-05
        %v629 = vadd.f32 %v597, 1e-05
        %v630 = vadd.f32 %v598, 1e-05
        %v631 = vadd.f32 %v599, 1e-05
        %v632 = vadd.f32 %v600, 1e-05
        %v633 = vadd.f32 %v601, 1e-05
        %v634 = vadd.f32 %v602, 1e-05
        %v635 = vadd.f32 %v603, 1e-05
        %v636 = vadd.f32 %v604, 1e-05
        %v637 = vadd.f32 %v605, 1e-05
        %v638 = vadd.f32 %v606, 1e-05
        %v639 = vadd.f32 %v607, 1e-05
        %v640 = vadd.f32 %v608, 1e-05
        %v641 = vadd.f32 %v609, 1e-05
        %v642 = vadd.f32 %v610, 1e-05
        %v643 = vadd.f32 %v611, 1e-05
        %v644 = vadd.f32 %v612, 1e-05
        %v645 = vadd.f32 %v613, 1e-05
        %v646 = vadd.f32 %v614, 1e-05
        %v647 = vadd.f32 %v615, 1e-05
        %v648 = vadd.f32 %v616, 1e-05
        %v649 = vadd.f32 %v617, 1e-05
        %v650 = vadd.f32 %v618, 1e-05
        %v651 = vadd.f32 %v619, 1e-05
        %v652 = vadd.f32 %v620, 1e-05
        %v653 = vrsqrt.pop %v621
        %v654 = vrsqrt.pop %v622
        %v655 = vrsqrt.pop %v623
        %v656 = vrsqrt.pop %v624
        %v657 = vrsqrt.pop %v625
        %v658 = vrsqrt.pop %v626
        %v659 = vrsqrt.pop %v627
        %v660 = vrsqrt.pop %v628
        %v661 = vrsqrt.pop %v629
        %v662 = vrsqrt.pop %v630
        %v663 = vrsqrt.pop %v631
        %v664 = vrsqrt.pop %v632
        %v665 = vrsqrt.pop %v633
        %v666 = vrsqrt.pop %v634
        %v667 = vrsqrt.pop %v635
        %v668 = vrsqrt.pop %v636
        %v669 = vrsqrt.pop %v637
        %v670 = vrsqrt.pop %v638
        %v671 = vrsqrt.pop %v639
        %v672 = vrsqrt.pop %v640
        %v673 = vrsqrt.pop %v641
        %v674 = vrsqrt.pop %v642
        %v675 = vrsqrt.pop %v643
        %v676 = vrsqrt.pop %v644
        %v677 = vrsqrt.pop %v645
        %v678 = vrsqrt.pop %v646
        %v679 = vrsqrt.pop %v647
        %v680 = vrsqrt.pop %v648
        %v681 = vrsqrt.pop %v649
        %v682 = vrsqrt.pop %v650
        %v683 = vrsqrt.pop %v651
        %v684 = vrsqrt.pop %v652
        %v685 = vmul.f32 %v461, %v653
        %v686 = vmul.f32 %v462, %v654
        %v687 = vmul.f32 %v463, %v655
        %v688 = vmul.f32 %v464, %v656
        %v689 = vmul.f32 %v465, %v657
        %v690 = vmul.f32 %v466, %v658
        %v691 = vmul.f32 %v467, %v659
        %v692 = vmul.f32 %v468, %v660
        %v693 = vmul.f32 %v469, %v661
        %v694 = vmul.f32 %v470, %v662
        %v695 = vmul.f32 %v471, %v663
        %v696 = vmul.f32 %v472, %v664
        %v697 = vmul.f32 %v473, %v665
        %v698 = vmul.f32 %v474, %v666
        %v699 = vmul.f32 %v475, %v667
        %v700 = vmul.f32 %v476, %v668
        %v701 = vmul.f32 %v477, %v669
        %v702 = vmul.f32 %v478, %v670
        %v703 = vmul.f32 %v479, %v671
        %v704 = vmul.f32 %v480, %v672
        %v705 = vmul.f32 %v481, %v673
        %v706 = vmul.f32 %v482, %v674
        %v707 = vmul.f32 %v483, %v675
        %v708 = vmul.f32 %v484, %v676
        %v709 = vmul.f32 %v485, %v677
        %v710 = vmul.f32 %v486, %v678
        %v711 = vmul.f32 %v487, %v679
        %v712 = vmul.f32 %v488, %v680
        %v713 = vmul.f32 %v489, %v681
        %v714 = vmul.f32 %v490, %v682
        %v715 = vmul.f32 %v491, %v683
        %v716 = vmul.f32 %v492, %v684
        %v718 = vlaneseq
        %v719 = vshrl.u32 %v718, 7
        %v720 = vsub.s32 0, %v719
        %v721 = vrot.slane %v362, %v720
        %v723 = vmul.f32 %v685, %v721
        %v724 = vmul.f32 %v686, %v721
        %v725 = vmul.f32 %v687, %v721
        %v726 = vmul.f32 %v688, %v721
        %v727 = vmul.f32 %v689, %v721
        %v728 = vmul.f32 %v690, %v721
        %v729 = vmul.f32 %v691, %v721
        %v730 = vmul.f32 %v692, %v721
        %v731 = vmul.f32 %v693, %v721
        %v732 = vmul.f32 %v694, %v721
        %v733 = vmul.f32 %v695, %v721
        %v734 = vmul.f32 %v696, %v721
        %v735 = vmul.f32 %v697, %v721
        %v736 = vmul.f32 %v698, %v721
        %v737 = vmul.f32 %v699, %v721
        %v738 = vmul.f32 %v700, %v721
        %v739 = vmul.f32 %v701, %v721
        %v740 = vmul.f32 %v702, %v721
        %v741 = vmul.f32 %v703, %v721
        %v742 = vmul.f32 %v704, %v721
        %v743 = vmul.f32 %v705, %v721
        %v744 = vmul.f32 %v706, %v721
        %v745 = vmul.f32 %v707, %v721
        %v746 = vmul.f32 %v708, %v721
        %v747 = vmul.f32 %v709, %v721
        %v748 = vmul.f32 %v710, %v721
        %v749 = vmul.f32 %v711, %v721
        %v750 = vmul.f32 %v712, %v721
        %v751 = vmul.f32 %v713, %v721
        %v752 = vmul.f32 %v714, %v721
        %v753 = vmul.f32 %v715, %v721
        %v754 = vmul.f32 %v716, %v721
        %v756 = vlaneseq
        %v757 = vshrl.u32 %v756, 7
        %v758 = vsub.s32 0, %v757
        %v759 = vrot.slane %v363, %v758
        %v761 = vadd.f32 %v723, %v759
        %v762 = vadd.f32 %v724, %v759
        %v763 = vadd.f32 %v725, %v759
        %v764 = vadd.f32 %v726, %v759
        %v765 = vadd.f32 %v727, %v759
        %v766 = vadd.f32 %v728, %v759
        %v767 = vadd.f32 %v729, %v759
        %v768 = vadd.f32 %v730, %v759
        %v769 = vadd.f32 %v731, %v759
        %v770 = vadd.f32 %v732, %v759
        %v771 = vadd.f32 %v733, %v759
        %v772 = vadd.f32 %v734, %v759
        %v773 = vadd.f32 %v735, %v759
        %v774 = vadd.f32 %v736, %v759
        %v775 = vadd.f32 %v737, %v759
        %v776 = vadd.f32 %v738, %v759
        %v777 = vadd.f32 %v739, %v759
        %v778 = vadd.f32 %v740, %v759
        %v779 = vadd.f32 %v741, %v759
        %v780 = vadd.f32 %v742, %v759
        %v781 = vadd.f32 %v743, %v759
        %v782 = vadd.f32 %v744, %v759
        %v783 = vadd.f32 %v745, %v759
        %v784 = vadd.f32 %v746, %v759
        %v785 = vadd.f32 %v747, %v759
        %v786 = vadd.f32 %v748, %v759
        %v787 = vadd.f32 %v749, %v759
        %v788 = vadd.f32 %v750, %v759
        %v789 = vadd.f32 %v751, %v759
        %v790 = vadd.f32 %v752, %v759
        %v791 = vadd.f32 %v753, %v759
        %v792 = vadd.f32 %v754, %v759
        %v793 = vpack.c.bf16 %v762, %v761
        %v794 = vpack.c.bf16 %v764, %v763
        %v795 = vpack.c.bf16 %v766, %v765
        %v796 = vpack.c.bf16 %v768, %v767
        %v797 = vpack.c.bf16 %v770, %v769
        %v798 = vpack.c.bf16 %v772, %v771
        %v799 = vpack.c.bf16 %v774, %v773
        %v800 = vpack.c.bf16 %v776, %v775
        %v801 = vpack.c.bf16 %v778, %v777
        %v802 = vpack.c.bf16 %v780, %v779
        %v803 = vpack.c.bf16 %v782, %v781
        %v804 = vpack.c.bf16 %v784, %v783
        %v805 = vpack.c.bf16 %v786, %v785
        %v806 = vpack.c.bf16 %v788, %v787
        %v807 = vpack.c.bf16 %v790, %v789
        %v808 = vpack.c.bf16 %v792, %v791
        %v809 = vld [vmem:[#allocation5] sm:$0xff]
        %v810 = vld [vmem:[#allocation5 + $0x8] sm:$0xf]
        %v811 = vld [vmem:[#allocation5 + $0xc] sm:$0xff]
        %v812 = vld [vmem:[#allocation5 + $0x14] sm:$0xf]
        %v813 = vld [vmem:[#allocation5 + $0x18] sm:$0xff]
        %v814 = vld [vmem:[#allocation5 + $0x20] sm:$0xf]
        %v815 = vld [vmem:[#allocation5 + $0x24] sm:$0xff]
        %v816 = vld [vmem:[#allocation5 + $0x2c] sm:$0xf]
        %v817 = vld [vmem:[#allocation5 + $0x30] sm:$0xff]
        %v818 = vld [vmem:[#allocation5 + $0x38] sm:$0xf]
        %v819 = vld [vmem:[#allocation5 + $0x3c] sm:$0xff]
        %v820 = vld [vmem:[#allocation5 + $0x44] sm:$0xf]
        %v821 = vld [vmem:[#allocation5 + $0x48] sm:$0xff]
        %v822 = vld [vmem:[#allocation5 + $0x50] sm:$0xf]
        %v823 = vld [vmem:[#allocation5 + $0x54] sm:$0xff]
        %v824 = vld [vmem:[#allocation5 + $0x5c] sm:$0xf]
        %v825 = vld [vmem:[#allocation5 + $0x60] sm:$0xff]
        %v826 = vld [vmem:[#allocation5 + $0x68] sm:$0xf]
        %v827 = vld [vmem:[#allocation5 + $0x6c] sm:$0xff]
        %v828 = vld [vmem:[#allocation5 + $0x74] sm:$0xf]
        %v829 = vld [vmem:[#allocation5 + $0x78] sm:$0xff]
        %v830 = vld [vmem:[#allocation5 + $0x80] sm:$0xf]
        %v831 = vld [vmem:[#allocation5 + $0x84] sm:$0xff]
        %v832 = vld [vmem:[#allocation5 + $0x8c] sm:$0xf]
        %v833 = vld [vmem:[#allocation5 + $0x90] sm:$0xff]
        %v834 = vld [vmem:[#allocation5 + $0x98] sm:$0xf]
        %v835 = vld [vmem:[#allocation5 + $0x9c] sm:$0xff]
        %v836 = vld [vmem:[#allocation5 + $0xa4] sm:$0xf]
        %v837 = vld [vmem:[#allocation5 + $0xa8] sm:$0xff]
        %v838 = vld [vmem:[#allocation5 + $0xb0] sm:$0xf]
        %v839 = vld [vmem:[#allocation5 + $0xb4] sm:$0xff]
        %v840 = vld [vmem:[#allocation5 + $0xbc] sm:$0xf]
        %v873 = vunpack.c.l.b16 %v809
        %v874 = vunpack.c.h.b16 %v809
        %v875 = vunpack.c.l.b16 %v810
        %v876 = vunpack.c.l.b16 %v811
        %v877 = vunpack.c.h.b16 %v811
        %v878 = vunpack.c.l.b16 %v812
        %v879 = vunpack.c.l.b16 %v813
        %v880 = vunpack.c.h.b16 %v813
        %v881 = vunpack.c.l.b16 %v814
        %v882 = vunpack.c.l.b16 %v815
        %v883 = vunpack.c.h.b16 %v815
        %v884 = vunpack.c.l.b16 %v816
        %v885 = vunpack.c.l.b16 %v817
        %v886 = vunpack.c.h.b16 %v817
        %v887 = vunpack.c.l.b16 %v818
        %v888 = vunpack.c.l.b16 %v819
        %v889 = vunpack.c.h.b16 %v819
        %v890 = vunpack.c.l.b16 %v820
        %v891 = vunpack.c.l.b16 %v821
        %v892 = vunpack.c.h.b16 %v821
        %v893 = vunpack.c.l.b16 %v822
        %v894 = vunpack.c.l.b16 %v823
        %v895 = vunpack.c.h.b16 %v823
        %v896 = vunpack.c.l.b16 %v824
        %v897 = vunpack.c.l.b16 %v825
        %v898 = vunpack.c.h.b16 %v825
        %v899 = vunpack.c.l.b16 %v826
        %v900 = vunpack.c.l.b16 %v827
        %v901 = vunpack.c.h.b16 %v827
        %v902 = vunpack.c.l.b16 %v828
        %v903 = vunpack.c.l.b16 %v829
        %v904 = vunpack.c.h.b16 %v829
        %v905 = vunpack.c.l.b16 %v830
        %v906 = vunpack.c.l.b16 %v831
        %v907 = vunpack.c.h.b16 %v831
        %v908 = vunpack.c.l.b16 %v832
        %v909 = vunpack.c.l.b16 %v833
        %v910 = vunpack.c.h.b16 %v833
        %v911 = vunpack.c.l.b16 %v834
        %v912 = vunpack.c.l.b16 %v835
        %v913 = vunpack.c.h.b16 %v835
        %v914 = vunpack.c.l.b16 %v836
        %v915 = vunpack.c.l.b16 %v837
        %v916 = vunpack.c.h.b16 %v837
        %v917 = vunpack.c.l.b16 %v838
        %v918 = vunpack.c.l.b16 %v839
        %v919 = vunpack.c.h.b16 %v839
        %v920 = vunpack.c.l.b16 %v840
        %v921 = vpack.c.b16 %v876, %v873
        %v922 = vpack.c.b16 %v877, %v874
        %v923 = vpack.c.b16 %v878, %v875
        %v924 = vpack.c.b16 %v882, %v879
        %v925 = vpack.c.b16 %v883, %v880
        %v926 = vpack.c.b16 %v884, %v881
        %v927 = vpack.c.b16 %v888, %v885
        %v928 = vpack.c.b16 %v889, %v886
        %v929 = vpack.c.b16 %v890, %v887
        %v930 = vpack.c.b16 %v894, %v891
        %v931 = vpack.c.b16 %v895, %v892
        %v932 = vpack.c.b16 %v896, %v893
        %v933 = vpack.c.b16 %v900, %v897
        %v934 = vpack.c.b16 %v901, %v898
        %v935 = vpack.c.b16 %v902, %v899
        %v936 = vpack.c.b16 %v906, %v903
        %v937 = vpack.c.b16 %v907, %v904
        %v938 = vpack.c.b16 %v908, %v905
        %v939 = vpack.c.b16 %v912, %v909
        %v940 = vpack.c.b16 %v913, %v910
        %v941 = vpack.c.b16 %v914, %v911
        %v942 = vpack.c.b16 %v918, %v915
        %v943 = vpack.c.b16 %v919, %v916
        %v944 = vpack.c.b16 %v920, %v917
        %969 = vmatprep.subr.bf16.mxu0 %v922
        %970 = vmatpush1.bf16.msra.mxu0 %v921
        %971 = vmatprep.subr.bf16.mxu0 %v925
        %972 = vmatpush1.bf16.msra.mxu0 %v924
        %973 = vmatprep.subr.bf16.mxu0 %v928
        %974 = vmatpush1.bf16.msra.mxu0 %v927
        %975 = vmatprep.subr.bf16.mxu0 %v931
        %976 = vmatpush1.bf16.msra.mxu0 %v930
        %977 = vmatprep.subr.bf16.mxu0 %v934
        %978 = vmatpush1.bf16.msra.mxu0 %v933
        %979 = vmatprep.subr.bf16.mxu0 %v937
        %980 = vmatpush1.bf16.msra.mxu0 %v936
        %981 = vmatprep.subr.bf16.mxu0 %v940
        %982 = vmatpush1.bf16.msra.mxu0 %v939
        %983 = vmatprep.subr.bf16.mxu0 %v943
        %984 = vmatpush1.bf16.msra.mxu0 %v942
        %985 = vmatprep.subr.bf16.mxu0 0
        %986 = vmatpush1.bf16.msra.mxu0 0
        %987 = vmatprep.subr.bf16.mxu0 0
        %988 = vmatpush1.bf16.msra.mxu0 0
        %989 = vmatprep.subr.bf16.mxu0 0
        %990 = vmatpush1.bf16.msra.mxu0 0
        %991 = vmatprep.subr.bf16.mxu0 0
        %992 = vmatpush1.bf16.msra.mxu0 0
        %993 = vmatprep.subr.bf16.mxu0 0
        %994 = vmatpush1.bf16.msra.mxu0 0
        %995 = vmatprep.subr.bf16.mxu0 0
        %996 = vmatpush1.bf16.msra.mxu0 0
        %997 = vmatprep.subr.bf16.mxu0 0
        %998 = vmatpush1.bf16.msra.mxu0 0
        %999 = vmatprep.subr.bf16.mxu0 0
        %1000 = vmatpush1.bf16.msra.mxu0 0
        %1001 = vmatprep.mubr.bf16.mxu0 0
        %1002 = vmatmul.mubr.bf16.gmra.mrb[0].mxu0 %v793
        %v1003 = vpop.f32.mrb[0].mxu0
        %v1004 = vadd.f32 0.0, %v1003
        %v1005 = vpop.f32.mrb[0].mxu0
        %v1006 = vadd.f32 0.0, %v1005
        %v1007 = vpop.f32.mrb[0].mxu0
        %v1008 = vadd.f32 0.0, %v1007
        %v1009 = vpop.f32.mrb[0].mxu0
        %v1010 = vadd.f32 0.0, %v1009
        %1011 = vmatprep.mubr.bf16.mxu0 0
        %1012 = vmatmul.mubr.bf16.gmra.mrb[0].mxu0 %v794
        %v1013 = vpop.f32.mrb[0].mxu0
        %v1014 = vadd.f32 0.0, %v1013
        %v1015 = vpop.f32.mrb[0].mxu0
        %v1016 = vadd.f32 0.0, %v1015
        %v1017 = vpop.f32.mrb[0].mxu0
        %v1018 = vadd.f32 0.0, %v1017
        %v1019 = vpop.f32.mrb[0].mxu0
        %v1020 = vadd.f32 0.0, %v1019
        %1021 = vmatprep.mubr.bf16.mxu0 0
        %1022 = vmatmul.mubr.bf16.gmra.mrb[0].mxu0 %v795
        %v1023 = vpop.f32.mrb[0].mxu0
        %v1024 = vadd.f32 0.0, %v1023
        %v1025 = vpop.f32.mrb[0].mxu0
        %v1026 = vadd.f32 0.0, %v1025
        %v1027 = vpop.f32.mrb[0].mxu0
        %v1028 = vadd.f32 0.0, %v1027
        %v1029 = vpop.f32.mrb[0].mxu0
        %v1030 = vadd.f32 0.0, %v1029
        %1031 = vmatprep.mubr.bf16.mxu0 0
        %1032 = vmatmul.mubr.bf16.gmra.mrb[0].mxu0 %v796
        %v1033 = vpop.f32.mrb[0].mxu0
        %v1034 = vadd.f32 0.0, %v1033
        %v1035 = vpop.f32.mrb[0].mxu0
        %v1036 = vadd.f32 0.0, %v1035
        %v1037 = vpop.f32.mrb[0].mxu0
        %v1038 = vadd.f32 0.0, %v1037
        %v1039 = vpop.f32.mrb[0].mxu0
        %v1040 = vadd.f32 0.0, %v1039
        %1041 = vmatprep.mubr.bf16.mxu0 0
        %1042 = vmatmul.mubr.bf16.gmra.mrb[0].mxu0 %v797
        %v1043 = vpop.f32.mrb[0].mxu0
        %v1044 = vadd.f32 0.0, %v1043
        %v1045 = vpop.f32.mrb[0].mxu0
        %v1046 = vadd.f32 0.0, %v1045
        %v1047 = vpop.f32.mrb[0].mxu0
        %v1048 = vadd.f32 0.0, %v1047
        %v1049 = vpop.f32.mrb[0].mxu0
        %v1050 = vadd.f32 0.0, %v1049
        %1051 = vmatprep.mubr.bf16.mxu0 0
        %1052 = vmatmul.mubr.bf16.gmra.mrb[0].mxu0 %v798
        %v1053 = vpop.f32.mrb[0].mxu0
        %v1054 = vadd.f32 0.0, %v1053
        %v1055 = vpop.f32.mrb[0].mxu0
        %v1056 = vadd.f32 0.0, %v1055
        %v1057 = vpop.f32.mrb[0].mxu0
        %v1058 = vadd.f32 0.0, %v1057
        %v1059 = vpop.f32.mrb[0].mxu0
        %v1060 = vadd.f32 0.0, %v1059
        %1061 = vmatprep.mubr.bf16.mxu0 0
        %1062 = vmatmul.mubr.bf16.gmra.mrb[0].mxu0 %v799
        %v1063 = vpop.f32.mrb[0].mxu0
        %v1064 = vadd.f32 0.0, %v1063
        %v1065 = vpop.f32.mrb[0].mxu0
        %v1066 = vadd.f32 0.0, %v1065
        %v1067 = vpop.f32.mrb[0].mxu0
        %v1068 = vadd.f32 0.0, %v1067
        %v1069 = vpop.f32.mrb[0].mxu0
        %v1070 = vadd.f32 0.0, %v1069
        %1071 = vmatprep.mubr.bf16.mxu0 0
        %1072 = vmatmul.mubr.bf16.gmra.mrb[0].mxu0 %v800
        %v1073 = vpop.f32.mrb[0].mxu0
        %v1074 = vadd.f32 0.0, %v1073
        %v1075 = vpop.f32.mrb[0].mxu0
        %v1076 = vadd.f32 0.0, %v1075
        %v1077 = vpop.f32.mrb[0].mxu0
        %v1078 = vadd.f32 0.0, %v1077
        %v1079 = vpop.f32.mrb[0].mxu0
        %v1080 = vadd.f32 0.0, %v1079
        %1081 = vmatprep.mubr.bf16.mxu0 0
        %1082 = vmatmul.mubr.bf16.gmra.mrb[0].mxu0 %v801
        %v1083 = vpop.f32.mrb[0].mxu0
        %v1084 = vadd.f32 0.0, %v1083
        %v1085 = vpop.f32.mrb[0].mxu0
        %v1086 = vadd.f32 0.0, %v1085
        %v1087 = vpop.f32.mrb[0].mxu0
        %v1088 = vadd.f32 0.0, %v1087
        %v1089 = vpop.f32.mrb[0].mxu0
        %v1090 = vadd.f32 0.0, %v1089
        %1091 = vmatprep.mubr.bf16.mxu0 0
        %1092 = vmatmul.mubr.bf16.gmra.mrb[0].mxu0 %v802
        %v1093 = vpop.f32.mrb[0].mxu0
        %v1094 = vadd.f32 0.0, %v1093
        %v1095 = vpop.f32.mrb[0].mxu0
        %v1096 = vadd.f32 0.0, %v1095
        %v1097 = vpop.f32.mrb[0].mxu0
        %v1098 = vadd.f32 0.0, %v1097
        %v1099 = vpop.f32.mrb[0].mxu0
        %v1100 = vadd.f32 0.0, %v1099
        %1101 = vmatprep.mubr.bf16.mxu0 0
        %1102 = vmatmul.mubr.bf16.gmra.mrb[0].mxu0 %v803
        %v1103 = vpop.f32.mrb[0].mxu0
        %v1104 = vadd.f32 0.0, %v1103
        %v1105 = vpop.f32.mrb[0].mxu0
        %v1106 = vadd.f32 0.0, %v1105
        %v1107 = vpop.f32.mrb[0].mxu0
        %v1108 = vadd.f32 0.0, %v1107
        %v1109 = vpop.f32.mrb[0].mxu0
        %v1110 = vadd.f32 0.0, %v1109
        %1111 = vmatprep.mubr.bf16.mxu0 0
        %1112 = vmatmul.mubr.bf16.gmra.mrb[0].mxu0 %v804
        %v1113 = vpop.f32.mrb[0].mxu0
        %v1114 = vadd.f32 0.0, %v1113
        %v1115 = vpop.f32.mrb[0].mxu0
        %v1116 = vadd.f32 0.0, %v1115
        %v1117 = vpop.f32.mrb[0].mxu0
        %v1118 = vadd.f32 0.0, %v1117
        %v1119 = vpop.f32.mrb[0].mxu0
        %v1120 = vadd.f32 0.0, %v1119
        %1121 = vmatprep.mubr.bf16.mxu0 0
        %1122 = vmatmul.mubr.bf16.gmra.mrb[0].mxu0 %v805
        %v1123 = vpop.f32.mrb[0].mxu0
        %v1124 = vadd.f32 0.0, %v1123
        %v1125 = vpop.f32.mrb[0].mxu0
        %v1126 = vadd.f32 0.0, %v1125
        %v1127 = vpop.f32.mrb[0].mxu0
        %v1128 = vadd.f32 0.0, %v1127
        %v1129 = vpop.f32.mrb[0].mxu0
        %v1130 = vadd.f32 0.0, %v1129
        %1131 = vmatprep.mubr.bf16.mxu0 0
        %1132 = vmatmul.mubr.bf16.gmra.mrb[0].mxu0 %v806
        %v1133 = vpop.f32.mrb[0].mxu0
        %v1134 = vadd.f32 0.0, %v1133
        %v1135 = vpop.f32.mrb[0].mxu0
        %v1136 = vadd.f32 0.0, %v1135
        %v1137 = vpop.f32.mrb[0].mxu0
        %v1138 = vadd.f32 0.0, %v1137
        %v1139 = vpop.f32.mrb[0].mxu0
        %v1140 = vadd.f32 0.0, %v1139
        %1141 = vmatprep.mubr.bf16.mxu0 0
        %1142 = vmatmul.mubr.bf16.gmra.mrb[0].mxu0 %v807
        %v1143 = vpop.f32.mrb[0].mxu0
        %v1144 = vadd.f32 0.0, %v1143
        %v1145 = vpop.f32.mrb[0].mxu0
        %v1146 = vadd.f32 0.0, %v1145
        %v1147 = vpop.f32.mrb[0].mxu0
        %v1148 = vadd.f32 0.0, %v1147
        %v1149 = vpop.f32.mrb[0].mxu0
        %v1150 = vadd.f32 0.0, %v1149
        %1151 = vmatprep.mubr.bf16.mxu0 0
        %1152 = vmatmul.mubr.bf16.gmra.mrb[0].mxu0 %v808
        %v1153 = vpop.f32.mrb[0].mxu0
        %v1154 = vadd.f32 0.0, %v1153
        %v1155 = vpop.f32.mrb[0].mxu0
        %v1156 = vadd.f32 0.0, %v1155
        %v1157 = vpop.f32.mrb[0].mxu0
        %v1158 = vadd.f32 0.0, %v1157
        %v1159 = vpop.f32.mrb[0].mxu0
        %v1160 = vadd.f32 0.0, %v1159
        %1161 = vdwg.mxu0
        %1162 = vmatprep.subr.bf16.mxu0 0
        %1163 = vmatpush1.bf16.msra.mxu0 %v923
        %1164 = vmatprep.subr.bf16.mxu0 0
        %1165 = vmatpush1.bf16.msra.mxu0 %v926
        %1166 = vmatprep.subr.bf16.mxu0 0
        %1167 = vmatpush1.bf16.msra.mxu0 %v929
        %1168 = vmatprep.subr.bf16.mxu0 0
        %1169 = vmatpush1.bf16.msra.mxu0 %v932
        %1170 = vmatprep.subr.bf16.mxu0 0
        %1171 = vmatpush1.bf16.msra.mxu0 %v935
        %1172 = vmatprep.subr.bf16.mxu0 0
        %1173 = vmatpush1.bf16.msra.mxu0 %v938
        %1174 = vmatprep.subr.bf16.mxu0 0
        %1175 = vmatpush1.bf16.msra.mxu0 %v941
        %1176 = vmatprep.subr.bf16.mxu0 0
        %1177 = vmatpush1.bf16.msra.mxu0 %v944
        %1178 = vmatprep.subr.bf16.mxu0 0
        %1179 = vmatpush1.bf16.msra.mxu0 0
        %1180 = vmatprep.subr.bf16.mxu0 0
        %1181 = vmatpush1.bf16.msra.mxu0 0
        %1182 = vmatprep.subr.bf16.mxu0 0
        %1183 = vmatpush1.bf16.msra.mxu0 0
        %1184 = vmatprep.subr.bf16.mxu0 0
        %1185 = vmatpush1.bf16.msra.mxu0 0
        %1186 = vmatprep.subr.bf16.mxu0 0
        %1187 = vmatpush1.bf16.msra.mxu0 0
        %1188 = vmatprep.subr.bf16.mxu0 0
        %1189 = vmatpush1.bf16.msra.mxu0 0
        %1190 = vmatprep.subr.bf16.mxu0 0
        %1191 = vmatpush1.bf16.msra.mxu0 0
        %1192 = vmatprep.subr.bf16.mxu0 0
        %1193 = vmatpush1.bf16.msra.mxu0 0
        %1194 = vmatprep.mubr.bf16.mxu0 0
        %1195 = vmatmul.mubr.bf16.gmra.mrb[0].mxu0 %v793
        %v1196 = vpop.f32.mrb[0].mxu0
        %v1197 = vadd.f32 0.0, %v1196
        %v1198 = vpop.f32.mrb[0].mxu0
        %v1199 = vpop.f32.mrb[0].mxu0
        %v1200 = vadd.f32 0.0, %v1199
        %v1201 = vpop.f32.mrb[0].mxu0
        %1202 = vmatprep.mubr.bf16.mxu0 0
        %1203 = vmatmul.mubr.bf16.gmra.mrb[0].mxu0 %v794
        %v1204 = vpop.f32.mrb[0].mxu0
        %v1205 = vadd.f32 0.0, %v1204
        %v1206 = vpop.f32.mrb[0].mxu0
        %v1207 = vpop.f32.mrb[0].mxu0
        %v1208 = vadd.f32 0.0, %v1207
        %v1209 = vpop.f32.mrb[0].mxu0
        %1210 = vmatprep.mubr.bf16.mxu0 0
        %1211 = vmatmul.mubr.bf16.gmra.mrb[0].mxu0 %v795
        %v1212 = vpop.f32.mrb[0].mxu0
        %v1213 = vadd.f32 0.0, %v1212
        %v1214 = vpop.f32.mrb[0].mxu0
        %v1215 = vpop.f32.mrb[0].mxu0
        %v1216 = vadd.f32 0.0, %v1215
        %v1217 = vpop.f32.mrb[0].mxu0
        %1218 = vmatprep.mubr.bf16.mxu0 0
        %1219 = vmatmul.mubr.bf16.gmra.mrb[0].mxu0 %v796
        %v1220 = vpop.f32.mrb[0].mxu0
        %v1221 = vadd.f32 0.0, %v1220
        %v1222 = vpop.f32.mrb[0].mxu0
        %v1223 = vpop.f32.mrb[0].mxu0
        %v1224 = vadd.f32 0.0, %v1223
        %v1225 = vpop.f32.mrb[0].mxu0
        %1226 = vmatprep.mubr.bf16.mxu0 0
        %1227 = vmatmul.mubr.bf16.gmra.mrb[0].mxu0 %v797
        %v1228 = vpop.f32.mrb[0].mxu0
        %v1229 = vadd.f32 0.0, %v1228
        %v1230 = vpop.f32.mrb[0].mxu0
        %v1231 = vpop.f32.mrb[0].mxu0
        %v1232 = vadd.f32 0.0, %v1231
        %v1233 = vpop.f32.mrb[0].mxu0
        %1234 = vmatprep.mubr.bf16.mxu0 0
        %1235 = vmatmul.mubr.bf16.gmra.mrb[0].mxu0 %v798
        %v1236 = vpop.f32.mrb[0].mxu0
        %v1237 = vadd.f32 0.0, %v1236
        %v1238 = vpop.f32.mrb[0].mxu0
        %v1239 = vpop.f32.mrb[0].mxu0
        %v1240 = vadd.f32 0.0, %v1239
        %v1241 = vpop.f32.mrb[0].mxu0
        %1242 = vmatprep.mubr.bf16.mxu0 0
        %1243 = vmatmul.mubr.bf16.gmra.mrb[0].mxu0 %v799
        %v1244 = vpop.f32.mrb[0].mxu0
        %v1245 = vadd.f32 0.0, %v1244
        %v1246 = vpop.f32.mrb[0].mxu0
        %v1247 = vpop.f32.mrb[0].mxu0
        %v1248 = vadd.f32 0.0, %v1247
        %v1249 = vpop.f32.mrb[0].mxu0
        %1250 = vmatprep.mubr.bf16.mxu0 0
        %1251 = vmatmul.mubr.bf16.gmra.mrb[0].mxu0 %v800
        %v1252 = vpop.f32.mrb[0].mxu0
        %v1253 = vadd.f32 0.0, %v1252
        %v1254 = vpop.f32.mrb[0].mxu0
        %v1255 = vpop.f32.mrb[0].mxu0
        %v1256 = vadd.f32 0.0, %v1255
        %v1257 = vpop.f32.mrb[0].mxu0
        %1258 = vmatprep.mubr.bf16.mxu0 0
        %1259 = vmatmul.mubr.bf16.gmra.mrb[0].mxu0 %v801
        %v1260 = vpop.f32.mrb[0].mxu0
        %v1261 = vadd.f32 0.0, %v1260
        %v1262 = vpop.f32.mrb[0].mxu0
        %v1263 = vpop.f32.mrb[0].mxu0
        %v1264 = vadd.f32 0.0, %v1263
        %v1265 = vpop.f32.mrb[0].mxu0
        %1266 = vmatprep.mubr.bf16.mxu0 0
        %1267 = vmatmul.mubr.bf16.gmra.mrb[0].mxu0 %v802
        %v1268 = vpop.f32.mrb[0].mxu0
        %v1269 = vadd.f32 0.0, %v1268
        %v1270 = vpop.f32.mrb[0].mxu0
        %v1271 = vpop.f32.mrb[0].mxu0
        %v1272 = vadd.f32 0.0, %v1271
        %v1273 = vpop.f32.mrb[0].mxu0
        %1274 = vmatprep.mubr.bf16.mxu0 0
        %1275 = vmatmul.mubr.bf16.gmra.mrb[0].mxu0 %v803
        %v1276 = vpop.f32.mrb[0].mxu0
        %v1277 = vadd.f32 0.0, %v1276
        %v1278 = vpop.f32.mrb[0].mxu0
        %v1279 = vpop.f32.mrb[0].mxu0
        %v1280 = vadd.f32 0.0, %v1279
        %v1281 = vpop.f32.mrb[0].mxu0
        %1282 = vmatprep.mubr.bf16.mxu0 0
        %1283 = vmatmul.mubr.bf16.gmra.mrb[0].mxu0 %v804
        %v1284 = vpop.f32.mrb[0].mxu0
        %v1285 = vadd.f32 0.0, %v1284
        %v1286 = vpop.f32.mrb[0].mxu0
        %v1287 = vpop.f32.mrb[0].mxu0
        %v1288 = vadd.f32 0.0, %v1287
        %v1289 = vpop.f32.mrb[0].mxu0
        %1290 = vmatprep.mubr.bf16.mxu0 0
        %1291 = vmatmul.mubr.bf16.gmra.mrb[0].mxu0 %v805
        %v1292 = vpop.f32.mrb[0].mxu0
        %v1293 = vadd.f32 0.0, %v1292
        %v1294 = vpop.f32.mrb[0].mxu0
        %v1295 = vpop.f32.mrb[0].mxu0
        %v1296 = vadd.f32 0.0, %v1295
        %v1297 = vpop.f32.mrb[0].mxu0
        %1298 = vmatprep.mubr.bf16.mxu0 0
        %1299 = vmatmul.mubr.bf16.gmra.mrb[0].mxu0 %v806
        %v1300 = vpop.f32.mrb[0].mxu0
        %v1301 = vadd.f32 0.0, %v1300
        %v1302 = vpop.f32.mrb[0].mxu0
        %v1303 = vpop.f32.mrb[0].mxu0
        %v1304 = vadd.f32 0.0, %v1303
        %v1305 = vpop.f32.mrb[0].mxu0
        %1306 = vmatprep.mubr.bf16.mxu0 0
        %1307 = vmatmul.mubr.bf16.gmra.mrb[0].mxu0 %v807
        %v1308 = vpop.f32.mrb[0].mxu0
        %v1309 = vadd.f32 0.0, %v1308
        %v1310 = vpop.f32.mrb[0].mxu0
        %v1311 = vpop.f32.mrb[0].mxu0
        %v1312 = vadd.f32 0.0, %v1311
        %v1313 = vpop.f32.mrb[0].mxu0
        %1314 = vmatprep.mubr.bf16.mxu0 0
        %1315 = vmatmul.mubr.bf16.gmra.mrb[0].mxu0 %v808
        %v1316 = vpop.f32.mrb[0].mxu0
        %v1317 = vadd.f32 0.0, %v1316
        %v1318 = vpop.f32.mrb[0].mxu0
        %v1319 = vpop.f32.mrb[0].mxu0
        %v1320 = vadd.f32 0.0, %v1319
        %v1321 = vpop.f32.mrb[0].mxu0
        %1322 = vdwg.mxu0
        %v1323 = vmul.f32 %v1004, 0.17677669
        %v1324 = vmul.f32 %v1008, 0.17677669
        %v1325 = vmul.f32 %v1014, 0.17677669
        %v1326 = vmul.f32 %v1018, 0.17677669
        %v1327 = vmul.f32 %v1024, 0.17677669
        %v1328 = vmul.f32 %v1028, 0.17677669
        %v1329 = vmul.f32 %v1034, 0.17677669
        %v1330 = vmul.f32 %v1038, 0.17677669
        %v1331 = vmul.f32 %v1044, 0.17677669
        %v1332 = vmul.f32 %v1048, 0.17677669
        %v1333 = vmul.f32 %v1054, 0.17677669
        %v1334 = vmul.f32 %v1058, 0.17677669
        %v1335 = vmul.f32 %v1064, 0.17677669
        %v1336 = vmul.f32 %v1068, 0.17677669
        %v1337 = vmul.f32 %v1074, 0.17677669
        %v1338 = vmul.f32 %v1078, 0.17677669
        %v1339 = vmul.f32 %v1084, 0.17677669
        %v1340 = vmul.f32 %v1088, 0.17677669
        %v1341 = vmul.f32 %v1094, 0.17677669
        %v1342 = vmul.f32 %v1098, 0.17677669
        %v1343 = vmul.f32 %v1104, 0.17677669
        %v1344 = vmul.f32 %v1108, 0.17677669
        %v1345 = vmul.f32 %v1114, 0.17677669
        %v1346 = vmul.f32 %v1118, 0.17677669
        %v1347 = vmul.f32 %v1124, 0.17677669
        %v1348 = vmul.f32 %v1128, 0.17677669
        %v1349 = vmul.f32 %v1134, 0.17677669
        %v1350 = vmul.f32 %v1138, 0.17677669
        %v1351 = vmul.f32 %v1144, 0.17677669
        %v1352 = vmul.f32 %v1148, 0.17677669
        %v1353 = vmul.f32 %v1154, 0.17677669
        %v1354 = vmul.f32 %v1158, 0.17677669
        %v1355 = vpack.c.bf16 %v1324, %v1323
        %v1356 = vpack.c.bf16 %v1326, %v1325
        %v1357 = vpack.c.bf16 %v1328, %v1327
        %v1358 = vpack.c.bf16 %v1330, %v1329
        %v1359 = vpack.c.bf16 %v1332, %v1331
        %v1360 = vpack.c.bf16 %v1334, %v1333
        %v1361 = vpack.c.bf16 %v1336, %v1335
        %v1362 = vpack.c.bf16 %v1338, %v1337
        %v1363 = vpack.c.bf16 %v1340, %v1339
        %v1364 = vpack.c.bf16 %v1342, %v1341
        %v1365 = vpack.c.bf16 %v1344, %v1343
        %v1366 = vpack.c.bf16 %v1346, %v1345
        %v1367 = vpack.c.bf16 %v1348, %v1347
        %v1368 = vpack.c.bf16 %v1350, %v1349
        %v1369 = vpack.c.bf16 %v1352, %v1351
        %v1370 = vpack.c.bf16 %v1354, %v1353
        %v1387 = vunpack.c.l.b16 %v1355
        %v1388 = vunpack.c.h.b16 %v1355
        %v1389 = vunpack.c.l.b16 %v1356
        %v1390 = vunpack.c.h.b16 %v1356
        %v1391 = vunpack.c.l.b16 %v1357
        %v1392 = vunpack.c.h.b16 %v1357
        %v1393 = vunpack.c.l.b16 %v1358
        %v1394 = vunpack.c.h.b16 %v1358
        %v1395 = vunpack.c.l.b16 %v1359
        %v1396 = vunpack.c.h.b16 %v1359
        %v1397 = vunpack.c.l.b16 %v1360
        %v1398 = vunpack.c.h.b16 %v1360
        %v1399 = vunpack.c.l.b16 %v1361
        %v1400 = vunpack.c.h.b16 %v1361
        %v1401 = vunpack.c.l.b16 %v1362
        %v1402 = vunpack.c.h.b16 %v1362
        %v1403 = vunpack.c.l.b16 %v1363
        %v1404 = vunpack.c.h.b16 %v1363
        %v1405 = vunpack.c.l.b16 %v1364
        %v1406 = vunpack.c.h.b16 %v1364
        %v1407 = vunpack.c.l.b16 %v1365
        %v1408 = vunpack.c.h.b16 %v1365
        %v1409 = vunpack.c.l.b16 %v1366
        %v1410 = vunpack.c.h.b16 %v1366
        %v1411 = vunpack.c.l.b16 %v1367
        %v1412 = vunpack.c.h.b16 %v1367
        %v1413 = vunpack.c.l.b16 %v1368
        %v1414 = vunpack.c.h.b16 %v1368
        %v1415 = vunpack.c.l.b16 %v1369
        %v1416 = vunpack.c.h.b16 %v1369
        %v1417 = vunpack.c.l.b16 %v1370
        %v1418 = vunpack.c.h.b16 %v1370
        %v1419 = vpack.c.b16 %v1387, %v1387
        %v1420 = vpack.c.b16 %v1388, %v1388
        %v1421 = vpack.c.b16 %v1389, %v1389
        %v1422 = vpack.c.b16 %v1390, %v1390
        %v1423 = vpack.c.b16 %v1391, %v1391
        %v1424 = vpack.c.b16 %v1392, %v1392
        %v1425 = vpack.c.b16 %v1393, %v1393
        %v1426 = vpack.c.b16 %v1394, %v1394
        %v1427 = vpack.c.b16 %v1395, %v1395
        %v1428 = vpack.c.b16 %v1396, %v1396
        %v1429 = vpack.c.b16 %v1397, %v1397
        %v1430 = vpack.c.b16 %v1398, %v1398
        %v1431 = vpack.c.b16 %v1399, %v1399
        %v1432 = vpack.c.b16 %v1400, %v1400
        %v1433 = vpack.c.b16 %v1401, %v1401
        %v1434 = vpack.c.b16 %v1402, %v1402
        %v1435 = vpack.c.b16 %v1403, %v1403
        %v1436 = vpack.c.b16 %v1404, %v1404
        %v1437 = vpack.c.b16 %v1405, %v1405
        %v1438 = vpack.c.b16 %v1406, %v1406
        %v1439 = vpack.c.b16 %v1407, %v1407
        %v1440 = vpack.c.b16 %v1408, %v1408
        %v1441 = vpack.c.b16 %v1409, %v1409
        %v1442 = vpack.c.b16 %v1410, %v1410
        %v1443 = vpack.c.b16 %v1411, %v1411
        %v1444 = vpack.c.b16 %v1412, %v1412
        %v1445 = vpack.c.b16 %v1413, %v1413
        %v1446 = vpack.c.b16 %v1414, %v1414
        %v1447 = vpack.c.b16 %v1415, %v1415
        %v1448 = vpack.c.b16 %v1416, %v1416
        %v1449 = vpack.c.b16 %v1417, %v1417
        %v1450 = vpack.c.b16 %v1418, %v1418
        %1483 = vst [vmem:[%s310] sm:$0xf] %v1419
        %1484 = vst [vmem:[%s310 + $0x4] sm:$0xf] %v1420
        %1485 = vst [vmem:[%s310 + $0x8] sm:$0xf] %v1421
        %1486 = vst [vmem:[%s310 + $0xc] sm:$0xf] %v1422
        %1487 = vst [vmem:[%s310 + $0x10] sm:$0xf] %v1423
        %1488 = vst [vmem:[%s310 + $0x14] sm:$0xf] %v1424
        %1489 = vst [vmem:[%s310 + $0x18] sm:$0xf] %v1425
        %1490 = vst [vmem:[%s310 + $0x1c] sm:$0xf] %v1426
        %1491 = vst [vmem:[%s310 + $0x20] sm:$0xf] %v1427
        %1492 = vst [vmem:[%s310 + $0x24] sm:$0xf] %v1428
        %1493 = vst [vmem:[%s310 + $0x28] sm:$0xf] %v1429
        %1494 = vst [vmem:[%s310 + $0x2c] sm:$0xf] %v1430
        %1495 = vst [vmem:[%s310 + $0x30] sm:$0xf] %v1431
        %1496 = vst [vmem:[%s310 + $0x34] sm:$0xf] %v1432
        %1497 = vst [vmem:[%s310 + $0x38] sm:$0xf] %v1433
        %1498 = vst [vmem:[%s310 + $0x3c] sm:$0xf] %v1434
        %1499 = vst [vmem:[%s310 + $0x40] sm:$0xf] %v1435
        %1500 = vst [vmem:[%s310 + $0x44] sm:$0xf] %v1436
        %1501 = vst [vmem:[%s310 + $0x48] sm:$0xf] %v1437
        %1502 = vst [vmem:[%s310 + $0x4c] sm:$0xf] %v1438
        %1503 = vst [vmem:[%s310 + $0x50] sm:$0xf] %v1439
        %1504 = vst [vmem:[%s310 + $0x54] sm:$0xf] %v1440
        %1505 = vst [vmem:[%s310 + $0x58] sm:$0xf] %v1441
        %1506 = vst [vmem:[%s310 + $0x5c] sm:$0xf] %v1442
        %1507 = vst [vmem:[%s310 + $0x60] sm:$0xf] %v1443
        %1508 = vst [vmem:[%s310 + $0x64] sm:$0xf] %v1444
        %1509 = vst [vmem:[%s310 + $0x68] sm:$0xf] %v1445
        %1510 = vst [vmem:[%s310 + $0x6c] sm:$0xf] %v1446
        %1511 = vst [vmem:[%s310 + $0x70] sm:$0xf] %v1447
        %1512 = vst [vmem:[%s310 + $0x74] sm:$0xf] %v1448
        %1513 = vst [vmem:[%s310 + $0x78] sm:$0xf] %v1449
        %1514 = vst [vmem:[%s310 + $0x7c] sm:$0xf] %v1450
        %v1515 = vpack.c.bf16 %v1010, %v1006
        %v1516 = vpack.c.bf16 %v1020, %v1016
        %v1517 = vpack.c.bf16 %v1030, %v1026
        %v1518 = vpack.c.bf16 %v1040, %v1036
        %v1519 = vpack.c.bf16 %v1050, %v1046
        %v1520 = vpack.c.bf16 %v1060, %v1056
        %v1521 = vpack.c.bf16 %v1070, %v1066
        %v1522 = vpack.c.bf16 %v1080, %v1076
        %v1523 = vpack.c.bf16 %v1090, %v1086
        %v1524 = vpack.c.bf16 %v1100, %v1096
        %v1525 = vpack.c.bf16 %v1110, %v1106
        %v1526 = vpack.c.bf16 %v1120, %v1116
        %v1527 = vpack.c.bf16 %v1130, %v1126
        %v1528 = vpack.c.bf16 %v1140, %v1136
        %v1529 = vpack.c.bf16 %v1150, %v1146
        %v1530 = vpack.c.bf16 %v1160, %v1156
        %v1547 = vunpack.c.l.b16 %v1515
        %v1548 = vunpack.c.h.b16 %v1515
        %v1549 = vunpack.c.l.b16 %v1516
        %v1550 = vunpack.c.h.b16 %v1516
        %v1551 = vunpack.c.l.b16 %v1517
        %v1552 = vunpack.c.h.b16 %v1517
        %v1553 = vunpack.c.l.b16 %v1518
        %v1554 = vunpack.c.h.b16 %v1518
        %v1555 = vunpack.c.l.b16 %v1519
        %v1556 = vunpack.c.h.b16 %v1519
        %v1557 = vunpack.c.l.b16 %v1520
        %v1558 = vunpack.c.h.b16 %v1520
        %v1559 = vunpack.c.l.b16 %v1521
        %v1560 = vunpack.c.h.b16 %v1521
        %v1561 = vunpack.c.l.b16 %v1522
        %v1562 = vunpack.c.h.b16 %v1522
        %v1563 = vunpack.c.l.b16 %v1523
        %v1564 = vunpack.c.h.b16 %v1523
        %v1565 = vunpack.c.l.b16 %v1524
        %v1566 = vunpack.c.h.b16 %v1524
        %v1567 = vunpack.c.l.b16 %v1525
        %v1568 = vunpack.c.h.b16 %v1525
        %v1569 = vunpack.c.l.b16 %v1526
        %v1570 = vunpack.c.h.b16 %v1526
        %v1571 = vunpack.c.l.b16 %v1527
        %v1572 = vunpack.c.h.b16 %v1527
        %v1573 = vunpack.c.l.b16 %v1528
        %v1574 = vunpack.c.h.b16 %v1528
        %v1575 = vunpack.c.l.b16 %v1529
        %v1576 = vunpack.c.h.b16 %v1529
        %v1577 = vunpack.c.l.b16 %v1530
        %v1578 = vunpack.c.h.b16 %v1530
        %v1579 = vpack.c.b16 %v1547, %v1547
        %v1580 = vpack.c.b16 %v1548, %v1548
        %v1581 = vpack.c.b16 %v1549, %v1549
        %v1582 = vpack.c.b16 %v1550, %v1550
        %v1583 = vpack.c.b16 %v1551, %v1551
        %v1584 = vpack.c.b16 %v1552, %v1552
        %v1585 = vpack.c.b16 %v1553, %v1553
        %v1586 = vpack.c.b16 %v1554, %v1554
        %v1587 = vpack.c.b16 %v1555, %v1555
        %v1588 = vpack.c.b16 %v1556, %v1556
        %v1589 = vpack.c.b16 %v1557, %v1557
        %v1590 = vpack.c.b16 %v1558, %v1558
        %v1591 = vpack.c.b16 %v1559, %v1559
        %v1592 = vpack.c.b16 %v1560, %v1560
        %v1593 = vpack.c.b16 %v1561, %v1561
        %v1594 = vpack.c.b16 %v1562, %v1562
        %v1595 = vpack.c.b16 %v1563, %v1563
        %v1596 = vpack.c.b16 %v1564, %v1564
        %v1597 = vpack.c.b16 %v1565, %v1565
        %v1598 = vpack.c.b16 %v1566, %v1566
        %v1599 = vpack.c.b16 %v1567, %v1567
        %v1600 = vpack.c.b16 %v1568, %v1568
        %v1601 = vpack.c.b16 %v1569, %v1569
        %v1602 = vpack.c.b16 %v1570, %v1570
        %v1603 = vpack.c.b16 %v1571, %v1571
        %v1604 = vpack.c.b16 %v1572, %v1572
        %v1605 = vpack.c.b16 %v1573, %v1573
        %v1606 = vpack.c.b16 %v1574, %v1574
        %v1607 = vpack.c.b16 %v1575, %v1575
        %v1608 = vpack.c.b16 %v1576, %v1576
        %v1609 = vpack.c.b16 %v1577, %v1577
        %v1610 = vpack.c.b16 %v1578, %v1578
        %1643 = vst [vmem:[%s317] sm:$0xf] %v1579
        %1644 = vst [vmem:[%s317 + $0x4] sm:$0xf] %v1580
        %1645 = vst [vmem:[%s317 + $0x8] sm:$0xf] %v1581
        %1646 = vst [vmem:[%s317 + $0xc] sm:$0xf] %v1582
        %1647 = vst [vmem:[%s317 + $0x10] sm:$0xf] %v1583
        %1648 = vst [vmem:[%s317 + $0x14] sm:$0xf] %v1584
        %1649 = vst [vmem:[%s317 + $0x18] sm:$0xf] %v1585
        %1650 = vst [vmem:[%s317 + $0x1c] sm:$0xf] %v1586
        %1651 = vst [vmem:[%s317 + $0x20] sm:$0xf] %v1587
        %1652 = vst [vmem:[%s317 + $0x24] sm:$0xf] %v1588
        %1653 = vst [vmem:[%s317 + $0x28] sm:$0xf] %v1589
        %1654 = vst [vmem:[%s317 + $0x2c] sm:$0xf] %v1590
        %1655 = vst [vmem:[%s317 + $0x30] sm:$0xf] %v1591
        %1656 = vst [vmem:[%s317 + $0x34] sm:$0xf] %v1592
        %1657 = vst [vmem:[%s317 + $0x38] sm:$0xf] %v1593
        %1658 = vst [vmem:[%s317 + $0x3c] sm:$0xf] %v1594
        %1659 = vst [vmem:[%s317 + $0x40] sm:$0xf] %v1595
        %1660 = vst [vmem:[%s317 + $0x44] sm:$0xf] %v1596
        %1661 = vst [vmem:[%s317 + $0x48] sm:$0xf] %v1597
        %1662 = vst [vmem:[%s317 + $0x4c] sm:$0xf] %v1598
        %1663 = vst [vmem:[%s317 + $0x50] sm:$0xf] %v1599
        %1664 = vst [vmem:[%s317 + $0x54] sm:$0xf] %v1600
        %1665 = vst [vmem:[%s317 + $0x58] sm:$0xf] %v1601
        %1666 = vst [vmem:[%s317 + $0x5c] sm:$0xf] %v1602
        %1667 = vst [vmem:[%s317 + $0x60] sm:$0xf] %v1603
        %1668 = vst [vmem:[%s317 + $0x64] sm:$0xf] %v1604
        %1669 = vst [vmem:[%s317 + $0x68] sm:$0xf] %v1605
        %1670 = vst [vmem:[%s317 + $0x6c] sm:$0xf] %v1606
        %1671 = vst [vmem:[%s317 + $0x70] sm:$0xf] %v1607
        %1672 = vst [vmem:[%s317 + $0x74] sm:$0xf] %v1608
        %1673 = vst [vmem:[%s317 + $0x78] sm:$0xf] %v1609
        %1674 = vst [vmem:[%s317 + $0x7c] sm:$0xf] %v1610
        %v1675 = vpack.c.bf16 %v1200, %v1197
        %v1676 = vpack.c.bf16 %v1208, %v1205
        %v1677 = vpack.c.bf16 %v1216, %v1213
        %v1678 = vpack.c.bf16 %v1224, %v1221
        %v1679 = vpack.c.bf16 %v1232, %v1229
        %v1680 = vpack.c.bf16 %v1240, %v1237
        %v1681 = vpack.c.bf16 %v1248, %v1245
        %v1682 = vpack.c.bf16 %v1256, %v1253
        %v1683 = vpack.c.bf16 %v1264, %v1261
        %v1684 = vpack.c.bf16 %v1272, %v1269
        %v1685 = vpack.c.bf16 %v1280, %v1277
        %v1686 = vpack.c.bf16 %v1288, %v1285
        %v1687 = vpack.c.bf16 %v1296, %v1293
        %v1688 = vpack.c.bf16 %v1304, %v1301
        %v1689 = vpack.c.bf16 %v1312, %v1309
        %v1690 = vpack.c.bf16 %v1320, %v1317
        %v1707 = vunpack.c.l.b16 %v1675
        %v1708 = vunpack.c.h.b16 %v1675
        %v1709 = vunpack.c.l.b16 %v1676
        %v1710 = vunpack.c.h.b16 %v1676
        %v1711 = vunpack.c.l.b16 %v1677
        %v1712 = vunpack.c.h.b16 %v1677
        %v1713 = vunpack.c.l.b16 %v1678
        %v1714 = vunpack.c.h.b16 %v1678
        %v1715 = vunpack.c.l.b16 %v1679
        %v1716 = vunpack.c.h.b16 %v1679
        %v1717 = vunpack.c.l.b16 %v1680
        %v1718 = vunpack.c.h.b16 %v1680
        %v1719 = vunpack.c.l.b16 %v1681
        %v1720 = vunpack.c.h.b16 %v1681
        %v1721 = vunpack.c.l.b16 %v1682
        %v1722 = vunpack.c.h.b16 %v1682
        %v1723 = vunpack.c.l.b16 %v1683
        %v1724 = vunpack.c.h.b16 %v1683
        %v1725 = vunpack.c.l.b16 %v1684
        %v1726 = vunpack.c.h.b16 %v1684
        %v1727 = vunpack.c.l.b16 %v1685
        %v1728 = vunpack.c.h.b16 %v1685
        %v1729 = vunpack.c.l.b16 %v1686
        %v1730 = vunpack.c.h.b16 %v1686
        %v1731 = vunpack.c.l.b16 %v1687
        %v1732 = vunpack.c.h.b16 %v1687
        %v1733 = vunpack.c.l.b16 %v1688
        %v1734 = vunpack.c.h.b16 %v1688
        %v1735 = vunpack.c.l.b16 %v1689
        %v1736 = vunpack.c.h.b16 %v1689
        %v1737 = vunpack.c.l.b16 %v1690
        %v1738 = vunpack.c.h.b16 %v1690
        %v1739 = vpack.c.b16 %v1707, %v1707
        %v1740 = vpack.c.b16 %v1708, %v1708
        %v1741 = vpack.c.b16 %v1709, %v1709
        %v1742 = vpack.c.b16 %v1710, %v1710
        %v1743 = vpack.c.b16 %v1711, %v1711
        %v1744 = vpack.c.b16 %v1712, %v1712
        %v1745 = vpack.c.b16 %v1713, %v1713
        %v1746 = vpack.c.b16 %v1714, %v1714
        %v1747 = vpack.c.b16 %v1715, %v1715
        %v1748 = vpack.c.b16 %v1716, %v1716
        %v1749 = vpack.c.b16 %v1717, %v1717
        %v1750 = vpack.c.b16 %v1718, %v1718
        %v1751 = vpack.c.b16 %v1719, %v1719
        %v1752 = vpack.c.b16 %v1720, %v1720
        %v1753 = vpack.c.b16 %v1721, %v1721
        %v1754 = vpack.c.b16 %v1722, %v1722
        %v1755 = vpack.c.b16 %v1723, %v1723
        %v1756 = vpack.c.b16 %v1724, %v1724
        %v1757 = vpack.c.b16 %v1725, %v1725
        %v1758 = vpack.c.b16 %v1726, %v1726
        %v1759 = vpack.c.b16 %v1727, %v1727
        %v1760 = vpack.c.b16 %v1728, %v1728
        %v1761 = vpack.c.b16 %v1729, %v1729
        %v1762 = vpack.c.b16 %v1730, %v1730
        %v1763 = vpack.c.b16 %v1731, %v1731
        %v1764 = vpack.c.b16 %v1732, %v1732
        %v1765 = vpack.c.b16 %v1733, %v1733
        %v1766 = vpack.c.b16 %v1734, %v1734
        %v1767 = vpack.c.b16 %v1735, %v1735
        %v1768 = vpack.c.b16 %v1736, %v1736
        %v1769 = vpack.c.b16 %v1737, %v1737
        %v1770 = vpack.c.b16 %v1738, %v1738
        %1803 = vst [vmem:[%s324] sm:$0xf] %v1739
        %1804 = vst [vmem:[%s324 + $0x4] sm:$0xf] %v1740
        %1805 = vst [vmem:[%s324 + $0x8] sm:$0xf] %v1741
        %1806 = vst [vmem:[%s324 + $0xc] sm:$0xf] %v1742
        %1807 = vst [vmem:[%s324 + $0x10] sm:$0xf] %v1743
        %1808 = vst [vmem:[%s324 + $0x14] sm:$0xf] %v1744
        %1809 = vst [vmem:[%s324 + $0x18] sm:$0xf] %v1745
        %1810 = vst [vmem:[%s324 + $0x1c] sm:$0xf] %v1746
        %1811 = vst [vmem:[%s324 + $0x20] sm:$0xf] %v1747
        %1812 = vst [vmem:[%s324 + $0x24] sm:$0xf] %v1748
        %1813 = vst [vmem:[%s324 + $0x28] sm:$0xf] %v1749
        %1814 = vst [vmem:[%s324 + $0x2c] sm:$0xf] %v1750
        %1815 = vst [vmem:[%s324 + $0x30] sm:$0xf] %v1751
        %1816 = vst [vmem:[%s324 + $0x34] sm:$0xf] %v1752
        %1817 = vst [vmem:[%s324 + $0x38] sm:$0xf] %v1753
        %1818 = vst [vmem:[%s324 + $0x3c] sm:$0xf] %v1754
        %1819 = vst [vmem:[%s324 + $0x40] sm:$0xf] %v1755
        %1820 = vst [vmem:[%s324 + $0x44] sm:$0xf] %v1756
        %1821 = vst [vmem:[%s324 + $0x48] sm:$0xf] %v1757
        %1822 = vst [vmem:[%s324 + $0x4c] sm:$0xf] %v1758
        %1823 = vst [vmem:[%s324 + $0x50] sm:$0xf] %v1759
        %1824 = vst [vmem:[%s324 + $0x54] sm:$0xf] %v1760
        %1825 = vst [vmem:[%s324 + $0x58] sm:$0xf] %v1761
        %1826 = vst [vmem:[%s324 + $0x5c] sm:$0xf] %v1762
        %1827 = vst [vmem:[%s324 + $0x60] sm:$0xf] %v1763
        %1828 = vst [vmem:[%s324 + $0x64] sm:$0xf] %v1764
        %1829 = vst [vmem:[%s324 + $0x68] sm:$0xf] %v1765
        %1830 = vst [vmem:[%s324 + $0x6c] sm:$0xf] %v1766
        %1831 = vst [vmem:[%s324 + $0x70] sm:$0xf] %v1767
        %1832 = vst [vmem:[%s324 + $0x74] sm:$0xf] %v1768
        %1833 = vst [vmem:[%s324 + $0x78] sm:$0xf] %v1769
        %1834 = vst [vmem:[%s324 + $0x7c] sm:$0xf] %v1770
        %s1835 = sand.u32 %s141, 1
        %s1836 = scalar_lea.sflag [#allocation4], %s1835
        %s1837 = sand.u32 %s141, 1
        %s1838 = smul.addr %s1837, 128
        %s1839 = scalar_lea.vmem [#allocation7], %s1838
        %s1840 = sand.u32 %s28, 1
        %s1841 = scalar_lea.sflag [#allocation9], %s1840
        %s1842 = sand.u32 %s169, 1
        %s1843 = smul.addr %s1842, 128
        %s1844 = scalar_lea.vmem [#allocation8], %s1843
        %s1845 = sand.u32 %s28, 1
        %s1846 = scalar_lea.sflag [#allocation9], %s1845
        %s1847 = sand.u32 %s197, 1
        %s1848 = smul.addr %s1847, 128
        %s1849 = scalar_lea.vmem [#allocation10], %s1848
        // Predicated region
        $region45: #{tpu_custom_call.1} parent=35 // pred_check
          %p1850 = pneg %p151
        $region46: #{tpu_custom_call.1} parent=35 // pred_check_branch
          %1852 = sbr.rel (%p1850) target = $region48
        $region47: #{tpu_custom_call.1} parent=35 // pred_region
          %s1853 = smul.u32 32, %s33
          %s1855 = ssub.s32 2048, 2048
          %1856 = vsyncadd %s1836, %s1855
          %s1857 = smul.addr %s32, 32
          %s1858 = sadd.s32 %s1853, %s1857
          %s1859 = smul.addr %s1858, 64
          %s1860 = scalar_lea.hbm %s4, %s1859
          %s1861 = sshll.u32 %s1839, 4
          %s1862 = int_to_ptr.vmem [resolvable:$true] %s1861
          %1867 = dma.vmem_to_hbm [thread:$0]  %s1862, 2048, %s1860, %s1836, 64, 64, 4
        $region48: #{tpu_custom_call.1} parent=35 // pred_fallthru
          _
        // Predicated region
        $region49: #{tpu_custom_call.1} parent=35 // pred_check
          %p1868 = pneg %p179
        $region50: #{tpu_custom_call.1} parent=35 // pred_check_branch
          %1870 = sbr.rel (%p1868) target = $region52
        $region51: #{tpu_custom_call.1} parent=35 // pred_region
          %s1871 = smul.u32 32, %s33
          %s1873 = ssub.s32 2048, 2048
          %1874 = vsyncadd %s1841, %s1873
          %s1875 = smul.addr %s32, 32
          %s1876 = sadd.s32 %s1871, %s1875
          %s1877 = smul.addr %s1876, 64
          %s1878 = scalar_lea.hbm %s5, %s1877
          %s1879 = sshll.u32 %s1844, 4
          %s1880 = int_to_ptr.vmem [resolvable:$true] %s1879
          %1885 = dma.vmem_to_hbm [thread:$0]  %s1880, 2048, %s1878, %s1841, 64, 64, 4
        $region52: #{tpu_custom_call.1} parent=35 // pred_fallthru
          _
        // Predicated region
        $region53: #{tpu_custom_call.1} parent=35 // pred_check
          %p1886 = pneg %p207
        $region54: #{tpu_custom_call.1} parent=35 // pred_check_branch
          %1888 = sbr.rel (%p1886) target = $region56
        $region55: #{tpu_custom_call.1} parent=35 // pred_region
          %s1889 = smul.u32 32, %s33
          %s1891 = ssub.s32 2048, 2048
          %1892 = vsyncadd %s1846, %s1891
          %s1893 = smul.addr %s32, 32
          %s1894 = sadd.s32 %s1889, %s1893
          %s1895 = smul.addr %s1894, 64
          %s1896 = scalar_lea.hbm %s6, %s1895
          %s1897 = sshll.u32 %s1849, 4
          %s1898 = int_to_ptr.vmem [resolvable:$true] %s1897
          %1903 = dma.vmem_to_hbm [thread:$0]  %s1898, 2048, %s1896, %s1846, 64, 64, 4
        $region56: #{tpu_custom_call.1} parent=35 // pred_fallthru
          _
      $region36: #{tpu_custom_call.1} parent=5 // pred_fallthru
        _
      %p1904 = scmp.le.s32.totalorder 2, %s23
      // Predicated region
      $region57: #{tpu_custom_call.1} parent=5 // pred_check
        %p1905 = pneg %p1904
      $region58: #{tpu_custom_call.1} parent=5 // pred_check_branch
        %1907 = sbr.rel (%p1905) target = $region60
      $region59: #{tpu_custom_call.1} parent=5 // pred_region
        %s1908 = ssub.s32 %s23, 2
        // Predicated region
        $region61: #{tpu_custom_call.1} parent=59 // pred_check
          %p1909 = pneg %p157
        $region62: #{tpu_custom_call.1} parent=59 // pred_check_branch
          %1911 = sbr.rel (%p1909) target = $region64
        $region63: #{tpu_custom_call.1} parent=59 // pred_region
          %s1912 = sand.u32 %s142, 1
          %s1913 = scalar_lea.sflag [#allocation4], %s1912
          %s1914 = sand.u32 %s142, 1
          %s1915 = smul.addr %s1914, 128
          %s1916 = scalar_lea.vmem [#allocation7], %s1915
          %1917 = dma.done %s1913, 2048
        $region64: #{tpu_custom_call.1} parent=59 // pred_fallthru
          _
        // Predicated region
        $region65: #{tpu_custom_call.1} parent=59 // pred_check
          %p1918 = pneg %p185
        $region66: #{tpu_custom_call.1} parent=59 // pred_check_branch
          %1920 = sbr.rel (%p1918) target = $region68
        $region67: #{tpu_custom_call.1} parent=59 // pred_region
          %s1921 = sand.u32 %s29, 1
          %s1922 = scalar_lea.sflag [#allocation9], %s1921
          %s1923 = sand.u32 %s170, 1
          %s1924 = smul.addr %s1923, 128
          %s1925 = scalar_lea.vmem [#allocation8], %s1924
          %1926 = dma.done %s1922, 2048
        $region68: #{tpu_custom_call.1} parent=59 // pred_fallthru
          _
        // Predicated region
        $region69: #{tpu_custom_call.1} parent=59 // pred_check
          %p1927 = pneg %p213
        $region70: #{tpu_custom_call.1} parent=59 // pred_check_branch
          %1929 = sbr.rel (%p1927) target = $region72
        $region71: #{tpu_custom_call.1} parent=59 // pred_region
          %s1930 = sand.u32 %s29, 1
          %s1931 = scalar_lea.sflag [#allocation9], %s1930
          %s1932 = sand.u32 %s198, 1
          %s1933 = smul.addr %s1932, 128
          %s1934 = scalar_lea.vmem [#allocation10], %s1933
          %1935 = dma.done %s1931, 2048
        $region72: #{tpu_custom_call.1} parent=59 // pred_fallthru
          _
      $region60: #{tpu_custom_call.1} parent=5 // pred_fallthru
        _
    $region6: #{tpu_custom_call.1} parent=1 // loop_footer
      %s27 = sadd.s32 1, %s23
    $region7: #{tpu_custom_call.1} parent=1 // loop_footer_branch
      %22 = sbr.rel target = $region3
    $region8: #{tpu_custom_call.1} parent=1 // loop_exit
      _
    %1936 = vsyncpa [#allocation3], 1
    %s1937 = scalar_lea.sflag [#allocation3], 1
    %1938 = vsyncpa %s1937, 1
    %1939 = vsyncpa [#allocation6], 1
    %1940 = vsyncpa [#allocation4], 1
    %s1941 = scalar_lea.sflag [#allocation4], 1
    %1942 = vsyncpa %s1941, 1
    %1943 = vsyncpa [#allocation9], 1
    %s1944 = scalar_lea.sflag [#allocation9], 1
    %1945 = vsyncpa %s1944, 1

// kernel: tpu_custom_call.1
$region0: #{tpu_custom_call.1}
  #allocation0 [shape = 'u32[]', space=smem, size = 0x4, offset = 0x4, fixed_abs, tag = 'smem constant byte address 0x4 - core index']
  #allocation1 [shape = 'u32[144,128]{1,0:T(1,128)}', space=vmem, size = 0x12000, scoped, tag = 'internal scratch']
  %s0 = inlined_call_operand.hbm [shape: f32[2,256,128], index: 0, kind: input, shape index: {}]
  %s1 = inlined_call_operand.vmem [shape: f32[1,128], index: 1, kind: input, shape index: {}]
  %s2 = inlined_call_operand.vmem [shape: f32[1,128], index: 2, kind: input, shape index: {}]
  %s3 = inlined_call_operand.hbm [shape: bf16[128,384], index: 3, kind: input, shape index: {}]
  %s4 = inlined_call_operand.hbm [shape: bf16[2,256,128], index: 4, kind: output, shape index: {0}]
  %s5 = inlined_call_operand.hbm [shape: bf16[2,256,128], index: 5, kind: output, shape index: {1}]
  %s6 = inlined_call_operand.hbm [shape: bf16[2,256,128], index: 6, kind: output, shape index: {2}]
  %7 = xla_tuple %s4, %s5, %s6
  %s8 = sld [smem:[#allocation0]]
  $region73: #{tpu_custom_call.1} parent=0
    _
  %s10 = ssub.s32 1, %s8
  %s11 = scalar_select 0, %s10, %s8
  $region1: #{tpu_custom_call.1} parent=0
    #allocation2 [shape = 'u8[262144]{0}', space=vmem, size = 0x40000, scoped, tag = 'input window, operand 0']
    #allocation3 [shape = 's32[2]{0}', space=sflag, size = 0x8, scoped, tag = 'scoped memory for tpu_custom_call.1']
    #allocation4 [shape = 's32[2]{0}', space=sflag, size = 0x8, scoped, tag = 'scoped memory for tpu_custom_call.1']
    #allocation5 [shape = 'u8[98304]{0}', space=vmem, size = 0x18000, scoped, tag = 'input window, operand 3, single buffered']
    #allocation6 [shape = 's32[1]{0}', space=sflag, size = 0x4, scoped, tag = 'scoped memory for tpu_custom_call.1']
    #allocation7 [shape = 'u8[131072]{0}', space=vmem, size = 0x20000, scoped, tag = 'output window, operand 0']
    #allocation8 [shape = 'u8[131072]{0}', space=vmem, size = 0x20000, scoped, tag = 'output window, operand 1']
    #allocation9 [shape = 's32[2]{0}', space=sflag, size = 0x8, scoped, tag = 'scoped memory for tpu_custom_call.1']
    #allocation10 [shape = 'u8[131072]{0}', space=vmem, size = 0x20000, scoped, tag = 'output window, operand 2']
    %12 = vsyncpa [#allocation3], 0
    %s13 = scalar_lea.sflag [#allocation3], 1
    %14 = vsyncpa %s13, 0
    %15 = vsyncpa [#allocation6], 0
    %16 = vsyncpa [#allocation4], 0
    %s17 = scalar_lea.sflag [#allocation4], 1
    %18 = vsyncpa %s17, 0
    %19 = vsyncpa [#allocation9], 0
    %s20 = scalar_lea.sflag [#allocation9], 1
    %21 = vsyncpa %s20, 0
    loop: start=0, step=1, limit=4
    $region2: #{tpu_custom_call.1} parent=1 // loop_pre_header
      _
    $region3: #{tpu_custom_call.1} parent=1 // loop_header
      %s23 = sphi 0, %s27
      %p24 = scmp.ge.s32.totalorder %s23, 4
      %s30 = sphi 0, %s42
      %s31 = sphi 0, %s38
      %s32 = sphi 0, %s30
      %s33 = sphi 0, %s31
      %s34 = sphi 0, %s32
      %s35 = sphi 0, %s33
      %s47 = sphi 0, %s49
      %s50 = sphi 0, %s47
      %s51 = sphi 0, %s50
      %s67 = sphi 0, %s51
      %s71 = sphi 0, %s71
      %s73 = sphi 0, %s71
      %s74 = sphi 0, %s73
      %s88 = sphi 0, %s74
      %s92 = sphi 0, %s92
      %s94 = sphi 0, %s92
      %s95 = sphi 0, %s94
      %s109 = sphi 0, %s95
      %s113 = sphi 0, %s113
      %s115 = sphi 0, %s113
      %s116 = sphi 0, %s115
      %s130 = sphi 0, %s116
      %s138 = sphi 0, %s140
      %s141 = sphi 0, %s138
      %s142 = sphi 0, %s141
      %s158 = sphi 0, %s142
      %s166 = sphi 0, %s168
      %s169 = sphi 0, %s166
      %s170 = sphi 0, %s169
      %s186 = sphi 0, %s170
      %s194 = sphi 0, %s196
      %s197 = sphi 0, %s194
      %s198 = sphi 0, %s197
      %s214 = sphi 0, %s198
    $region4: #{tpu_custom_call.1} parent=1 // loop_header_branch
      %26 = sbr.rel (%p24) target = $region8
    $region5: #{tpu_custom_call.1} parent=1 // loop_body
      %s28 = ssub.s32 %s23, 1
      %s29 = ssub.s32 %s23, 2
      %s36 = sadd.s32 1, %s31
      %p37 = scmp.ge.s32.totalorder %s36, 1
      %s38 = scalar_select %p37, 0, %s36
      %s39 = sadd.s32 1, %s30
      %s40 = scalar_select %p37, %s39, %s30
      %p41 = scmp.ge.s32.totalorder %s40, 2
      %s42 = scalar_select %p41, 0, %s40
      %s43 = ssub.s32 %s30, %s42
      %s44 = ssub.s32 %s31, %s38
      %s45 = sor.u32 %s43, %s44
      %p46 = scmp.eq.s32.totalorder %s45, 0
      %s48 = sadd.s32 %s47, 1
      %s49 = scalar_select %p46, %s47, %s48
      %p52 = pneg %p46
      %p53 = scmp.eq.s32.totalorder %s23, 1
      %p54 = por %p52, %p53
      %p55 = scmp.ne.s32.totalorder %s47, %s50
      %p56 = scmp.eq.s32.totalorder %s23, 0
      %p57 = por %p55, %p56
      %p58 = scmp.ne.s32.totalorder %s47, %s50
      %p59 = scmp.eq.s32.totalorder %s28, 1
      %p60 = por %p58, %p59
      %p61 = scmp.ne.s32.totalorder %s50, %s51
      %p62 = scmp.eq.s32.totalorder %s28, 0
      %p63 = por %p61, %p62
      %p64 = scmp.ne.s32.totalorder %s50, %s51
      %p65 = scmp.eq.s32.totalorder %s29, 1
      %p66 = por %p64, %p65
      %p68 = scmp.ne.s32.totalorder %s51, %s67
      %p69 = scmp.eq.s32.totalorder %s29, 0
      %p70 = por %p68, %p69
      %s72 = sadd.s32 %s71, 1
      %p75 = scmp.eq.s32.totalorder %s23, 1
      %p76 = scmp.ne.s32.totalorder %s71, %s73
      %p77 = scmp.eq.s32.totalorder %s23, 0
      %p78 = por %p76, %p77
      %p79 = scmp.ne.s32.totalorder %s71, %s73
      %p80 = scmp.eq.s32.totalorder %s28, 1
      %p81 = por %p79, %p80
      %p82 = scmp.ne.s32.totalorder %s73, %s74
      %p83 = scmp.eq.s32.totalorder %s28, 0
      %p84 = por %p82, %p83
      %p85 = scmp.ne.s32.totalorder %s73, %s74
      %p86 = scmp.eq.s32.totalorder %s29, 1
      %p87 = por %p85, %p86
      %p89 = scmp.ne.s32.totalorder %s74, %s88
      %p90 = scmp.eq.s32.totalorder %s29, 0
      %p91 = por %p89, %p90
      %s93 = sadd.s32 %s92, 1
      %p96 = scmp.eq.s32.totalorder %s23, 1
      %p97 = scmp.ne.s32.totalorder %s92, %s94
      %p98 = scmp.eq.s32.totalorder %s23, 0
      %p99 = por %p97, %p98
      %p100 = scmp.ne.s32.totalorder %s92, %s94
      %p101 = scmp.eq.s32.totalorder %s28, 1
      %p102 = por %p100, %p101
      %p103 = scmp.ne.s32.totalorder %s94, %s95
      %p104 = scmp.eq.s32.totalorder %s28, 0
      %p105 = por %p103, %p104
      %p106 = scmp.ne.s32.totalorder %s94, %s95
      %p107 = scmp.eq.s32.totalorder %s29, 1
      %p108 = por %p106, %p107
      %p110 = scmp.ne.s32.totalorder %s95, %s109
      %p111 = scmp.eq.s32.totalorder %s29, 0
      %p112 = por %p110, %p111
      %s114 = sadd.s32 %s113, 1
      %p117 = scmp.eq.s32.totalorder %s23, 1
      %p118 = scmp.ne.s32.totalorder %s113, %s115
      %p119 = scmp.eq.s32.totalorder %s23, 0
      %p120 = por %p118, %p119
      %p121 = scmp.ne.s32.totalorder %s113, %s115
      %p122 = scmp.eq.s32.totalorder %s28, 1
      %p123 = por %p121, %p122
      %p124 = scmp.ne.s32.totalorder %s115, %s116
      %p125 = scmp.eq.s32.totalorder %s28, 0
      %p126 = por %p124, %p125
      %p127 = scmp.ne.s32.totalorder %s115, %s116
      %p128 = scmp.eq.s32.totalorder %s29, 1
      %p129 = por %p127, %p128
      %p131 = scmp.ne.s32.totalorder %s116, %s130
      %p132 = scmp.eq.s32.totalorder %s29, 0
      %p133 = por %p131, %p132
      %s134 = ssub.s32 %s30, %s42
      %s135 = ssub.s32 %s31, %s38
      %s136 = sor.u32 %s134, %s135
      %p137 = scmp.eq.s32.totalorder %s136, 0
      %s139 = sadd.s32 %s138, 1
      %s140 = scalar_select %p137, %s138, %s139
      %p143 = pneg %p137
      %p144 = scmp.eq.s32.totalorder %s23, 1
      %p145 = por %p143, %p144
      %p146 = scmp.ne.s32.totalorder %s138, %s141
      %p147 = scmp.eq.s32.totalorder %s23, 0
      %p148 = por %p146, %p147
      %p149 = scmp.ne.s32.totalorder %s138, %s141
      %p150 = scmp.eq.s32.totalorder %s28, 1
      %p151 = por %p149, %p150
      %p152 = scmp.ne.s32.totalorder %s141, %s142
      %p153 = scmp.eq.s32.totalorder %s28, 0
      %p154 = por %p152, %p153
      %p155 = scmp.ne.s32.totalorder %s141, %s142
      %p156 = scmp.eq.s32.totalorder %s29, 1
      %p157 = por %p155, %p156
      %p159 = scmp.ne.s32.totalorder %s142, %s158
      %p160 = scmp.eq.s32.totalorder %s29, 0
      %p161 = por %p159, %p160
      %s162 = ssub.s32 %s30, %s42
      %s163 = ssub.s32 %s31, %s38
      %s164 = sor.u32 %s162, %s163
      %p165 = scmp.eq.s32.totalorder %s164, 0
      %s167 = sadd.s32 %s166, 1
      %s168 = scalar_select %p165, %s166, %s167
      %p171 = pneg %p165
      %p172 = scmp.eq.s32.totalorder %s23, 1
      %p173 = por %p171, %p172
      %p174 = scmp.ne.s32.totalorder %s166, %s169
      %p175 = scmp.eq.s32.totalorder %s23, 0
      %p176 = por %p174, %p175
      %p177 = scmp.ne.s32.totalorder %s166, %s169
      %p178 = scmp.eq.s32.totalorder %s28, 1
      %p179 = por %p177, %p178
      %p180 = scmp.ne.s32.totalorder %s169, %s170
      %p181 = scmp.eq.s32.totalorder %s28, 0
      %p182 = por %p180, %p181
      %p183 = scmp.ne.s32.totalorder %s169, %s170
      %p184 = scmp.eq.s32.totalorder %s29, 1
      %p185 = por %p183, %p184
      %p187 = scmp.ne.s32.totalorder %s170, %s186
      %p188 = scmp.eq.s32.totalorder %s29, 0
      %p189 = por %p187, %p188
      %s190 = ssub.s32 %s30, %s42
      %s191 = ssub.s32 %s31, %s38
      %s192 = sor.u32 %s190, %s191
      %p193 = scmp.eq.s32.totalorder %s192, 0
      %s195 = sadd.s32 %s194, 1
      %s196 = scalar_select %p193, %s194, %s195
      %p199 = pneg %p193
      %p200 = scmp.eq.s32.totalorder %s23, 1
      %p201 = por %p199, %p200
      %p202 = scmp.ne.s32.totalorder %s194, %s197
      %p203 = scmp.eq.s32.totalorder %s23, 0
      %p204 = por %p202, %p203
      %p205 = scmp.ne.s32.totalorder %s194, %s197
      %p206 = scmp.eq.s32.totalorder %s28, 1
      %p207 = por %p205, %p206
      %p208 = scmp.ne.s32.totalorder %s197, %s198
      %p209 = scmp.eq.s32.totalorder %s28, 0
      %p210 = por %p208, %p209
      %p211 = scmp.ne.s32.totalorder %s197, %s198
      %p212 = scmp.eq.s32.totalorder %s29, 1
      %p213 = por %p211, %p212
      %p215 = scmp.ne.s32.totalorder %s198, %s214
      %p216 = scmp.eq.s32.totalorder %s29, 0
      %p217 = por %p215, %p216
      %p218 = scmp.le.s32.totalorder 1, %s23
      %p219 = scmp.lt.s32.totalorder %s23, 3
      %p220 = pnand %p218, %p219
      %p221 = pneg %p220
      // Predicated region
      $region9: #{tpu_custom_call.1} parent=5 // pred_check
        _
      $region10: #{tpu_custom_call.1} parent=5 // pred_check_branch
        %223 = sbr.rel (%p220) target = $region12
      $region11: #{tpu_custom_call.1} parent=5 // pred_region
        %s224 = ssub.s32 %s23, 1
        // Predicated region
        $region13: #{tpu_custom_call.1} parent=11 // pred_check
          %p225 = pneg %p84
        $region14: #{tpu_custom_call.1} parent=11 // pred_check_branch
          %227 = sbr.rel (%p225) target = $region16
        $region15: #{tpu_custom_call.1} parent=11 // pred_region
          _
        $region16: #{tpu_custom_call.1} parent=11 // pred_fallthru
          _
        // Predicated region
        $region17: #{tpu_custom_call.1} parent=11 // pred_check
          %p228 = pneg %p105
        $region18: #{tpu_custom_call.1} parent=11 // pred_check_branch
          %230 = sbr.rel (%p228) target = $region20
        $region19: #{tpu_custom_call.1} parent=11 // pred_region
          _
        $region20: #{tpu_custom_call.1} parent=11 // pred_fallthru
          _
        // Predicated region
        $region21: #{tpu_custom_call.1} parent=11 // pred_check
          %p231 = pneg %p126
        $region22: #{tpu_custom_call.1} parent=11 // pred_check_branch
          %233 = sbr.rel (%p231) target = $region24
        $region23: #{tpu_custom_call.1} parent=11 // pred_region
          %s235 = ssub.s32 3072, 3072
          %236 = vsyncadd [#allocation6], %s235
          %s237 = sshll.u32 [#allocation5], 4
          %s238 = int_to_ptr.vmem [resolvable:$true] %s237
          %243 = dma.hbm_to_vmem [thread:$0]  %s3, 3072, %s238, [#allocation6], 192, 192, 12
        $region24: #{tpu_custom_call.1} parent=11 // pred_fallthru
          _
      $region12: #{tpu_custom_call.1} parent=5 // pred_fallthru
        _
      %p244 = scmp.lt.s32.totalorder %s23, 2
      // Predicated region
      $region25: #{tpu_custom_call.1} parent=5 // pred_check
        %p245 = pneg %p244
      $region26: #{tpu_custom_call.1} parent=5 // pred_check_branch
        %247 = sbr.rel (%p245) target = $region28
      $region27: #{tpu_custom_call.1} parent=5 // pred_region
        // Predicated region
        $region29: #{tpu_custom_call.1} parent=27 // pred_check
          %p248 = pneg %p57
        $region30: #{tpu_custom_call.1} parent=27 // pred_check_branch
          %250 = sbr.rel (%p248) target = $region32
        $region31: #{tpu_custom_call.1} parent=27 // pred_region
          %s251 = sand.u32 %s47, 1
          %s252 = scalar_lea.sflag [#allocation3], %s251
          %s253 = sand.u32 %s47, 1
          %s254 = smul.addr %s253, 256
          %s255 = scalar_lea.vmem [#allocation2], %s254
          %s256 = smul.u32 32, %s31
          %s258 = ssub.s32 4096, 4096
          %259 = vsyncadd %s252, %s258
          %s260 = smul.addr %s30, 32
          %s261 = sadd.s32 %s256, %s260
          %s262 = smul.addr %s261, 128
          %s263 = scalar_lea.hbm %s0, %s262
          %s264 = sshll.u32 %s255, 4
          %s265 = int_to_ptr.vmem [resolvable:$true] %s264
          %270 = dma.hbm_to_vmem [thread:$0]  %s263, 4096, %s265, %s252, 128, 128, 8
        $region32: #{tpu_custom_call.1} parent=27 // pred_fallthru
          _
      $region28: #{tpu_custom_call.1} parent=5 // pred_fallthru
        _
      %p271 = scmp.le.s32.totalorder 1, %s23
      %p272 = scmp.lt.s32.totalorder %s23, 3
      %p273 = pnand %p271, %p272
      %p274 = pneg %p273
      // Predicated region
      $region33: #{tpu_custom_call.1} parent=5 // pred_check
        _
      $region34: #{tpu_custom_call.1} parent=5 // pred_check_branch
        %276 = sbr.rel (%p273) target = $region36
      $region35: #{tpu_custom_call.1} parent=5 // pred_region
        %s277 = ssub.s32 %s23, 1
        %s278 = sand.u32 %s50, 1
        %s279 = scalar_lea.sflag [#allocation3], %s278
        %s280 = sand.u32 %s50, 1
        %s281 = smul.addr %s280, 256
        %s282 = scalar_lea.vmem [#allocation2], %s281
        // Predicated region
        $region37: #{tpu_custom_call.1} parent=35 // pred_check
          %p283 = pneg %p63
        $region38: #{tpu_custom_call.1} parent=35 // pred_check_branch
          %285 = sbr.rel (%p283) target = $region40
        $region39: #{tpu_custom_call.1} parent=35 // pred_region
          %286 = dma.done %s279, 4096
        $region40: #{tpu_custom_call.1} parent=35 // pred_fallthru
          _
        // Predicated region
        $region41: #{tpu_custom_call.1} parent=35 // pred_check
          %p287 = pneg %p126
        $region42: #{tpu_custom_call.1} parent=35 // pred_check_branch
          %289 = sbr.rel (%p287) target = $region44
        $region43: #{tpu_custom_call.1} parent=35 // pred_region
          %290 = dma.done [#allocation6], 3072
        $region44: #{tpu_custom_call.1} parent=35 // pred_fallthru
          _
        %s291 = sand.u32 %s50, 1
        %s292 = scalar_lea.sflag [#allocation3], %s291
        %s293 = sand.u32 %s50, 1
        %s294 = smul.addr %s293, 256
        %s295 = scalar_lea.vmem [#allocation2], %s294
        %p296 = pneg %p63
        %p297 = pneg %p60
        %p298 = pneg %p84
        %p299 = pneg %p81
        %p300 = pneg %p105
        %p301 = pneg %p102
        %p302 = pneg %p126
        %p303 = pneg %p123
        %p304 = pneg %p154
        %p305 = pneg %p151
        %s306 = sand.u32 %s141, 1
        %s307 = scalar_lea.sflag [#allocation4], %s306
        %s308 = sand.u32 %s141, 1
        %s309 = smul.addr %s308, 128
        %s310 = scalar_lea.vmem [#allocation7], %s309
        %p311 = pneg %p182
        %p312 = pneg %p179
        %s313 = sand.u32 %s28, 1
        %s314 = scalar_lea.sflag [#allocation9], %s313
        %s315 = sand.u32 %s169, 1
        %s316 = smul.addr %s315, 128
        %s317 = scalar_lea.vmem [#allocation8], %s316
        %p318 = pneg %p210
        %p319 = pneg %p207
        %s320 = sand.u32 %s28, 1
        %s321 = scalar_lea.sflag [#allocation9], %s320
        %s322 = sand.u32 %s197, 1
        %s323 = smul.addr %s322, 128
        %s324 = scalar_lea.vmem [#allocation10], %s323
        %s325 = smul.u32 32, %s33
        %s326 = smul.u32 32, %s33
        %s327 = smul.u32 32, %s33
        %s328 = smul.u32 32, %s33
        %v330 = vld [vmem:[%s282] sm:$0xff]
        %v331 = vld [vmem:[%s282 + $0x8] sm:$0xff]
        %v332 = vld [vmem:[%s282 + $0x10] sm:$0xff]
        %v333 = vld [vmem:[%s282 + $0x18] sm:$0xff]
        %v334 = vld [vmem:[%s282 + $0x20] sm:$0xff]
        %v335 = vld [vmem:[%s282 + $0x28] sm:$0xff]
        %v336 = vld [vmem:[%s282 + $0x30] sm:$0xff]
        %v337 = vld [vmem:[%s282 + $0x38] sm:$0xff]
        %v338 = vld [vmem:[%s282 + $0x40] sm:$0xff]
        %v339 = vld [vmem:[%s282 + $0x48] sm:$0xff]
        %v340 = vld [vmem:[%s282 + $0x50] sm:$0xff]
        %v341 = vld [vmem:[%s282 + $0x58] sm:$0xff]
        %v342 = vld [vmem:[%s282 + $0x60] sm:$0xff]
        %v343 = vld [vmem:[%s282 + $0x68] sm:$0xff]
        %v344 = vld [vmem:[%s282 + $0x70] sm:$0xff]
        %v345 = vld [vmem:[%s282 + $0x78] sm:$0xff]
        %v346 = vld [vmem:[%s282 + $0x80] sm:$0xff]
        %v347 = vld [vmem:[%s282 + $0x88] sm:$0xff]
        %v348 = vld [vmem:[%s282 + $0x90] sm:$0xff]
        %v349 = vld [vmem:[%s282 + $0x98] sm:$0xff]
        %v350 = vld [vmem:[%s282 + $0xa0] sm:$0xff]
        %v351 = vld [vmem:[%s282 + $0xa8] sm:$0xff]
        %v352 = vld [vmem:[%s282 + $0xb0] sm:$0xff]
        %v353 = vld [vmem:[%s282 + $0xb8] sm:$0xff]
        %v354 = vld [vmem:[%s282 + $0xc0] sm:$0xff]
        %v355 = vld [vmem:[%s282 + $0xc8] sm:$0xff]
        %v356 = vld [vmem:[%s282 + $0xd0] sm:$0xff]
        %v357 = vld [vmem:[%s282 + $0xd8] sm:$0xff]
        %v358 = vld [vmem:[%s282 + $0xe0] sm:$0xff]
        %v359 = vld [vmem:[%s282 + $0xe8] sm:$0xff]
        %v360 = vld [vmem:[%s282 + $0xf0] sm:$0xff]
        %v361 = vld [vmem:[%s282 + $0xf8] sm:$0xff]
        %v362 = vld [vmem:[%s1] sm:$0x1]
        %v363 = vld [vmem:[%s2] sm:$0x1]
        %364 = vadd.xlane.f32.xlu0 %v330
        %v365 = vpop.xlane.xlu0 %364
        %366 = vadd.xlane.f32.xlu0 %v331
        %v367 = vpop.xlane.xlu0 %366
        %368 = vadd.xlane.f32.xlu0 %v332
        %v369 = vpop.xlane.xlu0 %368
        %370 = vadd.xlane.f32.xlu0 %v333
        %v371 = vpop.xlane.xlu0 %370
        %372 = vadd.xlane.f32.xlu0 %v334
        %v373 = vpop.xlane.xlu0 %372
        %374 = vadd.xlane.f32.xlu0 %v335
        %v375 = vpop.xlane.xlu0 %374
        %376 = vadd.xlane.f32.xlu0 %v336
        %v377 = vpop.xlane.xlu0 %376
        %378 = vadd.xlane.f32.xlu0 %v337
        %v379 = vpop.xlane.xlu0 %378
        %380 = vadd.xlane.f32.xlu0 %v338
        %v381 = vpop.xlane.xlu0 %380
        %382 = vadd.xlane.f32.xlu0 %v339
        %v383 = vpop.xlane.xlu0 %382
        %384 = vadd.xlane.f32.xlu0 %v340
        %v385 = vpop.xlane.xlu0 %384
        %386 = vadd.xlane.f32.xlu0 %v341
        %v387 = vpop.xlane.xlu0 %386
        %388 = vadd.xlane.f32.xlu0 %v342
        %v389 = vpop.xlane.xlu0 %388
        %390 = vadd.xlane.f32.xlu0 %v343
        %v391 = vpop.xlane.xlu0 %390
        %392 = vadd.xlane.f32.xlu0 %v344
        %v393 = vpop.xlane.xlu0 %392
        %394 = vadd.xlane.f32.xlu0 %v345
        %v395 = vpop.xlane.xlu0 %394
        %396 = vadd.xlane.f32.xlu0 %v346
        %v397 = vpop.xlane.xlu0 %396
        %398 = vadd.xlane.f32.xlu0 %v347
        %v399 = vpop.xlane.xlu0 %398
        %400 = vadd.xlane.f32.xlu0 %v348
        %v401 = vpop.xlane.xlu0 %400
        %402 = vadd.xlane.f32.xlu0 %v349
        %v403 = vpop.xlane.xlu0 %402
        %404 = vadd.xlane.f32.xlu0 %v350
        %v405 = vpop.xlane.xlu0 %404
        %406 = vadd.xlane.f32.xlu0 %v351
        %v407 = vpop.xlane.xlu0 %406
        %408 = vadd.xlane.f32.xlu0 %v352
        %v409 = vpop.xlane.xlu0 %408
        %410 = vadd.xlane.f32.xlu0 %v353
        %v411 = vpop.xlane.xlu0 %410
        %412 = vadd.xlane.f32.xlu0 %v354
        %v413 = vpop.xlane.xlu0 %412
        %414 = vadd.xlane.f32.xlu0 %v355
        %v415 = vpop.xlane.xlu0 %414
        %416 = vadd.xlane.f32.xlu0 %v356
        %v417 = vpop.xlane.xlu0 %416
        %418 = vadd.xlane.f32.xlu0 %v357
        %v419 = vpop.xlane.xlu0 %418
        %420 = vadd.xlane.f32.xlu0 %v358
        %v421 = vpop.xlane.xlu0 %420
        %422 = vadd.xlane.f32.xlu0 %v359
        %v423 = vpop.xlane.xlu0 %422
        %424 = vadd.xlane.f32.xlu0 %v360
        %v425 = vpop.xlane.xlu0 %424
        %426 = vadd.xlane.f32.xlu0 %v361
        %v427 = vpop.xlane.xlu0 %426
        %v428 = vrcp.pop 128.0
        %v429 = vmul.f32 %v365, %v428
        %v430 = vmul.f32 %v367, %v428
        %v431 = vmul.f32 %v369, %v428
        %v432 = vmul.f32 %v371, %v428
        %v433 = vmul.f32 %v373, %v428
        %v434 = vmul.f32 %v375, %v428
        %v435 = vmul.f32 %v377, %v428
        %v436 = vmul.f32 %v379, %v428
        %v437 = vmul.f32 %v381, %v428
        %v438 = vmul.f32 %v383, %v428
        %v439 = vmul.f32 %v385, %v428
        %v440 = vmul.f32 %v387, %v428
        %v441 = vmul.f32 %v389, %v428
        %v442 = vmul.f32 %v391, %v428
        %v443 = vmul.f32 %v393, %v428
        %v444 = vmul.f32 %v395, %v428
        %v445 = vmul.f32 %v397, %v428
        %v446 = vmul.f32 %v399, %v428
        %v447 = vmul.f32 %v401, %v428
        %v448 = vmul.f32 %v403, %v428
        %v449 = vmul.f32 %v405, %v428
        %v450 = vmul.f32 %v407, %v428
        %v451 = vmul.f32 %v409, %v428
        %v452 = vmul.f32 %v411, %v428
        %v453 = vmul.f32 %v413, %v428
        %v454 = vmul.f32 %v415, %v428
        %v455 = vmul.f32 %v417, %v428
        %v456 = vmul.f32 %v419, %v428
        %v457 = vmul.f32 %v421, %v428
        %v458 = vmul.f32 %v423, %v428
        %v459 = vmul.f32 %v425, %v428
        %v460 = vmul.f32 %v427, %v428
        %v461 = vsub.f32 %v330, %v429
        %v462 = vsub.f32 %v331, %v430
        %v463 = vsub.f32 %v332, %v431
        %v464 = vsub.f32 %v333, %v432
        %v465 = vsub.f32 %v334, %v433
        %v466 = vsub.f32 %v335, %v434
        %v467 = vsub.f32 %v336, %v435
        %v468 = vsub.f32 %v337, %v436
        %v469 = vsub.f32 %v338, %v437
        %v470 = vsub.f32 %v339, %v438
        %v471 = vsub.f32 %v340, %v439
        %v472 = vsub.f32 %v341, %v440
        %v473 = vsub.f32 %v342, %v441
        %v474 = vsub.f32 %v343, %v442
        %v475 = vsub.f32 %v344, %v443
        %v476 = vsub.f32 %v345, %v444
        %v477 = vsub.f32 %v346, %v445
        %v478 = vsub.f32 %v347, %v446
        %v479 = vsub.f32 %v348, %v447
        %v480 = vsub.f32 %v349, %v448
        %v481 = vsub.f32 %v350, %v449
        %v482 = vsub.f32 %v351, %v450
        %v483 = vsub.f32 %v352, %v451
        %v484 = vsub.f32 %v353, %v452
        %v485 = vsub.f32 %v354, %v453
        %v486 = vsub.f32 %v355, %v454
        %v487 = vsub.f32 %v356, %v455
        %v488 = vsub.f32 %v357, %v456
        %v489 = vsub.f32 %v358, %v457
        %v490 = vsub.f32 %v359, %v458
        %v491 = vsub.f32 %v360, %v459
        %v492 = vsub.f32 %v361, %v460
        %v493 = vmul.f32 %v461, %v461
        %v494 = vmul.f32 %v462, %v462
        %v495 = vmul.f32 %v463, %v463
        %v496 = vmul.f32 %v464, %v464
        %v497 = vmul.f32 %v465, %v465
        %v498 = vmul.f32 %v466, %v466
        %v499 = vmul.f32 %v467, %v467
        %v500 = vmul.f32 %v468, %v468
        %v501 = vmul.f32 %v469, %v469
        %v502 = vmul.f32 %v470, %v470
        %v503 = vmul.f32 %v471, %v471
        %v504 = vmul.f32 %v472, %v472
        %v505 = vmul.f32 %v473, %v473
        %v506 = vmul.f32 %v474, %v474
        %v507 = vmul.f32 %v475, %v475
        %v508 = vmul.f32 %v476, %v476
        %v509 = vmul.f32 %v477, %v477
        %v510 = vmul.f32 %v478, %v478
        %v511 = vmul.f32 %v479, %v479
        %v512 = vmul.f32 %v480, %v480
        %v513 = vmul.f32 %v481, %v481
        %v514 = vmul.f32 %v482, %v482
        %v515 = vmul.f32 %v483, %v483
        %v516 = vmul.f32 %v484, %v484
        %v517 = vmul.f32 %v485, %v485
        %v518 = vmul.f32 %v486, %v486
        %v519 = vmul.f32 %v487, %v487
        %v520 = vmul.f32 %v488, %v488
        %v521 = vmul.f32 %v489, %v489
        %v522 = vmul.f32 %v490, %v490
        %v523 = vmul.f32 %v491, %v491
        %v524 = vmul.f32 %v492, %v492
        %525 = vadd.xlane.f32.xlu0 %v493
        %v526 = vpop.xlane.xlu0 %525
        %527 = vadd.xlane.f32.xlu0 %v494
        %v528 = vpop.xlane.xlu0 %527
        %529 = vadd.xlane.f32.xlu0 %v495
        %v530 = vpop.xlane.xlu0 %529
        %531 = vadd.xlane.f32.xlu0 %v496
        %v532 = vpop.xlane.xlu0 %531
        %533 = vadd.xlane.f32.xlu0 %v497
        %v534 = vpop.xlane.xlu0 %533
        %535 = vadd.xlane.f32.xlu0 %v498
        %v536 = vpop.xlane.xlu0 %535
        %537 = vadd.xlane.f32.xlu0 %v499
        %v538 = vpop.xlane.xlu0 %537
        %539 = vadd.xlane.f32.xlu0 %v500
        %v540 = vpop.xlane.xlu0 %539
        %541 = vadd.xlane.f32.xlu0 %v501
        %v542 = vpop.xlane.xlu0 %541
        %543 = vadd.xlane.f32.xlu0 %v502
        %v544 = vpop.xlane.xlu0 %543
        %545 = vadd.xlane.f32.xlu0 %v503
        %v546 = vpop.xlane.xlu0 %545
        %547 = vadd.xlane.f32.xlu0 %v504
        %v548 = vpop.xlane.xlu0 %547
        %549 = vadd.xlane.f32.xlu0 %v505
        %v550 = vpop.xlane.xlu0 %549
        %551 = vadd.xlane.f32.xlu0 %v506
        %v552 = vpop.xlane.xlu0 %551
        %553 = vadd.xlane.f32.xlu0 %v507
        %v554 = vpop.xlane.xlu0 %553
        %555 = vadd.xlane.f32.xlu0 %v508
        %v556 = vpop.xlane.xlu0 %555
        %557 = vadd.xlane.f32.xlu0 %v509
        %v558 = vpop.xlane.xlu0 %557
        %559 = vadd.xlane.f32.xlu0 %v510
        %v560 = vpop.xlane.xlu0 %559
        %561 = vadd.xlane.f32.xlu0 %v511
        %v562 = vpop.xlane.xlu0 %561
        %563 = vadd.xlane.f32.xlu0 %v512
        %v564 = vpop.xlane.xlu0 %563
        %565 = vadd.xlane.f32.xlu0 %v513
        %v566 = vpop.xlane.xlu0 %565
        %567 = vadd.xlane.f32.xlu0 %v514
        %v568 = vpop.xlane.xlu0 %567
        %569 = vadd.xlane.f32.xlu0 %v515
        %v570 = vpop.xlane.xlu0 %569
        %571 = vadd.xlane.f32.xlu0 %v516
        %v572 = vpop.xlane.xlu0 %571
        %573 = vadd.xlane.f32.xlu0 %v517
        %v574 = vpop.xlane.xlu0 %573
        %575 = vadd.xlane.f32.xlu0 %v518
        %v576 = vpop.xlane.xlu0 %575
        %577 = vadd.xlane.f32.xlu0 %v519
        %v578 = vpop.xlane.xlu0 %577
        %579 = vadd.xlane.f32.xlu0 %v520
        %v580 = vpop.xlane.xlu0 %579
        %581 = vadd.xlane.f32.xlu0 %v521
        %v582 = vpop.xlane.xlu0 %581
        %583 = vadd.xlane.f32.xlu0 %v522
        %v584 = vpop.xlane.xlu0 %583
        %585 = vadd.xlane.f32.xlu0 %v523
        %v586 = vpop.xlane.xlu0 %585
        %587 = vadd.xlane.f32.xlu0 %v524
        %v588 = vpop.xlane.xlu0 %587
        %v589 = vmul.f32 %v526, %v428
        %v590 = vmul.f32 %v528, %v428
        %v591 = vmul.f32 %v530, %v428
        %v592 = vmul.f32 %v532, %v428
        %v593 = vmul.f32 %v534, %v428
        %v594 = vmul.f32 %v536, %v428
        %v595 = vmul.f32 %v538, %v428
        %v596 = vmul.f32 %v540, %v428
        %v597 = vmul.f32 %v542, %v428
        %v598 = vmul.f32 %v544, %v428
        %v599 = vmul.f32 %v546, %v428
        %v600 = vmul.f32 %v548, %v428
        %v601 = vmul.f32 %v550, %v428
        %v602 = vmul.f32 %v552, %v428
        %v603 = vmul.f32 %v554, %v428
        %v604 = vmul.f32 %v556, %v428
        %v605 = vmul.f32 %v558, %v428
        %v606 = vmul.f32 %v560, %v428
        %v607 = vmul.f32 %v562, %v428
        %v608 = vmul.f32 %v564, %v428
        %v609 = vmul.f32 %v566, %v428
        %v610 = vmul.f32 %v568, %v428
        %v611 = vmul.f32 %v570, %v428
        %v612 = vmul.f32 %v572, %v428
        %v613 = vmul.f32 %v574, %v428
        %v614 = vmul.f32 %v576, %v428
        %v615 = vmul.f32 %v578, %v428
        %v616 = vmul.f32 %v580, %v428
        %v617 = vmul.f32 %v582, %v428
        %v618 = vmul.f32 %v584, %v428
        %v619 = vmul.f32 %v586, %v428
        %v620 = vmul.f32 %v588, %v428
        %v621 = vadd.f32 %v589, 1e-05
        %v622 = vadd.f32 %v590, 1e-05
        %v623 = vadd.f32 %v591, 1e-05
        %v624 = vadd.f32 %v592, 1e-05
        %v625 = vadd.f32 %v593, 1e-05
        %v626 = vadd.f32 %v594, 1e-05
        %v627 = vadd.f32 %v595, 1e-05
        %v628 = vadd.f32 %v596, 1e-05
        %v629 = vadd.f32 %v597, 1e-05
        %v630 = vadd.f32 %v598, 1e-05
        %v631 = vadd.f32 %v599, 1e-05
        %v632 = vadd.f32 %v600, 1e-05
        %v633 = vadd.f32 %v601, 1e-05
        %v634 = vadd.f32 %v602, 1e-05
        %v635 = vadd.f32 %v603, 1e-05
        %v636 = vadd.f32 %v604, 1e-05
        %v637 = vadd.f32 %v605, 1e-05
        %v638 = vadd.f32 %v606, 1e-05
        %v639 = vadd.f32 %v607, 1e-05
        %v640 = vadd.f32 %v608, 1e-05
        %v641 = vadd.f32 %v609, 1e-05
        %v642 = vadd.f32 %v610, 1e-05
        %v643 = vadd.f32 %v611, 1e-05
        %v644 = vadd.f32 %v612, 1e-05
        %v645 = vadd.f32 %v613, 1e-05
        %v646 = vadd.f32 %v614, 1e-05
        %v647 = vadd.f32 %v615, 1e-05
        %v648 = vadd.f32 %v616, 1e-05
        %v649 = vadd.f32 %v617, 1e-05
        %v650 = vadd.f32 %v618, 1e-05
        %v651 = vadd.f32 %v619, 1e-05
        %v652 = vadd.f32 %v620, 1e-05
        %v653 = vrsqrt.pop %v621
        %v654 = vrsqrt.pop %v622
        %v655 = vrsqrt.pop %v623
        %v656 = vrsqrt.pop %v624
        %v657 = vrsqrt.pop %v625
        %v658 = vrsqrt.pop %v626
        %v659 = vrsqrt.pop %v627
        %v660 = vrsqrt.pop %v628
        %v661 = vrsqrt.pop %v629
        %v662 = vrsqrt.pop %v630
        %v663 = vrsqrt.pop %v631
        %v664 = vrsqrt.pop %v632
        %v665 = vrsqrt.pop %v633
        %v666 = vrsqrt.pop %v634
        %v667 = vrsqrt.pop %v635
        %v668 = vrsqrt.pop %v636
        %v669 = vrsqrt.pop %v637
        %v670 = vrsqrt.pop %v638
        %v671 = vrsqrt.pop %v639
        %v672 = vrsqrt.pop %v640
        %v673 = vrsqrt.pop %v641
        %v674 = vrsqrt.pop %v642
        %v675 = vrsqrt.pop %v643
        %v676 = vrsqrt.pop %v644
        %v677 = vrsqrt.pop %v645
        %v678 = vrsqrt.pop %v646
        %v679 = vrsqrt.pop %v647
        %v680 = vrsqrt.pop %v648
        %v681 = vrsqrt.pop %v649
        %v682 = vrsqrt.pop %v650
        %v683 = vrsqrt.pop %v651
        %v684 = vrsqrt.pop %v652
        %v685 = vmul.f32 %v461, %v653
        %v686 = vmul.f32 %v462, %v654
        %v687 = vmul.f32 %v463, %v655
        %v688 = vmul.f32 %v464, %v656
        %v689 = vmul.f32 %v465, %v657
        %v690 = vmul.f32 %v466, %v658
        %v691 = vmul.f32 %v467, %v659
        %v692 = vmul.f32 %v468, %v660
        %v693 = vmul.f32 %v469, %v661
        %v694 = vmul.f32 %v470, %v662
        %v695 = vmul.f32 %v471, %v663
        %v696 = vmul.f32 %v472, %v664
        %v697 = vmul.f32 %v473, %v665
        %v698 = vmul.f32 %v474, %v666
        %v699 = vmul.f32 %v475, %v667
        %v700 = vmul.f32 %v476, %v668
        %v701 = vmul.f32 %v477, %v669
        %v702 = vmul.f32 %v478, %v670
        %v703 = vmul.f32 %v479, %v671
        %v704 = vmul.f32 %v480, %v672
        %v705 = vmul.f32 %v481, %v673
        %v706 = vmul.f32 %v482, %v674
        %v707 = vmul.f32 %v483, %v675
        %v708 = vmul.f32 %v484, %v676
        %v709 = vmul.f32 %v485, %v677
        %v710 = vmul.f32 %v486, %v678
        %v711 = vmul.f32 %v487, %v679
        %v712 = vmul.f32 %v488, %v680
        %v713 = vmul.f32 %v489, %v681
        %v714 = vmul.f32 %v490, %v682
        %v715 = vmul.f32 %v491, %v683
        %v716 = vmul.f32 %v492, %v684
        %v718 = vlaneseq
        %v719 = vshrl.u32 %v718, 7
        %v720 = vsub.s32 0, %v719
        %v721 = vrot.slane %v362, %v720
        %v723 = vmul.f32 %v685, %v721
        %v724 = vmul.f32 %v686, %v721
        %v725 = vmul.f32 %v687, %v721
        %v726 = vmul.f32 %v688, %v721
        %v727 = vmul.f32 %v689, %v721
        %v728 = vmul.f32 %v690, %v721
        %v729 = vmul.f32 %v691, %v721
        %v730 = vmul.f32 %v692, %v721
        %v731 = vmul.f32 %v693, %v721
        %v732 = vmul.f32 %v694, %v721
        %v733 = vmul.f32 %v695, %v721
        %v734 = vmul.f32 %v696, %v721
        %v735 = vmul.f32 %v697, %v721
        %v736 = vmul.f32 %v698, %v721
        %v737 = vmul.f32 %v699, %v721
        %v738 = vmul.f32 %v700, %v721
        %v739 = vmul.f32 %v701, %v721
        %v740 = vmul.f32 %v702, %v721
        %v741 = vmul.f32 %v703, %v721
        %v742 = vmul.f32 %v704, %v721
        %v743 = vmul.f32 %v705, %v721
        %v744 = vmul.f32 %v706, %v721
        %v745 = vmul.f32 %v707, %v721
        %v746 = vmul.f32 %v708, %v721
        %v747 = vmul.f32 %v709, %v721
        %v748 = vmul.f32 %v710, %v721
        %v749 = vmul.f32 %v711, %v721
        %v750 = vmul.f32 %v712, %v721
        %v751 = vmul.f32 %v713, %v721
        %v752 = vmul.f32 %v714, %v721
        %v753 = vmul.f32 %v715, %v721
        %v754 = vmul.f32 %v716, %v721
        %v756 = vlaneseq
        %v757 = vshrl.u32 %v756, 7
        %v758 = vsub.s32 0, %v757
        %v759 = vrot.slane %v363, %v758
        %v761 = vadd.f32 %v723, %v759
        %v762 = vadd.f32 %v724, %v759
        %v763 = vadd.f32 %v725, %v759
        %v764 = vadd.f32 %v726, %v759
        %v765 = vadd.f32 %v727, %v759
        %v766 = vadd.f32 %v728, %v759
        %v767 = vadd.f32 %v729, %v759
        %v768 = vadd.f32 %v730, %v759
        %v769 = vadd.f32 %v731, %v759
        %v770 = vadd.f32 %v732, %v759
        %v771 = vadd.f32 %v733, %v759
        %v772 = vadd.f32 %v734, %v759
        %v773 = vadd.f32 %v735, %v759
        %v774 = vadd.f32 %v736, %v759
        %v775 = vadd.f32 %v737, %v759
        %v776 = vadd.f32 %v738, %v759
        %v777 = vadd.f32 %v739, %v759
        %v778 = vadd.f32 %v740, %v759
        %v779 = vadd.f32 %v741, %v759
        %v780 = vadd.f32 %v742, %v759
        %v781 = vadd.f32 %v743, %v759
        %v782 = vadd.f32 %v744, %v759
        %v783 = vadd.f32 %v745, %v759
        %v784 = vadd.f32 %v746, %v759
        %v785 = vadd.f32 %v747, %v759
        %v786 = vadd.f32 %v748, %v759
        %v787 = vadd.f32 %v749, %v759
        %v788 = vadd.f32 %v750, %v759
        %v789 = vadd.f32 %v751, %v759
        %v790 = vadd.f32 %v752, %v759
        %v791 = vadd.f32 %v753, %v759
        %v792 = vadd.f32 %v754, %v759
        %v793 = vpack.c.bf16 %v762, %v761
        %v794 = vpack.c.bf16 %v764, %v763
        %v795 = vpack.c.bf16 %v766, %v765
        %v796 = vpack.c.bf16 %v768, %v767
        %v797 = vpack.c.bf16 %v770, %v769
        %v798 = vpack.c.bf16 %v772, %v771
        %v799 = vpack.c.bf16 %v774, %v773
        %v800 = vpack.c.bf16 %v776, %v775
        %v801 = vpack.c.bf16 %v778, %v777
        %v802 = vpack.c.bf16 %v780, %v779
        %v803 = vpack.c.bf16 %v782, %v781
        %v804 = vpack.c.bf16 %v784, %v783
        %v805 = vpack.c.bf16 %v786, %v785
        %v806 = vpack.c.bf16 %v788, %v787
        %v807 = vpack.c.bf16 %v790, %v789
        %v808 = vpack.c.bf16 %v792, %v791
        %v809 = vld [vmem:[#allocation5] sm:$0xff]
        %v810 = vld [vmem:[#allocation5 + $0x8] sm:$0xf]
        %v811 = vld [vmem:[#allocation5 + $0xc] sm:$0xff]
        %v812 = vld [vmem:[#allocation5 + $0x14] sm:$0xf]
        %v813 = vld [vmem:[#allocation5 + $0x18] sm:$0xff]
        %v814 = vld [vmem:[#allocation5 + $0x20] sm:$0xf]
        %v815 = vld [vmem:[#allocation5 + $0x24] sm:$0xff]
        %v816 = vld [vmem:[#allocation5 + $0x2c] sm:$0xf]
        %v817 = vld [vmem:[#allocation5 + $0x30] sm:$0xff]
        %v818 = vld [vmem:[#allocation5 + $0x38] sm:$0xf]
        %v819 = vld [vmem:[#allocation5 + $0x3c] sm:$0xff]
        %v820 = vld [vmem:[#allocation5 + $0x44] sm:$0xf]
        %v821 = vld [vmem:[#allocation5 + $0x48] sm:$0xff]
        %v822 = vld [vmem:[#allocation5 + $0x50] sm:$0xf]
        %v823 = vld [vmem:[#allocation5 + $0x54] sm:$0xff]
        %v824 = vld [vmem:[#allocation5 + $0x5c] sm:$0xf]
        %v825 = vld [vmem:[#allocation5 + $0x60] sm:$0xff]
        %v826 = vld [vmem:[#allocation5 + $0x68] sm:$0xf]
        %v827 = vld [vmem:[#allocation5 + $0x6c] sm:$0xff]
        %v828 = vld [vmem:[#allocation5 + $0x74] sm:$0xf]
        %v829 = vld [vmem:[#allocation5 + $0x78] sm:$0xff]
        %v830 = vld [vmem:[#allocation5 + $0x80] sm:$0xf]
        %v831 = vld [vmem:[#allocation5 + $0x84] sm:$0xff]
        %v832 = vld [vmem:[#allocation5 + $0x8c] sm:$0xf]
        %v833 = vld [vmem:[#allocation5 + $0x90] sm:$0xff]
        %v834 = vld [vmem:[#allocation5 + $0x98] sm:$0xf]
        %v835 = vld [vmem:[#allocation5 + $0x9c] sm:$0xff]
        %v836 = vld [vmem:[#allocation5 + $0xa4] sm:$0xf]
        %v837 = vld [vmem:[#allocation5 + $0xa8] sm:$0xff]
        %v838 = vld [vmem:[#allocation5 + $0xb0] sm:$0xf]
        %v839 = vld [vmem:[#allocation5 + $0xb4] sm:$0xff]
        %v840 = vld [vmem:[#allocation5 + $0xbc] sm:$0xf]
        %v873 = vunpack.c.l.b16 %v809
        %v874 = vunpack.c.h.b16 %v809
        %v875 = vunpack.c.l.b16 %v810
        %v876 = vunpack.c.l.b16 %v811
        %v877 = vunpack.c.h.b16 %v811
        %v878 = vunpack.c.l.b16 %v812
        %v879 = vunpack.c.l.b16 %v813
        %v880 = vunpack.c.h.b16 %v813
        %v881 = vunpack.c.l.b16 %v814
        %v882 = vunpack.c.l.b16 %v815
        %v883 = vunpack.c.h.b16 %v815
        %v884 = vunpack.c.l.b16 %v816
        %v885 = vunpack.c.l.b16 %v817
        %v886 = vunpack.c.h.b16 %v817
        %v887 = vunpack.c.l.b16 %v818
        %v888 = vunpack.c.l.b16 %v819
        %v889 = vunpack.c.h.b16 %v819
        %v890 = vunpack.c.l.b16 %v820
        %v891 = vunpack.c.l.b16 %v821
        %v892 = vunpack.c.h.b16 %v821
        %v893 = vunpack.c.l.b16 %v822
        %v894 = vunpack.c.l.b16 %v823
        %v895 = vunpack.c.h.b16 %v823
        %v896 = vunpack.c.l.b16 %v824
        %v897 = vunpack.c.l.b16 %v825
        %v898 = vunpack.c.h.b16 %v825
        %v899 = vunpack.c.l.b16 %v826
        %v900 = vunpack.c.l.b16 %v827
        %v901 = vunpack.c.h.b16 %v827
        %v902 = vunpack.c.l.b16 %v828
        %v903 = vunpack.c.l.b16 %v829
        %v904 = vunpack.c.h.b16 %v829
        %v905 = vunpack.c.l.b16 %v830
        %v906 = vunpack.c.l.b16 %v831
        %v907 = vunpack.c.h.b16 %v831
        %v908 = vunpack.c.l.b16 %v832
        %v909 = vunpack.c.l.b16 %v833
        %v910 = vunpack.c.h.b16 %v833
        %v911 = vunpack.c.l.b16 %v834
        %v912 = vunpack.c.l.b16 %v835
        %v913 = vunpack.c.h.b16 %v835
        %v914 = vunpack.c.l.b16 %v836
        %v915 = vunpack.c.l.b16 %v837
        %v916 = vunpack.c.h.b16 %v837
        %v917 = vunpack.c.l.b16 %v838
        %v918 = vunpack.c.l.b16 %v839
        %v919 = vunpack.c.h.b16 %v839
        %v920 = vunpack.c.l.b16 %v840
        %v921 = vpack.c.b16 %v876, %v873
        %v922 = vpack.c.b16 %v877, %v874
        %v923 = vpack.c.b16 %v878, %v875
        %v924 = vpack.c.b16 %v882, %v879
        %v925 = vpack.c.b16 %v883, %v880
        %v926 = vpack.c.b16 %v884, %v881
        %v927 = vpack.c.b16 %v888, %v885
        %v928 = vpack.c.b16 %v889, %v886
        %v929 = vpack.c.b16 %v890, %v887
        %v930 = vpack.c.b16 %v894, %v891
        %v931 = vpack.c.b16 %v895, %v892
        %v932 = vpack.c.b16 %v896, %v893
        %v933 = vpack.c.b16 %v900, %v897
        %v934 = vpack.c.b16 %v901, %v898
        %v935 = vpack.c.b16 %v902, %v899
        %v936 = vpack.c.b16 %v906, %v903
        %v937 = vpack.c.b16 %v907, %v904
        %v938 = vpack.c.b16 %v908, %v905
        %v939 = vpack.c.b16 %v912, %v909
        %v940 = vpack.c.b16 %v913, %v910
        %v941 = vpack.c.b16 %v914, %v911
        %v942 = vpack.c.b16 %v918, %v915
        %v943 = vpack.c.b16 %v919, %v916
        %v944 = vpack.c.b16 %v920, %v917
        %969 = vmatprep.subr.bf16.mxu0 %v922
        %970 = vmatpush1.bf16.msra.mxu0 %v921
        %971 = vmatprep.subr.bf16.mxu0 %v925
        %972 = vmatpush1.bf16.msra.mxu0 %v924
        %973 = vmatprep.subr.bf16.mxu0 %v928
        %974 = vmatpush1.bf16.msra.mxu0 %v927
        %975 = vmatprep.subr.bf16.mxu0 %v931
        %976 = vmatpush1.bf16.msra.mxu0 %v930
        %977 = vmatprep.subr.bf16.mxu0 %v934
        %978 = vmatpush1.bf16.msra.mxu0 %v933
        %979 = vmatprep.subr.bf16.mxu0 %v937
        %980 = vmatpush1.bf16.msra.mxu0 %v936
        %981 = vmatprep.subr.bf16.mxu0 %v940
        %982 = vmatpush1.bf16.msra.mxu0 %v939
        %983 = vmatprep.subr.bf16.mxu0 %v943
        %984 = vmatpush1.bf16.msra.mxu0 %v942
        %985 = vmatprep.subr.bf16.mxu0 0
        %986 = vmatpush1.bf16.msra.mxu0 0
        %987 = vmatprep.subr.bf16.mxu0 0
        %988 = vmatpush1.bf16.msra.mxu0 0
        %989 = vmatprep.subr.bf16.mxu0 0
        %990 = vmatpush1.bf16.msra.mxu0 0
        %991 = vmatprep.subr.bf16.mxu0 0
        %992 = vmatpush1.bf16.msra.mxu0 0
        %993 = vmatprep.subr.bf16.mxu0 0
        %994 = vmatpush1.bf16.msra.mxu0 0
        %995 = vmatprep.subr.bf16.mxu0 0
        %996 = vmatpush1.bf16.msra.mxu0 0
        %997 = vmatprep.subr.bf16.mxu0 0
        %998 = vmatpush1.bf16.msra.mxu0 0
        %999 = vmatprep.subr.bf16.mxu0 0
        %1000 = vmatpush1.bf16.msra.mxu0 0
        %1001 = vmatprep.mubr.bf16.mxu0 0
        %1002 = vmatmul.mubr.bf16.gmra.mrb[0].mxu0 %v793
        %v1003 = vpop.f32.mrb[0].mxu0
        %v1004 = vadd.f32 0.0, %v1003
        %v1005 = vpop.f32.mrb[0].mxu0
        %v1006 = vadd.f32 0.0, %v1005
        %v1007 = vpop.f32.mrb[0].mxu0
        %v1008 = vadd.f32 0.0, %v1007
        %v1009 = vpop.f32.mrb[0].mxu0
        %v1010 = vadd.f32 0.0, %v1009
        %1011 = vmatprep.mubr.bf16.mxu0 0
        %1012 = vmatmul.mubr.bf16.gmra.mrb[0].mxu0 %v794
        %v1013 = vpop.f32.mrb[0].mxu0
        %v1014 = vadd.f32 0.0, %v1013
        %v1015 = vpop.f32.mrb[0].mxu0
        %v1016 = vadd.f32 0.0, %v1015
        %v1017 = vpop.f32.mrb[0].mxu0
        %v1018 = vadd.f32 0.0, %v1017
        %v1019 = vpop.f32.mrb[0].mxu0
        %v1020 = vadd.f32 0.0, %v1019
        %1021 = vmatprep.mubr.bf16.mxu0 0
        %1022 = vmatmul.mubr.bf16.gmra.mrb[0].mxu0 %v795
        %v1023 = vpop.f32.mrb[0].mxu0
        %v1024 = vadd.f32 0.0, %v1023
        %v1025 = vpop.f32.mrb[0].mxu0
        %v1026 = vadd.f32 0.0, %v1025
        %v1027 = vpop.f32.mrb[0].mxu0
        %v1028 = vadd.f32 0.0, %v1027
        %v1029 = vpop.f32.mrb[0].mxu0
        %v1030 = vadd.f32 0.0, %v1029
        %1031 = vmatprep.mubr.bf16.mxu0 0
        %1032 = vmatmul.mubr.bf16.gmra.mrb[0].mxu0 %v796
        %v1033 = vpop.f32.mrb[0].mxu0
        %v1034 = vadd.f32 0.0, %v1033
        %v1035 = vpop.f32.mrb[0].mxu0
        %v1036 = vadd.f32 0.0, %v1035
        %v1037 = vpop.f32.mrb[0].mxu0
        %v1038 = vadd.f32 0.0, %v1037
        %v1039 = vpop.f32.mrb[0].mxu0
        %v1040 = vadd.f32 0.0, %v1039
        %1041 = vmatprep.mubr.bf16.mxu0 0
        %1042 = vmatmul.mubr.bf16.gmra.mrb[0].mxu0 %v797
        %v1043 = vpop.f32.mrb[0].mxu0
        %v1044 = vadd.f32 0.0, %v1043
        %v1045 = vpop.f32.mrb[0].mxu0
        %v1046 = vadd.f32 0.0, %v1045
        %v1047 = vpop.f32.mrb[0].mxu0
        %v1048 = vadd.f32 0.0, %v1047
        %v1049 = vpop.f32.mrb[0].mxu0
        %v1050 = vadd.f32 0.0, %v1049
        %1051 = vmatprep.mubr.bf16.mxu0 0
        %1052 = vmatmul.mubr.bf16.gmra.mrb[0].mxu0 %v798
        %v1053 = vpop.f32.mrb[0].mxu0
        %v1054 = vadd.f32 0.0, %v1053
        %v1055 = vpop.f32.mrb[0].mxu0
        %v1056 = vadd.f32 0.0, %v1055
        %v1057 = vpop.f32.mrb[0].mxu0
        %v1058 = vadd.f32 0.0, %v1057
        %v1059 = vpop.f32.mrb[0].mxu0
        %v1060 = vadd.f32 0.0, %v1059
        %1061 = vmatprep.mubr.bf16.mxu0 0
        %1062 = vmatmul.mubr.bf16.gmra.mrb[0].mxu0 %v799
        %v1063 = vpop.f32.mrb[0].mxu0
        %v1064 = vadd.f32 0.0, %v1063
        %v1065 = vpop.f32.mrb[0].mxu0
        %v1066 = vadd.f32 0.0, %v1065
        %v1067 = vpop.f32.mrb[0].mxu0
        %v1068 = vadd.f32 0.0, %v1067
        %v1069 = vpop.f32.mrb[0].mxu0
        %v1070 = vadd.f32 0.0, %v1069
        %1071 = vmatprep.mubr.bf16.mxu0 0
        %1072 = vmatmul.mubr.bf16.gmra.mrb[0].mxu0 %v800
        %v1073 = vpop.f32.mrb[0].mxu0
        %v1074 = vadd.f32 0.0, %v1073
        %v1075 = vpop.f32.mrb[0].mxu0
        %v1076 = vadd.f32 0.0, %v1075
        %v1077 = vpop.f32.mrb[0].mxu0
        %v1078 = vadd.f32 0.0, %v1077
        %v1079 = vpop.f32.mrb[0].mxu0
        %v1080 = vadd.f32 0.0, %v1079
        %1081 = vmatprep.mubr.bf16.mxu0 0
        %1082 = vmatmul.mubr.bf16.gmra.mrb[0].mxu0 %v801
        %v1083 = vpop.f32.mrb[0].mxu0
        %v1084 = vadd.f32 0.0, %v1083
        %v1085 = vpop.f32.mrb[0].mxu0
        %v1086 = vadd.f32 0.0, %v1085
        %v1087 = vpop.f32.mrb[0].mxu0
        %v1088 = vadd.f32 0.0, %v1087
        %v1089 = vpop.f32.mrb[0].mxu0
        %v1090 = vadd.f32 0.0, %v1089
        %1091 = vmatprep.mubr.bf16.mxu0 0
        %1092 = vmatmul.mubr.bf16.gmra.mrb[0].mxu0 %v802
        %v1093 = vpop.f32.mrb[0].mxu0
        %v1094 = vadd.f32 0.0, %v1093
        %v1095 = vpop.f32.mrb[0].mxu0
        %v1096 = vadd.f32 0.0, %v1095
        %v1097 = vpop.f32.mrb[0].mxu0
        %v1098 = vadd.f32 0.0, %v1097
        %v1099 = vpop.f32.mrb[0].mxu0
        %v1100 = vadd.f32 0.0, %v1099
        %1101 = vmatprep.mubr.bf16.mxu0 0
        %1102 = vmatmul.mubr.bf16.gmra.mrb[0].mxu0 %v803
        %v1103 = vpop.f32.mrb[0].mxu0
        %v1104 = vadd.f32 0.0, %v1103
        %v1105 = vpop.f32.mrb[0].mxu0
        %v1106 = vadd.f32 0.0, %v1105
        %v1107 = vpop.f32.mrb[0].mxu0
        %v1108 = vadd.f32 0.0, %v1107
        %v1109 = vpop.f32.mrb[0].mxu0
        %v1110 = vadd.f32 0.0, %v1109
        %1111 = vmatprep.mubr.bf16.mxu0 0
        %1112 = vmatmul.mubr.bf16.gmra.mrb[0].mxu0 %v804
        %v1113 = vpop.f32.mrb[0].mxu0
        %v1114 = vadd.f32 0.0, %v1113
        %v1115 = vpop.f32.mrb[0].mxu0
        %v1116 = vadd.f32 0.0, %v1115
        %v1117 = vpop.f32.mrb[0].mxu0
        %v1118 = vadd.f32 0.0, %v1117
        %v1119 = vpop.f32.mrb[0].mxu0
        %v1120 = vadd.f32 0.0, %v1119
        %1121 = vmatprep.mubr.bf16.mxu0 0
        %1122 = vmatmul.mubr.bf16.gmra.mrb[0].mxu0 %v805
        %v1123 = vpop.f32.mrb[0].mxu0
        %v1124 = vadd.f32 0.0, %v1123
        %v1125 = vpop.f32.mrb[0].mxu0
        %v1126 = vadd.f32 0.0, %v1125
        %v1127 = vpop.f32.mrb[0].mxu0
        %v1128 = vadd.f32 0.0, %v1127
        %v1129 = vpop.f32.mrb[0].mxu0
        %v1130 = vadd.f32 0.0, %v1129
        %1131 = vmatprep.mubr.bf16.mxu0 0
        %1132 = vmatmul.mubr.bf16.gmra.mrb[0].mxu0 %v806
        %v1133 = vpop.f32.mrb[0].mxu0
        %v1134 = vadd.f32 0.0, %v1133
        %v1135 = vpop.f32.mrb[0].mxu0
        %v1136 = vadd.f32 0.0, %v1135
        %v1137 = vpop.f32.mrb[0].mxu0
        %v1138 = vadd.f32 0.0, %v1137
        %v1139 = vpop.f32.mrb[0].mxu0
        %v1140 = vadd.f32 0.0, %v1139
        %1141 = vmatprep.mubr.bf16.mxu0 0
        %1142 = vmatmul.mubr.bf16.gmra.mrb[0].mxu0 %v807
        %v1143 = vpop.f32.mrb[0].mxu0
        %v1144 = vadd.f32 0.0, %v1143
        %v1145 = vpop.f32.mrb[0].mxu0
        %v1146 = vadd.f32 0.0, %v1145
        %v1147 = vpop.f32.mrb[0].mxu0
        %v1148 = vadd.f32 0.0, %v1147
        %v1149 = vpop.f32.mrb[0].mxu0
        %v1150 = vadd.f32 0.0, %v1149
        %1151 = vmatprep.mubr.bf16.mxu0 0
        %1152 = vmatmul.mubr.bf16.gmra.mrb[0].mxu0 %v808
        %v1153 = vpop.f32.mrb[0].mxu0
        %v1154 = vadd.f32 0.0, %v1153
        %v1155 = vpop.f32.mrb[0].mxu0
        %v1156 = vadd.f32 0.0, %v1155
        %v1157 = vpop.f32.mrb[0].mxu0
        %v1158 = vadd.f32 0.0, %v1157
        %v1159 = vpop.f32.mrb[0].mxu0
        %v1160 = vadd.f32 0.0, %v1159
        %1161 = vdwg.mxu0
        %1162 = vmatprep.subr.bf16.mxu0 0
        %1163 = vmatpush1.bf16.msra.mxu0 %v923
        %1164 = vmatprep.subr.bf16.mxu0 0
        %1165 = vmatpush1.bf16.msra.mxu0 %v926
        %1166 = vmatprep.subr.bf16.mxu0 0
        %1167 = vmatpush1.bf16.msra.mxu0 %v929
        %1168 = vmatprep.subr.bf16.mxu0 0
        %1169 = vmatpush1.bf16.msra.mxu0 %v932
        %1170 = vmatprep.subr.bf16.mxu0 0
        %1171 = vmatpush1.bf16.msra.mxu0 %v935
        %1172 = vmatprep.subr.bf16.mxu0 0
        %1173 = vmatpush1.bf16.msra.mxu0 %v938
        %1174 = vmatprep.subr.bf16.mxu0 0
        %1175 = vmatpush1.bf16.msra.mxu0 %v941
        %1176 = vmatprep.subr.bf16.mxu0 0
        %1177 = vmatpush1.bf16.msra.mxu0 %v944
        %1178 = vmatprep.subr.bf16.mxu0 0
        %1179 = vmatpush1.bf16.msra.mxu0 0
        %1180 = vmatprep.subr.bf16.mxu0 0
        %1181 = vmatpush1.bf16.msra.mxu0 0
        %1182 = vmatprep.subr.bf16.mxu0 0
        %1183 = vmatpush1.bf16.msra.mxu0 0
        %1184 = vmatprep.subr.bf16.mxu0 0
        %1185 = vmatpush1.bf16.msra.mxu0 0
        %1186 = vmatprep.subr.bf16.mxu0 0
        %1187 = vmatpush1.bf16.msra.mxu0 0
        %1188 = vmatprep.subr.bf16.mxu0 0
        %1189 = vmatpush1.bf16.msra.mxu0 0
        %1190 = vmatprep.subr.bf16.mxu0 0
        %1191 = vmatpush1.bf16.msra.mxu0 0
        %1192 = vmatprep.subr.bf16.mxu0 0
        %1193 = vmatpush1.bf16.msra.mxu0 0
        %1194 = vmatprep.mubr.bf16.mxu0 0
        %1195 = vmatmul.mubr.bf16.gmra.mrb[0].mxu0 %v793
        %v1196 = vpop.f32.mrb[0].mxu0
        %v1197 = vadd.f32 0.0, %v1196
        %v1198 = vpop.f32.mrb[0].mxu0
        %v1199 = vpop.f32.mrb[0].mxu0
        %v1200 = vadd.f32 0.0, %v1199
        %v1201 = vpop.f32.mrb[0].mxu0
        %1202 = vmatprep.mubr.bf16.mxu0 0
        %1203 = vmatmul.mubr.bf16.gmra.mrb[0].mxu0 %v794
        %v1204 = vpop.f32.mrb[0].mxu0
        %v1205 = vadd.f32 0.0, %v1204
        %v1206 = vpop.f32.mrb[0].mxu0
        %v1207 = vpop.f32.mrb[0].mxu0
        %v1208 = vadd.f32 0.0, %v1207
        %v1209 = vpop.f32.mrb[0].mxu0
        %1210 = vmatprep.mubr.bf16.mxu0 0
        %1211 = vmatmul.mubr.bf16.gmra.mrb[0].mxu0 %v795
        %v1212 = vpop.f32.mrb[0].mxu0
        %v1213 = vadd.f32 0.0, %v1212
        %v1214 = vpop.f32.mrb[0].mxu0
        %v1215 = vpop.f32.mrb[0].mxu0
        %v1216 = vadd.f32 0.0, %v1215
        %v1217 = vpop.f32.mrb[0].mxu0
        %1218 = vmatprep.mubr.bf16.mxu0 0
        %1219 = vmatmul.mubr.bf16.gmra.mrb[0].mxu0 %v796
        %v1220 = vpop.f32.mrb[0].mxu0
        %v1221 = vadd.f32 0.0, %v1220
        %v1222 = vpop.f32.mrb[0].mxu0
        %v1223 = vpop.f32.mrb[0].mxu0
        %v1224 = vadd.f32 0.0, %v1223
        %v1225 = vpop.f32.mrb[0].mxu0
        %1226 = vmatprep.mubr.bf16.mxu0 0
        %1227 = vmatmul.mubr.bf16.gmra.mrb[0].mxu0 %v797
        %v1228 = vpop.f32.mrb[0].mxu0
        %v1229 = vadd.f32 0.0, %v1228
        %v1230 = vpop.f32.mrb[0].mxu0
        %v1231 = vpop.f32.mrb[0].mxu0
        %v1232 = vadd.f32 0.0, %v1231
        %v1233 = vpop.f32.mrb[0].mxu0
        %1234 = vmatprep.mubr.bf16.mxu0 0
        %1235 = vmatmul.mubr.bf16.gmra.mrb[0].mxu0 %v798
        %v1236 = vpop.f32.mrb[0].mxu0
        %v1237 = vadd.f32 0.0, %v1236
        %v1238 = vpop.f32.mrb[0].mxu0
        %v1239 = vpop.f32.mrb[0].mxu0
        %v1240 = vadd.f32 0.0, %v1239
        %v1241 = vpop.f32.mrb[0].mxu0
        %1242 = vmatprep.mubr.bf16.mxu0 0
        %1243 = vmatmul.mubr.bf16.gmra.mrb[0].mxu0 %v799
        %v1244 = vpop.f32.mrb[0].mxu0
        %v1245 = vadd.f32 0.0, %v1244
        %v1246 = vpop.f32.mrb[0].mxu0
        %v1247 = vpop.f32.mrb[0].mxu0
        %v1248 = vadd.f32 0.0, %v1247
        %v1249 = vpop.f32.mrb[0].mxu0
        %1250 = vmatprep.mubr.bf16.mxu0 0
        %1251 = vmatmul.mubr.bf16.gmra.mrb[0].mxu0 %v800
        %v1252 = vpop.f32.mrb[0].mxu0
        %v1253 = vadd.f32 0.0, %v1252
        %v1254 = vpop.f32.mrb[0].mxu0
        %v1255 = vpop.f32.mrb[0].mxu0
        %v1256 = vadd.f32 0.0, %v1255
        %v1257 = vpop.f32.mrb[0].mxu0
        %1258 = vmatprep.mubr.bf16.mxu0 0
        %1259 = vmatmul.mubr.bf16.gmra.mrb[0].mxu0 %v801
        %v1260 = vpop.f32.mrb[0].mxu0
        %v1261 = vadd.f32 0.0, %v1260
        %v1262 = vpop.f32.mrb[0].mxu0
        %v1263 = vpop.f32.mrb[0].mxu0
        %v1264 = vadd.f32 0.0, %v1263
        %v1265 = vpop.f32.mrb[0].mxu0
        %1266 = vmatprep.mubr.bf16.mxu0 0
        %1267 = vmatmul.mubr.bf16.gmra.mrb[0].mxu0 %v802
        %v1268 = vpop.f32.mrb[0].mxu0
        %v1269 = vadd.f32 0.0, %v1268
        %v1270 = vpop.f32.mrb[0].mxu0
        %v1271 = vpop.f32.mrb[0].mxu0
        %v1272 = vadd.f32 0.0, %v1271
        %v1273 = vpop.f32.mrb[0].mxu0
        %1274 = vmatprep.mubr.bf16.mxu0 0
        %1275 = vmatmul.mubr.bf16.gmra.mrb[0].mxu0 %v803
        %v1276 = vpop.f32.mrb[0].mxu0
        %v1277 = vadd.f32 0.0, %v1276
        %v1278 = vpop.f32.mrb[0].mxu0
        %v1279 = vpop.f32.mrb[0].mxu0
        %v1280 = vadd.f32 0.0, %v1279
        %v1281 = vpop.f32.mrb[0].mxu0
        %1282 = vmatprep.mubr.bf16.mxu0 0
        %1283 = vmatmul.mubr.bf16.gmra.mrb[0].mxu0 %v804
        %v1284 = vpop.f32.mrb[0].mxu0
        %v1285 = vadd.f32 0.0, %v1284
        %v1286 = vpop.f32.mrb[0].mxu0
        %v1287 = vpop.f32.mrb[0].mxu0
        %v1288 = vadd.f32 0.0, %v1287
        %v1289 = vpop.f32.mrb[0].mxu0
        %1290 = vmatprep.mubr.bf16.mxu0 0
        %1291 = vmatmul.mubr.bf16.gmra.mrb[0].mxu0 %v805
        %v1292 = vpop.f32.mrb[0].mxu0
        %v1293 = vadd.f32 0.0, %v1292
        %v1294 = vpop.f32.mrb[0].mxu0
        %v1295 = vpop.f32.mrb[0].mxu0
        %v1296 = vadd.f32 0.0, %v1295
        %v1297 = vpop.f32.mrb[0].mxu0
        %1298 = vmatprep.mubr.bf16.mxu0 0
        %1299 = vmatmul.mubr.bf16.gmra.mrb[0].mxu0 %v806
        %v1300 = vpop.f32.mrb[0].mxu0
        %v1301 = vadd.f32 0.0, %v1300
        %v1302 = vpop.f32.mrb[0].mxu0
        %v1303 = vpop.f32.mrb[0].mxu0
        %v1304 = vadd.f32 0.0, %v1303
        %v1305 = vpop.f32.mrb[0].mxu0
        %1306 = vmatprep.mubr.bf16.mxu0 0
        %1307 = vmatmul.mubr.bf16.gmra.mrb[0].mxu0 %v807
        %v1308 = vpop.f32.mrb[0].mxu0
        %v1309 = vadd.f32 0.0, %v1308
        %v1310 = vpop.f32.mrb[0].mxu0
        %v1311 = vpop.f32.mrb[0].mxu0
        %v1312 = vadd.f32 0.0, %v1311
        %v1313 = vpop.f32.mrb[0].mxu0
        %1314 = vmatprep.mubr.bf16.mxu0 0
        %1315 = vmatmul.mubr.bf16.gmra.mrb[0].mxu0 %v808
        %v1316 = vpop.f32.mrb[0].mxu0
        %v1317 = vadd.f32 0.0, %v1316
        %v1318 = vpop.f32.mrb[0].mxu0
        %v1319 = vpop.f32.mrb[0].mxu0
        %v1320 = vadd.f32 0.0, %v1319
        %v1321 = vpop.f32.mrb[0].mxu0
        %1322 = vdwg.mxu0
        %v1323 = vmul.f32 %v1004, 0.17677669
        %v1324 = vmul.f32 %v1008, 0.17677669
        %v1325 = vmul.f32 %v1014, 0.17677669
        %v1326 = vmul.f32 %v1018, 0.17677669
        %v1327 = vmul.f32 %v1024, 0.17677669
        %v1328 = vmul.f32 %v1028, 0.17677669
        %v1329 = vmul.f32 %v1034, 0.17677669
        %v1330 = vmul.f32 %v1038, 0.17677669
        %v1331 = vmul.f32 %v1044, 0.17677669
        %v1332 = vmul.f32 %v1048, 0.17677669
        %v1333 = vmul.f32 %v1054, 0.17677669
        %v1334 = vmul.f32 %v1058, 0.17677669
        %v1335 = vmul.f32 %v1064, 0.17677669
        %v1336 = vmul.f32 %v1068, 0.17677669
        %v1337 = vmul.f32 %v1074, 0.17677669
        %v1338 = vmul.f32 %v1078, 0.17677669
        %v1339 = vmul.f32 %v1084, 0.17677669
        %v1340 = vmul.f32 %v1088, 0.17677669
        %v1341 = vmul.f32 %v1094, 0.17677669
        %v1342 = vmul.f32 %v1098, 0.17677669
        %v1343 = vmul.f32 %v1104, 0.17677669
        %v1344 = vmul.f32 %v1108, 0.17677669
        %v1345 = vmul.f32 %v1114, 0.17677669
        %v1346 = vmul.f32 %v1118, 0.17677669
        %v1347 = vmul.f32 %v1124, 0.17677669
        %v1348 = vmul.f32 %v1128, 0.17677669
        %v1349 = vmul.f32 %v1134, 0.17677669
        %v1350 = vmul.f32 %v1138, 0.17677669
        %v1351 = vmul.f32 %v1144, 0.17677669
        %v1352 = vmul.f32 %v1148, 0.17677669
        %v1353 = vmul.f32 %v1154, 0.17677669
        %v1354 = vmul.f32 %v1158, 0.17677669
        %v1355 = vpack.c.bf16 %v1324, %v1323
        %v1356 = vpack.c.bf16 %v1326, %v1325
        %v1357 = vpack.c.bf16 %v1328, %v1327
        %v1358 = vpack.c.bf16 %v1330, %v1329
        %v1359 = vpack.c.bf16 %v1332, %v1331
        %v1360 = vpack.c.bf16 %v1334, %v1333
        %v1361 = vpack.c.bf16 %v1336, %v1335
        %v1362 = vpack.c.bf16 %v1338, %v1337
        %v1363 = vpack.c.bf16 %v1340, %v1339
        %v1364 = vpack.c.bf16 %v1342, %v1341
        %v1365 = vpack.c.bf16 %v1344, %v1343
        %v1366 = vpack.c.bf16 %v1346, %v1345
        %v1367 = vpack.c.bf16 %v1348, %v1347
        %v1368 = vpack.c.bf16 %v1350, %v1349
        %v1369 = vpack.c.bf16 %v1352, %v1351
        %v1370 = vpack.c.bf16 %v1354, %v1353
        %v1387 = vunpack.c.l.b16 %v1355
        %v1388 = vunpack.c.h.b16 %v1355
        %v1389 = vunpack.c.l.b16 %v1356
        %v1390 = vunpack.c.h.b16 %v1356
        %v1391 = vunpack.c.l.b16 %v1357
        %v1392 = vunpack.c.h.b16 %v1357
        %v1393 = vunpack.c.l.b16 %v1358
        %v1394 = vunpack.c.h.b16 %v1358
        %v1395 = vunpack.c.l.b16 %v1359
        %v1396 = vunpack.c.h.b16 %v1359
        %v1397 = vunpack.c.l.b16 %v1360
        %v1398 = vunpack.c.h.b16 %v1360
        %v1399 = vunpack.c.l.b16 %v1361
        %v1400 = vunpack.c.h.b16 %v1361
        %v1401 = vunpack.c.l.b16 %v1362
        %v1402 = vunpack.c.h.b16 %v1362
        %v1403 = vunpack.c.l.b16 %v1363
        %v1404 = vunpack.c.h.b16 %v1363
        %v1405 = vunpack.c.l.b16 %v1364
        %v1406 = vunpack.c.h.b16 %v1364
        %v1407 = vunpack.c.l.b16 %v1365
        %v1408 = vunpack.c.h.b16 %v1365
        %v1409 = vunpack.c.l.b16 %v1366
        %v1410 = vunpack.c.h.b16 %v1366
        %v1411 = vunpack.c.l.b16 %v1367
        %v1412 = vunpack.c.h.b16 %v1367
        %v1413 = vunpack.c.l.b16 %v1368
        %v1414 = vunpack.c.h.b16 %v1368
        %v1415 = vunpack.c.l.b16 %v1369
        %v1416 = vunpack.c.h.b16 %v1369
        %v1417 = vunpack.c.l.b16 %v1370
        %v1418 = vunpack.c.h.b16 %v1370
        %v1419 = vpack.c.b16 %v1387, %v1387
        %v1420 = vpack.c.b16 %v1388, %v1388
        %v1421 = vpack.c.b16 %v1389, %v1389
        %v1422 = vpack.c.b16 %v1390, %v1390
        %v1423 = vpack.c.b16 %v1391, %v1391
        %v1424 = vpack.c.b16 %v1392, %v1392
        %v1425 = vpack.c.b16 %v1393, %v1393
        %v1426 = vpack.c.b16 %v1394, %v1394
        %v1427 = vpack.c.b16 %v1395, %v1395
        %v1428 = vpack.c.b16 %v1396, %v1396
        %v1429 = vpack.c.b16 %v1397, %v1397
        %v1430 = vpack.c.b16 %v1398, %v1398
        %v1431 = vpack.c.b16 %v1399, %v1399
        %v1432 = vpack.c.b16 %v1400, %v1400
        %v1433 = vpack.c.b16 %v1401, %v1401
        %v1434 = vpack.c.b16 %v1402, %v1402
        %v1435 = vpack.c.b16 %v1403, %v1403
        %v1436 = vpack.c.b16 %v1404, %v1404
        %v1437 = vpack.c.b16 %v1405, %v1405
        %v1438 = vpack.c.b16 %v1406, %v1406
        %v1439 = vpack.c.b16 %v1407, %v1407
        %v1440 = vpack.c.b16 %v1408, %v1408
        %v1441 = vpack.c.b16 %v1409, %v1409
        %v1442 = vpack.c.b16 %v1410, %v1410
        %v1443 = vpack.c.b16 %v1411, %v1411
        %v1444 = vpack.c.b16 %v1412, %v1412
        %v1445 = vpack.c.b16 %v1413, %v1413
        %v1446 = vpack.c.b16 %v1414, %v1414
        %v1447 = vpack.c.b16 %v1415, %v1415
        %v1448 = vpack.c.b16 %v1416, %v1416
        %v1449 = vpack.c.b16 %v1417, %v1417
        %v1450 = vpack.c.b16 %v1418, %v1418
        %1483 = vst [vmem:[%s310] sm:$0xf] %v1419
        %1484 = vst [vmem:[%s310 + $0x4] sm:$0xf] %v1420
        %1485 = vst [vmem:[%s310 + $0x8] sm:$0xf] %v1421
        %1486 = vst [vmem:[%s310 + $0xc] sm:$0xf] %v1422
        %1487 = vst [vmem:[%s310 + $0x10] sm:$0xf] %v1423
        %1488 = vst [vmem:[%s310 + $0x14] sm:$0xf] %v1424
        %1489 = vst [vmem:[%s310 + $0x18] sm:$0xf] %v1425
        %1490 = vst [vmem:[%s310 + $0x1c] sm:$0xf] %v1426
        %1491 = vst [vmem:[%s310 + $0x20] sm:$0xf] %v1427
        %1492 = vst [vmem:[%s310 + $0x24] sm:$0xf] %v1428
        %1493 = vst [vmem:[%s310 + $0x28] sm:$0xf] %v1429
        %1494 = vst [vmem:[%s310 + $0x2c] sm:$0xf] %v1430
        %1495 = vst [vmem:[%s310 + $0x30] sm:$0xf] %v1431
        %1496 = vst [vmem:[%s310 + $0x34] sm:$0xf] %v1432
        %1497 = vst [vmem:[%s310 + $0x38] sm:$0xf] %v1433
        %1498 = vst [vmem:[%s310 + $0x3c] sm:$0xf] %v1434
        %1499 = vst [vmem:[%s310 + $0x40] sm:$0xf] %v1435
        %1500 = vst [vmem:[%s310 + $0x44] sm:$0xf] %v1436
        %1501 = vst [vmem:[%s310 + $0x48] sm:$0xf] %v1437
        %1502 = vst [vmem:[%s310 + $0x4c] sm:$0xf] %v1438
        %1503 = vst [vmem:[%s310 + $0x50] sm:$0xf] %v1439
        %1504 = vst [vmem:[%s310 + $0x54] sm:$0xf] %v1440
        %1505 = vst [vmem:[%s310 + $0x58] sm:$0xf] %v1441
        %1506 = vst [vmem:[%s310 + $0x5c] sm:$0xf] %v1442
        %1507 = vst [vmem:[%s310 + $0x60] sm:$0xf] %v1443
        %1508 = vst [vmem:[%s310 + $0x64] sm:$0xf] %v1444
        %1509 = vst [vmem:[%s310 + $0x68] sm:$0xf] %v1445
        %1510 = vst [vmem:[%s310 + $0x6c] sm:$0xf] %v1446
        %1511 = vst [vmem:[%s310 + $0x70] sm:$0xf] %v1447
        %1512 = vst [vmem:[%s310 + $0x74] sm:$0xf] %v1448
        %1513 = vst [vmem:[%s310 + $0x78] sm:$0xf] %v1449
        %1514 = vst [vmem:[%s310 + $0x7c] sm:$0xf] %v1450
        %v1515 = vpack.c.bf16 %v1010, %v1006
        %v1516 = vpack.c.bf16 %v1020, %v1016
        %v1517 = vpack.c.bf16 %v1030, %v1026
        %v1518 = vpack.c.bf16 %v1040, %v1036
        %v1519 = vpack.c.bf16 %v1050, %v1046
        %v1520 = vpack.c.bf16 %v1060, %v1056
        %v1521 = vpack.c.bf16 %v1070, %v1066
        %v1522 = vpack.c.bf16 %v1080, %v1076
        %v1523 = vpack.c.bf16 %v1090, %v1086
        %v1524 = vpack.c.bf16 %v1100, %v1096
        %v1525 = vpack.c.bf16 %v1110, %v1106
        %v1526 = vpack.c.bf16 %v1120, %v1116
        %v1527 = vpack.c.bf16 %v1130, %v1126
        %v1528 = vpack.c.bf16 %v1140, %v1136
        %v1529 = vpack.c.bf16 %v1150, %v1146
        %v1530 = vpack.c.bf16 %v1160, %v1156
        %v1547 = vunpack.c.l.b16 %v1515
        %v1548 = vunpack.c.h.b16 %v1515
        %v1549 = vunpack.c.l.b16 %v1516
        %v1550 = vunpack.c.h.b16 %v1516
        %v1551 = vunpack.c.l.b16 %v1517
        %v1552 = vunpack.c.h.b16 %v1517
        %v1553 = vunpack.c.l.b16 %v1518
        %v1554 = vunpack.c.h.b16 %v1518
        %v1555 = vunpack.c.l.b16 %v1519
        %v1556 = vunpack.c.h.b16 %v1519
        %v1557 = vunpack.c.l.b16 %v1520
        %v1558 = vunpack.c.h.b16 %v1520
        %v1559 = vunpack.c.l.b16 %v1521
        %v1560 = vunpack.c.h.b16 %v1521
        %v1561 = vunpack.c.l.b16 %v1522
        %v1562 = vunpack.c.h.b16 %v1522
        %v1563 = vunpack.c.l.b16 %v1523
        %v1564 = vunpack.c.h.b16 %v1523
        %v1565 = vunpack.c.l.b16 %v1524
        %v1566 = vunpack.c.h.b16 %v1524
        %v1567 = vunpack.c.l.b16 %v1525
        %v1568 = vunpack.c.h.b16 %v1525
        %v1569 = vunpack.c.l.b16 %v1526
        %v1570 = vunpack.c.h.b16 %v1526
        %v1571 = vunpack.c.l.b16 %v1527
        %v1572 = vunpack.c.h.b16 %v1527
        %v1573 = vunpack.c.l.b16 %v1528
        %v1574 = vunpack.c.h.b16 %v1528
        %v1575 = vunpack.c.l.b16 %v1529
        %v1576 = vunpack.c.h.b16 %v1529
        %v1577 = vunpack.c.l.b16 %v1530
        %v1578 = vunpack.c.h.b16 %v1530
        %v1579 = vpack.c.b16 %v1547, %v1547
        %v1580 = vpack.c.b16 %v1548, %v1548
        %v1581 = vpack.c.b16 %v1549, %v1549
        %v1582 = vpack.c.b16 %v1550, %v1550
        %v1583 = vpack.c.b16 %v1551, %v1551
        %v1584 = vpack.c.b16 %v1552, %v1552
        %v1585 = vpack.c.b16 %v1553, %v1553
        %v1586 = vpack.c.b16 %v1554, %v1554
        %v1587 = vpack.c.b16 %v1555, %v1555
        %v1588 = vpack.c.b16 %v1556, %v1556
        %v1589 = vpack.c.b16 %v1557, %v1557
        %v1590 = vpack.c.b16 %v1558, %v1558
        %v1591 = vpack.c.b16 %v1559, %v1559
        %v1592 = vpack.c.b16 %v1560, %v1560
        %v1593 = vpack.c.b16 %v1561, %v1561
        %v1594 = vpack.c.b16 %v1562, %v1562
        %v1595 = vpack.c.b16 %v1563, %v1563
        %v1596 = vpack.c.b16 %v1564, %v1564
        %v1597 = vpack.c.b16 %v1565, %v1565
        %v1598 = vpack.c.b16 %v1566, %v1566
        %v1599 = vpack.c.b16 %v1567, %v1567
        %v1600 = vpack.c.b16 %v1568, %v1568
        %v1601 = vpack.c.b16 %v1569, %v1569
        %v1602 = vpack.c.b16 %v1570, %v1570
        %v1603 = vpack.c.b16 %v1571, %v1571
        %v1604 = vpack.c.b16 %v1572, %v1572
        %v1605 = vpack.c.b16 %v1573, %v1573
        %v1606 = vpack.c.b16 %v1574, %v1574
        %v1607 = vpack.c.b16 %v1575, %v1575
        %v1608 = vpack.c.b16 %v1576, %v1576
        %v1609 = vpack.c.b16 %v1577, %v1577
        %v1610 = vpack.c.b16 %v1578, %v1578
        %1643 = vst [vmem:[%s317] sm:$0xf] %v1579
        %1644 = vst [vmem:[%s317 + $0x4] sm:$0xf] %v1580
        %1645 = vst [vmem:[%s317 + $0x8] sm:$0xf] %v1581
        %1646 = vst [vmem:[%s317 + $0xc] sm:$0xf] %v1582
        %1647 = vst [vmem:[%s317 + $0x10] sm:$0xf] %v1583
        %1648 = vst [vmem:[%s317 + $0x14] sm:$0xf] %v1584
        %1649 = vst [vmem:[%s317 + $0x18] sm:$0xf] %v1585
        %1650 = vst [vmem:[%s317 + $0x1c] sm:$0xf] %v1586
        %1651 = vst [vmem:[%s317 + $0x20] sm:$0xf] %v1587
        %1652 = vst [vmem:[%s317 + $0x24] sm:$0xf] %v1588
        %1653 = vst [vmem:[%s317 + $0x28] sm:$0xf] %v1589
        %1654 = vst [vmem:[%s317 + $0x2c] sm:$0xf] %v1590
        %1655 = vst [vmem:[%s317 + $0x30] sm:$0xf] %v1591
        %1656 = vst [vmem:[%s317 + $0x34] sm:$0xf] %v1592
        %1657 = vst [vmem:[%s317 + $0x38] sm:$0xf] %v1593
        %1658 = vst [vmem:[%s317 + $0x3c] sm:$0xf] %v1594
        %1659 = vst [vmem:[%s317 + $0x40] sm:$0xf] %v1595
        %1660 = vst [vmem:[%s317 + $0x44] sm:$0xf] %v1596
        %1661 = vst [vmem:[%s317 + $0x48] sm:$0xf] %v1597
        %1662 = vst [vmem:[%s317 + $0x4c] sm:$0xf] %v1598
        %1663 = vst [vmem:[%s317 + $0x50] sm:$0xf] %v1599
        %1664 = vst [vmem:[%s317 + $0x54] sm:$0xf] %v1600
        %1665 = vst [vmem:[%s317 + $0x58] sm:$0xf] %v1601
        %1666 = vst [vmem:[%s317 + $0x5c] sm:$0xf] %v1602
        %1667 = vst [vmem:[%s317 + $0x60] sm:$0xf] %v1603
        %1668 = vst [vmem:[%s317 + $0x64] sm:$0xf] %v1604
        %1669 = vst [vmem:[%s317 + $0x68] sm:$0xf] %v1605
        %1670 = vst [vmem:[%s317 + $0x6c] sm:$0xf] %v1606
        %1671 = vst [vmem:[%s317 + $0x70] sm:$0xf] %v1607
        %1672 = vst [vmem:[%s317 + $0x74] sm:$0xf] %v1608
        %1673 = vst [vmem:[%s317 + $0x78] sm:$0xf] %v1609
        %1674 = vst [vmem:[%s317 + $0x7c] sm:$0xf] %v1610
        %v1675 = vpack.c.bf16 %v1200, %v1197
        %v1676 = vpack.c.bf16 %v1208, %v1205
        %v1677 = vpack.c.bf16 %v1216, %v1213
        %v1678 = vpack.c.bf16 %v1224, %v1221
        %v1679 = vpack.c.bf16 %v1232, %v1229
        %v1680 = vpack.c.bf16 %v1240, %v1237
        %v1681 = vpack.c.bf16 %v1248, %v1245
        %v1682 = vpack.c.bf16 %v1256, %v1253
        %v1683 = vpack.c.bf16 %v1264, %v1261
        %v1684 = vpack.c.bf16 %v1272, %v1269
        %v1685 = vpack.c.bf16 %v1280, %v1277
        %v1686 = vpack.c.bf16 %v1288, %v1285
        %v1687 = vpack.c.bf16 %v1296, %v1293
        %v1688 = vpack.c.bf16 %v1304, %v1301
        %v1689 = vpack.c.bf16 %v1312, %v1309
        %v1690 = vpack.c.bf16 %v1320, %v1317
        %v1707 = vunpack.c.l.b16 %v1675
        %v1708 = vunpack.c.h.b16 %v1675
        %v1709 = vunpack.c.l.b16 %v1676
        %v1710 = vunpack.c.h.b16 %v1676
        %v1711 = vunpack.c.l.b16 %v1677
        %v1712 = vunpack.c.h.b16 %v1677
        %v1713 = vunpack.c.l.b16 %v1678
        %v1714 = vunpack.c.h.b16 %v1678
        %v1715 = vunpack.c.l.b16 %v1679
        %v1716 = vunpack.c.h.b16 %v1679
        %v1717 = vunpack.c.l.b16 %v1680
        %v1718 = vunpack.c.h.b16 %v1680
        %v1719 = vunpack.c.l.b16 %v1681
        %v1720 = vunpack.c.h.b16 %v1681
        %v1721 = vunpack.c.l.b16 %v1682
        %v1722 = vunpack.c.h.b16 %v1682
        %v1723 = vunpack.c.l.b16 %v1683
        %v1724 = vunpack.c.h.b16 %v1683
        %v1725 = vunpack.c.l.b16 %v1684
        %v1726 = vunpack.c.h.b16 %v1684
        %v1727 = vunpack.c.l.b16 %v1685
        %v1728 = vunpack.c.h.b16 %v1685
        %v1729 = vunpack.c.l.b16 %v1686
        %v1730 = vunpack.c.h.b16 %v1686
        %v1731 = vunpack.c.l.b16 %v1687
        %v1732 = vunpack.c.h.b16 %v1687
        %v1733 = vunpack.c.l.b16 %v1688
        %v1734 = vunpack.c.h.b16 %v1688
        %v1735 = vunpack.c.l.b16 %v1689
        %v1736 = vunpack.c.h.b16 %v1689
        %v1737 = vunpack.c.l.b16 %v1690
        %v1738 = vunpack.c.h.b16 %v1690
        %v1739 = vpack.c.b16 %v1707, %v1707
        %v1740 = vpack.c.b16 %v1708, %v1708
        %v1741 = vpack.c.b16 %v1709, %v1709
        %v1742 = vpack.c.b16 %v1710, %v1710
        %v1743 = vpack.c.b16 %v1711, %v1711
        %v1744 = vpack.c.b16 %v1712, %v1712
        %v1745 = vpack.c.b16 %v1713, %v1713
        %v1746 = vpack.c.b16 %v1714, %v1714
        %v1747 = vpack.c.b16 %v1715, %v1715
        %v1748 = vpack.c.b16 %v1716, %v1716
        %v1749 = vpack.c.b16 %v1717, %v1717
        %v1750 = vpack.c.b16 %v1718, %v1718
        %v1751 = vpack.c.b16 %v1719, %v1719
        %v1752 = vpack.c.b16 %v1720, %v1720
        %v1753 = vpack.c.b16 %v1721, %v1721
        %v1754 = vpack.c.b16 %v1722, %v1722
        %v1755 = vpack.c.b16 %v1723, %v1723
        %v1756 = vpack.c.b16 %v1724, %v1724
        %v1757 = vpack.c.b16 %v1725, %v1725
        %v1758 = vpack.c.b16 %v1726, %v1726
        %v1759 = vpack.c.b16 %v1727, %v1727
        %v1760 = vpack.c.b16 %v1728, %v1728
        %v1761 = vpack.c.b16 %v1729, %v1729
        %v1762 = vpack.c.b16 %v1730, %v1730
        %v1763 = vpack.c.b16 %v1731, %v1731
        %v1764 = vpack.c.b16 %v1732, %v1732
        %v1765 = vpack.c.b16 %v1733, %v1733
        %v1766 = vpack.c.b16 %v1734, %v1734
        %v1767 = vpack.c.b16 %v1735, %v1735
        %v1768 = vpack.c.b16 %v1736, %v1736
        %v1769 = vpack.c.b16 %v1737, %v1737
        %v1770 = vpack.c.b16 %v1738, %v1738
        %1803 = vst [vmem:[%s324] sm:$0xf] %v1739
        %1804 = vst [vmem:[%s324 + $0x4] sm:$0xf] %v1740
        %1805 = vst [vmem:[%s324 + $0x8] sm:$0xf] %v1741
        %1806 = vst [vmem:[%s324 + $0xc] sm:$0xf] %v1742
        %1807 = vst [vmem:[%s324 + $0x10] sm:$0xf] %v1743
        %1808 = vst [vmem:[%s324 + $0x14] sm:$0xf] %v1744
        %1809 = vst [vmem:[%s324 + $0x18] sm:$0xf] %v1745
        %1810 = vst [vmem:[%s324 + $0x1c] sm:$0xf] %v1746
        %1811 = vst [vmem:[%s324 + $0x20] sm:$0xf] %v1747
        %1812 = vst [vmem:[%s324 + $0x24] sm:$0xf] %v1748
        %1813 = vst [vmem:[%s324 + $0x28] sm:$0xf] %v1749
        %1814 = vst [vmem:[%s324 + $0x2c] sm:$0xf] %v1750
        %1815 = vst [vmem:[%s324 + $0x30] sm:$0xf] %v1751
        %1816 = vst [vmem:[%s324 + $0x34] sm:$0xf] %v1752
        %1817 = vst [vmem:[%s324 + $0x38] sm:$0xf] %v1753
        %1818 = vst [vmem:[%s324 + $0x3c] sm:$0xf] %v1754
        %1819 = vst [vmem:[%s324 + $0x40] sm:$0xf] %v1755
        %1820 = vst [vmem:[%s324 + $0x44] sm:$0xf] %v1756
        %1821 = vst [vmem:[%s324 + $0x48] sm:$0xf] %v1757
        %1822 = vst [vmem:[%s324 + $0x4c] sm:$0xf] %v1758
        %1823 = vst [vmem:[%s324 + $0x50] sm:$0xf] %v1759
        %1824 = vst [vmem:[%s324 + $0x54] sm:$0xf] %v1760
        %1825 = vst [vmem:[%s324 + $0x58] sm:$0xf] %v1761
        %1826 = vst [vmem:[%s324 + $0x5c] sm:$0xf] %v1762
        %1827 = vst [vmem:[%s324 + $0x60] sm:$0xf] %v1763
        %1828 = vst [vmem:[%s324 + $0x64] sm:$0xf] %v1764
        %1829 = vst [vmem:[%s324 + $0x68] sm:$0xf] %v1765
        %1830 = vst [vmem:[%s324 + $0x6c] sm:$0xf] %v1766
        %1831 = vst [vmem:[%s324 + $0x70] sm:$0xf] %v1767
        %1832 = vst [vmem:[%s324 + $0x74] sm:$0xf] %v1768
        %1833 = vst [vmem:[%s324 + $0x78] sm:$0xf] %v1769
        %1834 = vst [vmem:[%s324 + $0x7c] sm:$0xf] %v1770
        %s1835 = sand.u32 %s141, 1
        %s1836 = scalar_lea.sflag [#allocation4], %s1835
        %s1837 = sand.u32 %s141, 1
        %s1838 = smul.addr %s1837, 128
        %s1839 = scalar_lea.vmem [#allocation7], %s1838
        %s1840 = sand.u32 %s28, 1
        %s1841 = scalar_lea.sflag [#allocation9], %s1840
        %s1842 = sand.u32 %s169, 1
        %s1843 = smul.addr %s1842, 128
        %s1844 = scalar_lea.vmem [#allocation8], %s1843
        %s1845 = sand.u32 %s28, 1
        %s1846 = scalar_lea.sflag [#allocation9], %s1845
        %s1847 = sand.u32 %s197, 1
        %s1848 = smul.addr %s1847, 128
        %s1849 = scalar_lea.vmem [#allocation10], %s1848
        // Predicated region
        $region45: #{tpu_custom_call.1} parent=35 // pred_check
          %p1850 = pneg %p151
        $region46: #{tpu_custom_call.1} parent=35 // pred_check_branch
          %1852 = sbr.rel (%p1850) target = $region48
        $region47: #{tpu_custom_call.1} parent=35 // pred_region
          %s1853 = smul.u32 32, %s33
          %s1855 = ssub.s32 2048, 2048
          %1856 = vsyncadd %s1836, %s1855
          %s1857 = smul.addr %s32, 32
          %s1858 = sadd.s32 %s1853, %s1857
          %s1859 = smul.addr %s1858, 64
          %s1860 = scalar_lea.hbm %s4, %s1859
          %s1861 = sshll.u32 %s1839, 4
          %s1862 = int_to_ptr.vmem [resolvable:$true] %s1861
          %1867 = dma.vmem_to_hbm [thread:$0]  %s1862, 2048, %s1860, %s1836, 64, 64, 4
        $region48: #{tpu_custom_call.1} parent=35 // pred_fallthru
          _
        // Predicated region
        $region49: #{tpu_custom_call.1} parent=35 // pred_check
          %p1868 = pneg %p179
        $region50: #{tpu_custom_call.1} parent=35 // pred_check_branch
          %1870 = sbr.rel (%p1868) target = $region52
        $region51: #{tpu_custom_call.1} parent=35 // pred_region
          %s1871 = smul.u32 32, %s33
          %s1873 = ssub.s32 2048, 2048
          %1874 = vsyncadd %s1841, %s1873
          %s1875 = smul.addr %s32, 32
          %s1876 = sadd.s32 %s1871, %s1875
          %s1877 = smul.addr %s1876, 64
          %s1878 = scalar_lea.hbm %s5, %s1877
          %s1879 = sshll.u32 %s1844, 4
          %s1880 = int_to_ptr.vmem [resolvable:$true] %s1879
          %1885 = dma.vmem_to_hbm [thread:$0]  %s1880, 2048, %s1878, %s1841, 64, 64, 4
        $region52: #{tpu_custom_call.1} parent=35 // pred_fallthru
          _
        // Predicated region
        $region53: #{tpu_custom_call.1} parent=35 // pred_check
          %p1886 = pneg %p207
        $region54: #{tpu_custom_call.1} parent=35 // pred_check_branch
          %1888 = sbr.rel (%p1886) target = $region56
        $region55: #{tpu_custom_call.1} parent=35 // pred_region
          %s1889 = smul.u32 32, %s33
          %s1891 = ssub.s32 2048, 2048
          %1892 = vsyncadd %s1846, %s1891
          %s1893 = smul.addr %s32, 32
          %s1894 = sadd.s32 %s1889, %s1893
          %s1895 = smul.addr %s1894, 64
          %s1896 = scalar_lea.hbm %s6, %s1895
          %s1897 = sshll.u32 %s1849, 4
          %s1898 = int_to_ptr.vmem [resolvable:$true] %s1897
          %1903 = dma.vmem_to_hbm [thread:$0]  %s1898, 2048, %s1896, %s1846, 64, 64, 4
        $region56: #{tpu_custom_call.1} parent=35 // pred_fallthru
          _
      $region36: #{tpu_custom_call.1} parent=5 // pred_fallthru
        _
      %p1904 = scmp.le.s32.totalorder 2, %s23
      // Predicated region
      $region57: #{tpu_custom_call.1} parent=5 // pred_check
        %p1905 = pneg %p1904
      $region58: #{tpu_custom_call.1} parent=5 // pred_check_branch
        %1907 = sbr.rel (%p1905) target = $region60
      $region59: #{tpu_custom_call.1} parent=5 // pred_region
        %s1908 = ssub.s32 %s23, 2
        // Predicated region
        $region61: #{tpu_custom_call.1} parent=59 // pred_check
          %p1909 = pneg %p157
        $region62: #{tpu_custom_call.1} parent=59 // pred_check_branch
          %1911 = sbr.rel (%p1909) target = $region64
        $region63: #{tpu_custom_call.1} parent=59 // pred_region
          %s1912 = sand.u32 %s142, 1
          %s1913 = scalar_lea.sflag [#allocation4], %s1912
          %s1914 = sand.u32 %s142, 1
          %s1915 = smul.addr %s1914, 128
          %s1916 = scalar_lea.vmem [#allocation7], %s1915
          %1917 = dma.done %s1913, 2048
        $region64: #{tpu_custom_call.1} parent=59 // pred_fallthru
          _
        // Predicated region
        $region65: #{tpu_custom_call.1} parent=59 // pred_check
          %p1918 = pneg %p185
        $region66: #{tpu_custom_call.1} parent=59 // pred_check_branch
          %1920 = sbr.rel (%p1918) target = $region68
        $region67: #{tpu_custom_call.1} parent=59 // pred_region
          %s1921 = sand.u32 %s29, 1
          %s1922 = scalar_lea.sflag [#allocation9], %s1921
          %s1923 = sand.u32 %s170, 1
          %s1924 = smul.addr %s1923, 128
          %s1925 = scalar_lea.vmem [#allocation8], %s1924
          %1926 = dma.done %s1922, 2048
        $region68: #{tpu_custom_call.1} parent=59 // pred_fallthru
          _
        // Predicated region
        $region69: #{tpu_custom_call.1} parent=59 // pred_check
          %p1927 = pneg %p213
        $region70: #{tpu_custom_call.1} parent=59 // pred_check_branch
          %1929 = sbr.rel (%p1927) target = $region72
        $region71: #{tpu_custom_call.1} parent=59 // pred_region
          %s1930 = sand.u32 %s29, 1
          %s1931 = scalar_lea.sflag [#allocation9], %s1930
          %s1932 = sand.u32 %s198, 1
          %s1933 = smul.addr %s1932, 128
          %s1934 = scalar_lea.vmem [#allocation10], %s1933
          %1935 = dma.done %s1931, 2048
        $region72: #{tpu_custom_call.1} parent=59 // pred_fallthru
          _
      $region60: #{tpu_custom_call.1} parent=5 // pred_fallthru
        _
    $region6: #{tpu_custom_call.1} parent=1 // loop_footer
      %s27 = sadd.s32 1, %s23
    $region7: #{tpu_custom_call.1} parent=1 // loop_footer_branch
      %22 = sbr.rel target = $region3
    $region8: #{tpu_custom_call.1} parent=1 // loop_exit
      _
    %1936 = vsyncpa [#allocation3], 1
    %s1937 = scalar_lea.sflag [#allocation3], 1
    %1938 = vsyncpa %s1937, 1
    %1939 = vsyncpa [#allocation6], 1
    %1940 = vsyncpa [#allocation4], 1
    %s1941 = scalar_lea.sflag [#allocation4], 1
    %1942 = vsyncpa %s1941, 1
    %1943 = vsyncpa [#allocation9], 1
    %s1944 = scalar_lea.sflag [#allocation9], 1
    %1945 = vsyncpa %s1944, 1

</llo_original>
